<compile_context>
chip_gen: v6e
topology: v6e:2x2x1
jax: 0.10.0
libtpu: 0.0.40
codegen_flags: <defaults>
</compile_context>

<pallas_src>
import jax
import jax.numpy as jnp
from jax.experimental import pallas as pl
from jax.experimental.pallas import tpu as pltpu


# ----------------------------------------------------------------------------
# Fused kernel: conv3x3+ReLU x3  ->  global avg pool  ->  linear classifier.
# One batch element per grid step; everything stays in VMEM until the logits.
# ----------------------------------------------------------------------------
def fused_forward_kernel(x_ref, w0_ref, b0_ref, w1_ref, b1_ref, w2_ref, b2_ref,
                         wc_ref, bc_ref, o_ref, pad0, pad1, pad2):
    # x_ref : (1, H, W, C0)     one batch element, NHWC
    # wK_ref: (9*Cin, Cout)     conv weights with the 9 taps flattened along K
    # bK_ref: (1, Cout)
    # wc_ref: (C3, NC), bc_ref: (1, NC)
    # o_ref : (1, 1, NC)        logits for this batch element
    # padK  : VMEM scratch (H+2, W+2, C) zero-padded activation of layer K
    H, W = x_ref.shape[1], x_ref.shape[2]

    def conv3x3_relu(pad_ref, w_ref, b_ref):
        C = pad_ref.shape[-1]
        # im2col: 9 shifted windows concatenated along K -> ONE MXU matmul
        # (K = 9*Cin), instead of 9 small matmuls + VPU accumulate adds.
        patches = jnp.concatenate(
            [pad_ref[dy:dy + H, dx:dx + W, :].reshape(H * W, C)
             for dy in range(3) for dx in range(3)],
            axis=-1)                                            # (H*W, 9*C)
        y = jnp.dot(patches, w_ref[...], preferred_element_type=jnp.float32)
        return jnp.maximum(y + b_ref[...], 0.0)                 # (H*W, Cout)

    def write_padded(pad_ref, a_hwc):
        # Zero-pad (padding=1) directly in VMEM scratch; no HBM traffic.
        pad_ref[...] = jnp.zeros_like(pad_ref)
        pad_ref[1:H + 1, 1:W + 1, :] = a_hwc

    # ---- shard 0 (feature blocks before the split point) ----
    write_padded(pad0, x_ref[0])
    y0 = conv3x3_relu(pad0, w0_ref, b0_ref)                     # (H*W, C1)
    write_padded(pad1, y0.reshape(H, W, -1))
    y1 = conv3x3_relu(pad1, w1_ref, b1_ref)                     # (H*W, C2)

    # ---- shard 1 (remaining blocks + AdaptiveAvgPool2d + Flatten + Linear) ----
    write_padded(pad2, y1.reshape(H, W, -1))
    y2 = conv3x3_relu(pad2, w2_ref, b2_ref)                     # (H*W, C3)
    pooled = jnp.mean(y2, axis=0, keepdims=True)                # (1, C3)
    logits = jnp.dot(pooled, wc_ref[...],
                     preferred_element_type=jnp.float32) + bc_ref[...]
    o_ref[0] = logits


def enhanced_distributed_model_forward_impl(x_nchw, params):
    # NCHW (PyTorch convention) -> NHWC for the kernel.
    x = jnp.transpose(x_nchw, (0, 2, 3, 1)).astype(jnp.float32)
    N, H, W, C0 = x.shape
    C1 = params["w0"].shape[-1]
    C2 = params["w1"].shape[-1]
    C3 = params["w2"].shape[-1]
    NC = params["wc"].shape[-1]

    # Flatten (3,3,Cin,Cout) -> (9*Cin, Cout); row index (dy*3+dx)*Cin + c
    # matches the in-kernel im2col concatenation order.
    w0 = params["w0"].reshape(9 * C0, C1)
    w1 = params["w1"].reshape(9 * C1, C2)
    w2 = params["w2"].reshape(9 * C2, C3)
    b0 = params["b0"].reshape(1, C1)
    b1 = params["b1"].reshape(1, C2)
    b2 = params["b2"].reshape(1, C3)
    wc = params["wc"]
    bc = params["bc"].reshape(1, NC)

    logits = pl.pallas_call(
        fused_forward_kernel,
        out_shape=jax.ShapeDtypeStruct((N, 1, NC), jnp.float32),
        grid=(N,),
        in_specs=[
            pl.BlockSpec((1, H, W, C0), lambda n: (n, 0, 0, 0)),
            pl.BlockSpec((9 * C0, C1), lambda n: (0, 0)),
            pl.BlockSpec((1, C1), lambda n: (0, 0)),
            pl.BlockSpec((9 * C1, C2), lambda n: (0, 0)),
            pl.BlockSpec((1, C2), lambda n: (0, 0)),
            pl.BlockSpec((9 * C2, C3), lambda n: (0, 0)),
            pl.BlockSpec((1, C3), lambda n: (0, 0)),
            pl.BlockSpec((C3, NC), lambda n: (0, 0)),
            pl.BlockSpec((1, NC), lambda n: (0, 0)),
        ],
        out_specs=pl.BlockSpec((1, 1, NC), lambda n: (n, 0, 0)),
        scratch_shapes=[
            pltpu.VMEM((H + 2, W + 2, C0), jnp.float32),
            pltpu.VMEM((H + 2, W + 2, C1), jnp.float32),
            pltpu.VMEM((H + 2, W + 2, C2), jnp.float32),
        ],
        compiler_params=pltpu.CompilerParams(
            dimension_semantics=("parallel",)),   # batch -> 2 TCs on v7x
    )(x, w0, b0, w1, b1, w2, b2, wc, bc)
    # TODO(synk): RPC shard deployment, pipelining and metrics collection are
    # host-side orchestration with no Pallas equivalent; only the numeric path
    # is kernelized.
    return logits.reshape(N, NC)


enhanced_distributed_model_forward = jax.jit(enhanced_distributed_model_forward_impl)


# ----------------------------------------------------------------------------
# Parameter init (same layer sizes as before: 4 -> 8 -> 16 -> 32 -> 10).
# ----------------------------------------------------------------------------
def init_params(key, cin=4, c1=8, c2=16, c3=32, num_classes=10):
    ks = jax.random.split(key, 8)
    scale = 0.1
    return {
        "w0": scale * jax.random.normal(ks[0], (3, 3, cin, c1), jnp.float32),
        "b0": scale * jax.random.normal(ks[1], (c1,), jnp.float32),
        "w1": scale * jax.random.normal(ks[2], (3, 3, c1, c2), jnp.float32),
        "b1": scale * jax.random.normal(ks[3], (c2,), jnp.float32),
        "w2": scale * jax.random.normal(ks[4], (3, 3, c2, c3), jnp.float32),
        "b2": scale * jax.random.normal(ks[5], (c3,), jnp.float32),
        "wc": scale * jax.random.normal(ks[6], (c3, num_classes), jnp.float32),
        "bc": scale * jax.random.normal(ks[7], (num_classes,), jnp.float32),
    }


# Pure-JAX reference (full-precision) to validate the fused kernel numerics.
def reference_forward(x_nchw, params):
    x = jnp.transpose(x_nchw, (0, 2, 3, 1))

    def conv(a, w, b):
        y = jax.lax.conv_general_dilated(
            a, w, window_strides=(1, 1), padding="SAME",
            dimension_numbers=("NHWC", "HWIO", "NHWC"),
            precision=jax.lax.Precision.HIGHEST)
        return jax.nn.relu(y + b)

    x = conv(x, params["w0"], params["b0"])
    x = conv(x, params["w1"], params["b1"])
    x = conv(x, params["w2"], params["b2"])
    pooled = jnp.mean(x, axis=(1, 2))
    return jnp.dot(pooled, params["wc"],
                   precision=jax.lax.Precision.HIGHEST) + params["bc"]


if __name__ == "__main__":
    key = jax.random.PRNGKey(0)
    k_x, k_p = jax.random.split(key)
    # batch=2, channels=4, spatial=16 (NCHW, PyTorch convention)
    x = jax.random.normal(k_x, (2, 4, 16, 16), jnp.float32)
    params = init_params(k_p)

    out = enhanced_distributed_model_forward(x, params)
    out = jax.block_until_ready(out)
    assert out.shape == (2, 10) and out.dtype == jnp.float32

    ref = reference_forward(x, params)
    assert jnp.allclose(out, ref, atol=2e-4, rtol=2e-3), float(
        jnp.max(jnp.abs(out - ref)))
    print("KERNEL_OK")
</pallas_src>

<mosaic_0001>
module attributes {stable_mosaic.version = 11 : i64} {
  func.func @fused_forward_kernel(%arg0: i32, %arg1: memref<1x16x16x4xf32, #tpu.memory_space<vmem>>, %arg2: memref<36x8xf32, #tpu.memory_space<vmem>>, %arg3: memref<1x8xf32, #tpu.memory_space<vmem>>, %arg4: memref<72x16xf32, #tpu.memory_space<vmem>>, %arg5: memref<1x16xf32, #tpu.memory_space<vmem>>, %arg6: memref<144x32xf32, #tpu.memory_space<vmem>>, %arg7: memref<1x32xf32, #tpu.memory_space<vmem>>, %arg8: memref<32x10xf32, #tpu.memory_space<vmem>>, %arg9: memref<1x10xf32, #tpu.memory_space<vmem>>, %arg10: memref<1x1x10xf32, #tpu.memory_space<vmem>>, %arg11: memref<18x18x4xf32, #tpu.memory_space<vmem>>, %arg12: memref<18x18x8xf32, #tpu.memory_space<vmem>>, %arg13: memref<18x18x16xf32, #tpu.memory_space<vmem>>) attributes {dimension_semantics = [#tpu.dimension_semantics<parallel>], iteration_bounds = array<i64: 2>, scalar_prefetch = 0 : i64, scratch_operands = 3 : i64, tpu.core_type = #tpu.core_type<tc>, window_params = [{transform_indices = @transform_0, window_bounds = array<i64: 1, 16, 16, 4>}, {pipeline_mode = #tpu.pipeline_mode<synchronous>, transform_indices = @transform_1, window_bounds = array<i64: 36, 8>}, {pipeline_mode = #tpu.pipeline_mode<synchronous>, transform_indices = @transform_2, window_bounds = array<i64: 1, 8>}, {pipeline_mode = #tpu.pipeline_mode<synchronous>, transform_indices = @transform_3, window_bounds = array<i64: 72, 16>}, {pipeline_mode = #tpu.pipeline_mode<synchronous>, transform_indices = @transform_4, window_bounds = array<i64: 1, 16>}, {pipeline_mode = #tpu.pipeline_mode<synchronous>, transform_indices = @transform_5, window_bounds = array<i64: 144, 32>}, {pipeline_mode = #tpu.pipeline_mode<synchronous>, transform_indices = @transform_6, window_bounds = array<i64: 1, 32>}, {pipeline_mode = #tpu.pipeline_mode<synchronous>, transform_indices = @transform_7, window_bounds = array<i64: 32, 10>}, {pipeline_mode = #tpu.pipeline_mode<synchronous>, transform_indices = @transform_8, window_bounds = array<i64: 1, 10>}, {transform_indices = @transform_9, window_bounds = array<i64: 1, 1, 10>}]} {
    %c0 = arith.constant 0 : index
    %c0_0 = arith.constant 0 : index
    %c0_1 = arith.constant 0 : index
    %c0_2 = arith.constant 0 : index
    %0 = vector.load %arg1[%c0, %c0_0, %c0_1, %c0_2] : memref<1x16x16x4xf32, #tpu.memory_space<vmem>>, vector<1x16x16x4xf32>
    %1 = vector.shape_cast %0 : vector<1x16x16x4xf32> to vector<16x16x4xf32>
    %cst = arith.constant 0.000000e+00 : f32
    %2 = vector.broadcast %cst : f32 to vector<18x18x4xf32>
    %c0_3 = arith.constant 0 : index
    %c0_4 = arith.constant 0 : index
    %c0_5 = arith.constant 0 : index
    %3 = vector.load %arg11[%c0_3, %c0_4, %c0_5] : memref<18x18x4xf32, #tpu.memory_space<vmem>>, vector<18x18x4xf32>
    tpu.vector_store %arg11[%c0_3, %c0_4, %c0_5], %2 {strides = array<i32>} : memref<18x18x4xf32, #tpu.memory_space<vmem>>, vector<18x18x4xf32>,
    %c1 = arith.constant 1 : index
    %c1_6 = arith.constant 1 : index
    %c0_7 = arith.constant 0 : index
    %4 = vector.load %arg11[%c1, %c1_6, %c0_7] : memref<18x18x4xf32, #tpu.memory_space<vmem>>, vector<16x16x4xf32>
    tpu.vector_store %arg11[%c1, %c1_6, %c0_7], %1 {strides = array<i32>} : memref<18x18x4xf32, #tpu.memory_space<vmem>>, vector<16x16x4xf32>,
    %c0_8 = arith.constant 0 : index
    %c0_9 = arith.constant 0 : index
    %c0_10 = arith.constant 0 : index
    %5 = vector.load %arg11[%c0_8, %c0_9, %c0_10] : memref<18x18x4xf32, #tpu.memory_space<vmem>>, vector<16x16x4xf32>
    %6 = vector.shape_cast %5 : vector<16x16x4xf32> to vector<256x4xf32>
    %c0_11 = arith.constant 0 : index
    %c1_12 = arith.constant 1 : index
    %c0_13 = arith.constant 0 : index
    %7 = vector.load %arg11[%c0_11, %c1_12, %c0_13] : memref<18x18x4xf32, #tpu.memory_space<vmem>>, vector<16x16x4xf32>
    %8 = vector.shape_cast %7 : vector<16x16x4xf32> to vector<256x4xf32>
    %c0_14 = arith.constant 0 : index
    %c2 = arith.constant 2 : index
    %c0_15 = arith.constant 0 : index
    %9 = vector.load %arg11[%c0_14, %c2, %c0_15] : memref<18x18x4xf32, #tpu.memory_space<vmem>>, vector<16x16x4xf32>
    %10 = vector.shape_cast %9 : vector<16x16x4xf32> to vector<256x4xf32>
    %c1_16 = arith.constant 1 : index
    %c0_17 = arith.constant 0 : index
    %c0_18 = arith.constant 0 : index
    %11 = vector.load %arg11[%c1_16, %c0_17, %c0_18] : memref<18x18x4xf32, #tpu.memory_space<vmem>>, vector<16x16x4xf32>
    %12 = vector.shape_cast %11 : vector<16x16x4xf32> to vector<256x4xf32>
    %c1_19 = arith.constant 1 : index
    %c1_20 = arith.constant 1 : index
    %c0_21 = arith.constant 0 : index
    %13 = vector.load %arg11[%c1_19, %c1_20, %c0_21] : memref<18x18x4xf32, #tpu.memory_space<vmem>>, vector<16x16x4xf32>
    %14 = vector.shape_cast %13 : vector<16x16x4xf32> to vector<256x4xf32>
    %c1_22 = arith.constant 1 : index
    %c2_23 = arith.constant 2 : index
    %c0_24 = arith.constant 0 : index
    %15 = vector.load %arg11[%c1_22, %c2_23, %c0_24] : memref<18x18x4xf32, #tpu.memory_space<vmem>>, vector<16x16x4xf32>
    %16 = vector.shape_cast %15 : vector<16x16x4xf32> to vector<256x4xf32>
    %c2_25 = arith.constant 2 : index
    %c0_26 = arith.constant 0 : index
    %c0_27 = arith.constant 0 : index
    %17 = vector.load %arg11[%c2_25, %c0_26, %c0_27] : memref<18x18x4xf32, #tpu.memory_space<vmem>>, vector<16x16x4xf32>
    %18 = vector.shape_cast %17 : vector<16x16x4xf32> to vector<256x4xf32>
    %c2_28 = arith.constant 2 : index
    %c1_29 = arith.constant 1 : index
    %c0_30 = arith.constant 0 : index
    %19 = vector.load %arg11[%c2_28, %c1_29, %c0_30] : memref<18x18x4xf32, #tpu.memory_space<vmem>>, vector<16x16x4xf32>
    %20 = vector.shape_cast %19 : vector<16x16x4xf32> to vector<256x4xf32>
    %c2_31 = arith.constant 2 : index
    %c2_32 = arith.constant 2 : index
    %c0_33 = arith.constant 0 : index
    %21 = vector.load %arg11[%c2_31, %c2_32, %c0_33] : memref<18x18x4xf32, #tpu.memory_space<vmem>>, vector<16x16x4xf32>
    %22 = vector.shape_cast %21 : vector<16x16x4xf32> to vector<256x4xf32>
    %23 = tpu.concatenate %6, %8, %10, %12, %14, %16, %18, %20, %22 in 1 : vector<256x4xf32>, vector<256x4xf32>, vector<256x4xf32>, vector<256x4xf32>, vector<256x4xf32>, vector<256x4xf32>, vector<256x4xf32>, vector<256x4xf32>, vector<256x4xf32> -> vector<256x36xf32>
    %c0_34 = arith.constant 0 : index
    %c0_35 = arith.constant 0 : index
    %24 = vector.load %arg2[%c0_34, %c0_35] : memref<36x8xf32, #tpu.memory_space<vmem>>, vector<36x8xf32>
    %cst_36 = arith.constant dense<0.000000e+00> : vector<256x8xf32>
    %25 = tpu.matmul %23, %24, %cst_36 {dimension_numbers = #tpu.dot_dimension_numbers<[1], [0], [0], [1], [0, 0, 1, 1], [], []>} : vector<256x36xf32>, vector<36x8xf32>, vector<256x8xf32> -> vector<256x8xf32>
    %c0_37 = arith.constant 0 : index
    %c0_38 = arith.constant 0 : index
    %26 = vector.load %arg3[%c0_37, %c0_38] : memref<1x8xf32, #tpu.memory_space<vmem>>, vector<1x8xf32>
    %27 = vector.broadcast %26 : vector<1x8xf32> to vector<256x8xf32>
    %28 = arith.addf %25, %27 : vector<256x8xf32>
    %cst_39 = arith.constant 0.000000e+00 : f32
    %29 = vector.broadcast %cst_39 : f32 to vector<256x8xf32>
    %30 = arith.maximumf %28, %29 : vector<256x8xf32>
    %31 = vector.shape_cast %30 : vector<256x8xf32> to vector<16x16x8xf32>
    %cst_40 = arith.constant 0.000000e+00 : f32
    %32 = vector.broadcast %cst_40 : f32 to vector<18x18x8xf32>
    %c0_41 = arith.constant 0 : index
    %c0_42 = arith.constant 0 : index
    %c0_43 = arith.constant 0 : index
    %33 = vector.load %arg12[%c0_41, %c0_42, %c0_43] : memref<18x18x8xf32, #tpu.memory_space<vmem>>, vector<18x18x8xf32>
    tpu.vector_store %arg12[%c0_41, %c0_42, %c0_43], %32 {strides = array<i32>} : memref<18x18x8xf32, #tpu.memory_space<vmem>>, vector<18x18x8xf32>,
    %c1_44 = arith.constant 1 : index
    %c1_45 = arith.constant 1 : index
    %c0_46 = arith.constant 0 : index
    %34 = vector.load %arg12[%c1_44, %c1_45, %c0_46] : memref<18x18x8xf32, #tpu.memory_space<vmem>>, vector<16x16x8xf32>
    tpu.vector_store %arg12[%c1_44, %c1_45, %c0_46], %31 {strides = array<i32>} : memref<18x18x8xf32, #tpu.memory_space<vmem>>, vector<16x16x8xf32>,
    %c0_47 = arith.constant 0 : index
    %c0_48 = arith.constant 0 : index
    %c0_49 = arith.constant 0 : index
    %35 = vector.load %arg12[%c0_47, %c0_48, %c0_49] : memref<18x18x8xf32, #tpu.memory_space<vmem>>, vector<16x16x8xf32>
    %36 = vector.shape_cast %35 : vector<16x16x8xf32> to vector<256x8xf32>
    %c0_50 = arith.constant 0 : index
    %c1_51 = arith.constant 1 : index
    %c0_52 = arith.constant 0 : index
    %37 = vector.load %arg12[%c0_50, %c1_51, %c0_52] : memref<18x18x8xf32, #tpu.memory_space<vmem>>, vector<16x16x8xf32>
    %38 = vector.shape_cast %37 : vector<16x16x8xf32> to vector<256x8xf32>
    %c0_53 = arith.constant 0 : index
    %c2_54 = arith.constant 2 : index
    %c0_55 = arith.constant 0 : index
    %39 = vector.load %arg12[%c0_53, %c2_54, %c0_55] : memref<18x18x8xf32, #tpu.memory_space<vmem>>, vector<16x16x8xf32>
    %40 = vector.shape_cast %39 : vector<16x16x8xf32> to vector<256x8xf32>
    %c1_56 = arith.constant 1 : index
    %c0_57 = arith.constant 0 : index
    %c0_58 = arith.constant 0 : index
    %41 = vector.load %arg12[%c1_56, %c0_57, %c0_58] : memref<18x18x8xf32, #tpu.memory_space<vmem>>, vector<16x16x8xf32>
    %42 = vector.shape_cast %41 : vector<16x16x8xf32> to vector<256x8xf32>
    %c1_59 = arith.constant 1 : index
    %c1_60 = arith.constant 1 : index
    %c0_61 = arith.constant 0 : index
    %43 = vector.load %arg12[%c1_59, %c1_60, %c0_61] : memref<18x18x8xf32, #tpu.memory_space<vmem>>, vector<16x16x8xf32>
    %44 = vector.shape_cast %43 : vector<16x16x8xf32> to vector<256x8xf32>
    %c1_62 = arith.constant 1 : index
    %c2_63 = arith.constant 2 : index
    %c0_64 = arith.constant 0 : index
    %45 = vector.load %arg12[%c1_62, %c2_63, %c0_64] : memref<18x18x8xf32, #tpu.memory_space<vmem>>, vector<16x16x8xf32>
    %46 = vector.shape_cast %45 : vector<16x16x8xf32> to vector<256x8xf32>
    %c2_65 = arith.constant 2 : index
    %c0_66 = arith.constant 0 : index
    %c0_67 = arith.constant 0 : index
    %47 = vector.load %arg12[%c2_65, %c0_66, %c0_67] : memref<18x18x8xf32, #tpu.memory_space<vmem>>, vector<16x16x8xf32>
    %48 = vector.shape_cast %47 : vector<16x16x8xf32> to vector<256x8xf32>
    %c2_68 = arith.constant 2 : index
    %c1_69 = arith.constant 1 : index
    %c0_70 = arith.constant 0 : index
    %49 = vector.load %arg12[%c2_68, %c1_69, %c0_70] : memref<18x18x8xf32, #tpu.memory_space<vmem>>, vector<16x16x8xf32>
    %50 = vector.shape_cast %49 : vector<16x16x8xf32> to vector<256x8xf32>
    %c2_71 = arith.constant 2 : index
    %c2_72 = arith.constant 2 : index
    %c0_73 = arith.constant 0 : index
    %51 = vector.load %arg12[%c2_71, %c2_72, %c0_73] : memref<18x18x8xf32, #tpu.memory_space<vmem>>, vector<16x16x8xf32>
    %52 = vector.shape_cast %51 : vector<16x16x8xf32> to vector<256x8xf32>
    %53 = tpu.concatenate %36, %38, %40, %42, %44, %46, %48, %50, %52 in 1 : vector<256x8xf32>, vector<256x8xf32>, vector<256x8xf32>, vector<256x8xf32>, vector<256x8xf32>, vector<256x8xf32>, vector<256x8xf32>, vector<256x8xf32>, vector<256x8xf32> -> vector<256x72xf32>
    %c0_74 = arith.constant 0 : index
    %c0_75 = arith.constant 0 : index
    %54 = vector.load %arg4[%c0_74, %c0_75] : memref<72x16xf32, #tpu.memory_space<vmem>>, vector<72x16xf32>
    %cst_76 = arith.constant dense<0.000000e+00> : vector<256x16xf32>
    %55 = tpu.matmul %53, %54, %cst_76 {dimension_numbers = #tpu.dot_dimension_numbers<[1], [0], [0], [1], [0, 0, 1, 1], [], []>} : vector<256x72xf32>, vector<72x16xf32>, vector<256x16xf32> -> vector<256x16xf32>
    %c0_77 = arith.constant 0 : index
    %c0_78 = arith.constant 0 : index
    %56 = vector.load %arg5[%c0_77, %c0_78] : memref<1x16xf32, #tpu.memory_space<vmem>>, vector<1x16xf32>
    %57 = vector.broadcast %56 : vector<1x16xf32> to vector<256x16xf32>
    %58 = arith.addf %55, %57 : vector<256x16xf32>
    %cst_79 = arith.constant 0.000000e+00 : f32
    %59 = vector.broadcast %cst_79 : f32 to vector<256x16xf32>
    %60 = arith.maximumf %58, %59 : vector<256x16xf32>
    %61 = vector.shape_cast %60 : vector<256x16xf32> to vector<16x16x16xf32>
    %cst_80 = arith.constant 0.000000e+00 : f32
    %62 = vector.broadcast %cst_80 : f32 to vector<18x18x16xf32>
    %c0_81 = arith.constant 0 : index
    %c0_82 = arith.constant 0 : index
    %c0_83 = arith.constant 0 : index
    %63 = vector.load %arg13[%c0_81, %c0_82, %c0_83] : memref<18x18x16xf32, #tpu.memory_space<vmem>>, vector<18x18x16xf32>
    tpu.vector_store %arg13[%c0_81, %c0_82, %c0_83], %62 {strides = array<i32>} : memref<18x18x16xf32, #tpu.memory_space<vmem>>, vector<18x18x16xf32>,
    %c1_84 = arith.constant 1 : index
    %c1_85 = arith.constant 1 : index
    %c0_86 = arith.constant 0 : index
    %64 = vector.load %arg13[%c1_84, %c1_85, %c0_86] : memref<18x18x16xf32, #tpu.memory_space<vmem>>, vector<16x16x16xf32>
    tpu.vector_store %arg13[%c1_84, %c1_85, %c0_86], %61 {strides = array<i32>} : memref<18x18x16xf32, #tpu.memory_space<vmem>>, vector<16x16x16xf32>,
    %c0_87 = arith.constant 0 : index
    %c0_88 = arith.constant 0 : index
    %c0_89 = arith.constant 0 : index
    %65 = vector.load %arg13[%c0_87, %c0_88, %c0_89] : memref<18x18x16xf32, #tpu.memory_space<vmem>>, vector<16x16x16xf32>
    %66 = vector.shape_cast %65 : vector<16x16x16xf32> to vector<256x16xf32>
    %c0_90 = arith.constant 0 : index
    %c1_91 = arith.constant 1 : index
    %c0_92 = arith.constant 0 : index
    %67 = vector.load %arg13[%c0_90, %c1_91, %c0_92] : memref<18x18x16xf32, #tpu.memory_space<vmem>>, vector<16x16x16xf32>
    %68 = vector.shape_cast %67 : vector<16x16x16xf32> to vector<256x16xf32>
    %c0_93 = arith.constant 0 : index
    %c2_94 = arith.constant 2 : index
    %c0_95 = arith.constant 0 : index
    %69 = vector.load %arg13[%c0_93, %c2_94, %c0_95] : memref<18x18x16xf32, #tpu.memory_space<vmem>>, vector<16x16x16xf32>
    %70 = vector.shape_cast %69 : vector<16x16x16xf32> to vector<256x16xf32>
    %c1_96 = arith.constant 1 : index
    %c0_97 = arith.constant 0 : index
    %c0_98 = arith.constant 0 : index
    %71 = vector.load %arg13[%c1_96, %c0_97, %c0_98] : memref<18x18x16xf32, #tpu.memory_space<vmem>>, vector<16x16x16xf32>
    %72 = vector.shape_cast %71 : vector<16x16x16xf32> to vector<256x16xf32>
    %c1_99 = arith.constant 1 : index
    %c1_100 = arith.constant 1 : index
    %c0_101 = arith.constant 0 : index
    %73 = vector.load %arg13[%c1_99, %c1_100, %c0_101] : memref<18x18x16xf32, #tpu.memory_space<vmem>>, vector<16x16x16xf32>
    %74 = vector.shape_cast %73 : vector<16x16x16xf32> to vector<256x16xf32>
    %c1_102 = arith.constant 1 : index
    %c2_103 = arith.constant 2 : index
    %c0_104 = arith.constant 0 : index
    %75 = vector.load %arg13[%c1_102, %c2_103, %c0_104] : memref<18x18x16xf32, #tpu.memory_space<vmem>>, vector<16x16x16xf32>
    %76 = vector.shape_cast %75 : vector<16x16x16xf32> to vector<256x16xf32>
    %c2_105 = arith.constant 2 : index
    %c0_106 = arith.constant 0 : index
    %c0_107 = arith.constant 0 : index
    %77 = vector.load %arg13[%c2_105, %c0_106, %c0_107] : memref<18x18x16xf32, #tpu.memory_space<vmem>>, vector<16x16x16xf32>
    %78 = vector.shape_cast %77 : vector<16x16x16xf32> to vector<256x16xf32>
    %c2_108 = arith.constant 2 : index
    %c1_109 = arith.constant 1 : index
    %c0_110 = arith.constant 0 : index
    %79 = vector.load %arg13[%c2_108, %c1_109, %c0_110] : memref<18x18x16xf32, #tpu.memory_space<vmem>>, vector<16x16x16xf32>
    %80 = vector.shape_cast %79 : vector<16x16x16xf32> to vector<256x16xf32>
    %c2_111 = arith.constant 2 : index
    %c2_112 = arith.constant 2 : index
    %c0_113 = arith.constant 0 : index
    %81 = vector.load %arg13[%c2_111, %c2_112, %c0_113] : memref<18x18x16xf32, #tpu.memory_space<vmem>>, vector<16x16x16xf32>
    %82 = vector.shape_cast %81 : vector<16x16x16xf32> to vector<256x16xf32>
    %83 = tpu.concatenate %66, %68, %70, %72, %74, %76, %78, %80, %82 in 1 : vector<256x16xf32>, vector<256x16xf32>, vector<256x16xf32>, vector<256x16xf32>, vector<256x16xf32>, vector<256x16xf32>, vector<256x16xf32>, vector<256x16xf32>, vector<256x16xf32> -> vector<256x144xf32>
    %c0_114 = arith.constant 0 : index
    %c0_115 = arith.constant 0 : index
    %84 = vector.load %arg6[%c0_114, %c0_115] : memref<144x32xf32, #tpu.memory_space<vmem>>, vector<144x32xf32>
    %cst_116 = arith.constant dense<0.000000e+00> : vector<256x32xf32>
    %85 = tpu.matmul %83, %84, %cst_116 {dimension_numbers = #tpu.dot_dimension_numbers<[1], [0], [0], [1], [0, 0, 1, 1], [], []>} : vector<256x144xf32>, vector<144x32xf32>, vector<256x32xf32> -> vector<256x32xf32>
    %c0_117 = arith.constant 0 : index
    %c0_118 = arith.constant 0 : index
    %86 = vector.load %arg7[%c0_117, %c0_118] : memref<1x32xf32, #tpu.memory_space<vmem>>, vector<1x32xf32>
    %87 = vector.broadcast %86 : vector<1x32xf32> to vector<256x32xf32>
    %88 = arith.addf %85, %87 : vector<256x32xf32>
    %cst_119 = arith.constant 0.000000e+00 : f32
    %89 = vector.broadcast %cst_119 : f32 to vector<256x32xf32>
    %90 = arith.maximumf %88, %89 : vector<256x32xf32>
    %cst_120 = arith.constant dense<0.000000e+00> : vector<32xf32>
    %91 = vector.multi_reduction <add>, %90, %cst_120 [0] : vector<256x32xf32> to vector<32xf32>
    %92 = vector.shape_cast %91 : vector<32xf32> to vector<1x32xf32>
    %cst_121 = arith.constant 2.560000e+02 : f32
    %93 = vector.broadcast %cst_121 : f32 to vector<1x32xf32>
    %94 = arith.divf %92, %93 : vector<1x32xf32>
    %c0_122 = arith.constant 0 : index
    %c0_123 = arith.constant 0 : index
    %95 = vector.load %arg8[%c0_122, %c0_123] : memref<32x10xf32, #tpu.memory_space<vmem>>, vector<32x10xf32>
    %cst_124 = arith.constant dense<0.000000e+00> : vector<1x10xf32>
    %96 = tpu.matmul %94, %95, %cst_124 {dimension_numbers = #tpu.dot_dimension_numbers<[1], [0], [0], [1], [0, 0, 1, 1], [], []>} : vector<1x32xf32>, vector<32x10xf32>, vector<1x10xf32> -> vector<1x10xf32>
    %c0_125 = arith.constant 0 : index
    %c0_126 = arith.constant 0 : index
    %97 = vector.load %arg9[%c0_125, %c0_126] : memref<1x10xf32, #tpu.memory_space<vmem>>, vector<1x10xf32>
    %98 = arith.addf %96, %97 : vector<1x10xf32>
    %c0_127 = arith.constant 0 : index
    %c0_128 = arith.constant 0 : index
    %c0_129 = arith.constant 0 : index
    %99 = vector.load %arg10[%c0_127, %c0_128, %c0_129] : memref<1x1x10xf32, #tpu.memory_space<vmem>>, vector<1x1x10xf32>
    %100 = vector.shape_cast %99 : vector<1x1x10xf32> to vector<1x10xf32>
    %101 = vector.shape_cast %98 : vector<1x10xf32> to vector<1x1x10xf32>
    tpu.vector_store %arg10[%c0_127, %c0_128, %c0_129], %101 {strides = array<i32>} : memref<1x1x10xf32, #tpu.memory_space<vmem>>, vector<1x1x10xf32>,
    return
  }
  func.func @transform_0(%arg0: i32) -> (i32, i32, i32, i32) {
    %c0_i32 = arith.constant 0 : i32
    %c0_i32_0 = arith.constant 0 : i32
    %c0_i32_1 = arith.constant 0 : i32
    %c0_i32_2 = arith.constant 0 : i32
    return %arg0, %c0_i32, %c0_i32_0, %c0_i32_1 : i32, i32, i32, i32
  }
  func.func @transform_1(%arg0: i32) -> (i32, i32) {
    %c0_i32 = arith.constant 0 : i32
    %c0_i32_0 = arith.constant 0 : i32
    %c0_i32_1 = arith.constant 0 : i32
    return %c0_i32, %c0_i32_0 : i32, i32
  }
  func.func @transform_2(%arg0: i32) -> (i32, i32) {
    %c0_i32 = arith.constant 0 : i32
    %c0_i32_0 = arith.constant 0 : i32
    %c0_i32_1 = arith.constant 0 : i32
    return %c0_i32, %c0_i32_0 : i32, i32
  }
  func.func @transform_3(%arg0: i32) -> (i32, i32) {
    %c0_i32 = arith.constant 0 : i32
    %c0_i32_0 = arith.constant 0 : i32
    %c0_i32_1 = arith.constant 0 : i32
    return %c0_i32, %c0_i32_0 : i32, i32
  }
  func.func @transform_4(%arg0: i32) -> (i32, i32) {
    %c0_i32 = arith.constant 0 : i32
    %c0_i32_0 = arith.constant 0 : i32
    %c0_i32_1 = arith.constant 0 : i32
    return %c0_i32, %c0_i32_0 : i32, i32
  }
  func.func @transform_5(%arg0: i32) -> (i32, i32) {
    %c0_i32 = arith.constant 0 : i32
    %c0_i32_0 = arith.constant 0 : i32
    %c0_i32_1 = arith.constant 0 : i32
    return %c0_i32, %c0_i32_0 : i32, i32
  }
  func.func @transform_6(%arg0: i32) -> (i32, i32) {
    %c0_i32 = arith.constant 0 : i32
    %c0_i32_0 = arith.constant 0 : i32
    %c0_i32_1 = arith.constant 0 : i32
    return %c0_i32, %c0_i32_0 : i32, i32
  }
  func.func @transform_7(%arg0: i32) -> (i32, i32) {
    %c0_i32 = arith.constant 0 : i32
    %c0_i32_0 = arith.constant 0 : i32
    %c0_i32_1 = arith.constant 0 : i32
    return %c0_i32, %c0_i32_0 : i32, i32
  }
  func.func @transform_8(%arg0: i32) -> (i32, i32) {
    %c0_i32 = arith.constant 0 : i32
    %c0_i32_0 = arith.constant 0 : i32
    %c0_i32_1 = arith.constant 0 : i32
    return %c0_i32, %c0_i32_0 : i32, i32
  }
  func.func @transform_9(%arg0: i32) -> (i32, i32, i32) {
    %c0_i32 = arith.constant 0 : i32
    %c0_i32_0 = arith.constant 0 : i32
    %c0_i32_1 = arith.constant 0 : i32
    return %arg0, %c0_i32, %c0_i32_0 : i32, i32, i32
  }
}

</mosaic_0001>

<llo_original>
// kernel: enhanced_distributed_model_forward_impl.1
$region0: #{enhanced_distributed_model_forward_impl.1}
  #allocation0 [shape = 'u32[]', space=smem, size = 0x4, offset = 0x4, fixed_abs, tag = 'smem constant byte address 0x4 - core index']
  #allocation1 [shape = 'u32[144,128]{1,0:T(1,128)}', space=vmem, size = 0x12000, scoped, tag = 'internal scratch']
  #allocation2 [shape = 'f32[18,18,4]{2,1,0:T(8,128)}', space=vmem, size = 0x36000, scoped, tag = 'scratch operand']
  #allocation3 [shape = 'f32[18,18,8]{2,1,0:T(8,128)}', space=vmem, size = 0x36000, scoped, tag = 'scratch operand']
  #allocation4 [shape = 'f32[18,18,16]{2,1,0:T(8,128)}', space=vmem, size = 0x36000, scoped, tag = 'scratch operand']
  %s0 = inlined_call_operand.vmem [shape: f32[2,16,16,4], index: 0, kind: input, shape index: {}]
  %s1 = inlined_call_operand.vmem [shape: f32[36,8], index: 1, kind: input, shape index: {}]
  %s2 = inlined_call_operand.vmem [shape: f32[1,8], index: 2, kind: input, shape index: {}]
  %s3 = inlined_call_operand.vmem [shape: f32[72,16], index: 3, kind: input, shape index: {}]
  %s4 = inlined_call_operand.vmem [shape: f32[1,16], index: 4, kind: input, shape index: {}]
  %s5 = inlined_call_operand.vmem [shape: f32[144,32], index: 5, kind: input, shape index: {}]
  %s6 = inlined_call_operand.vmem [shape: f32[1,32], index: 6, kind: input, shape index: {}]
  %s7 = inlined_call_operand.vmem [shape: f32[32,10], index: 7, kind: input, shape index: {}]
  %s8 = inlined_call_operand.vmem [shape: f32[1,10], index: 8, kind: input, shape index: {}]
  %s9 = inlined_call_operand.hbm [shape: f32[2,1,10], index: 9, kind: output, shape index: {}]
  %s10 = sld [smem:[#allocation0]]
  $region69: #{enhanced_distributed_model_forward_impl.1} parent=0
    _
  %s12 = ssub.s32 1, %s10
  %s13 = scalar_select 0, %s12, %s10
  $region1: #{enhanced_distributed_model_forward_impl.1} parent=0
    #allocation5 [shape = 'u8[1024]{0}', space=vmem, size = 0x400, scoped, tag = 'output window, operand 0']
    #allocation6 [shape = 's32[2]{0}', space=sflag, size = 0x8, scoped, tag = 'scoped memory for enhanced_distributed_model_forward_impl.1']
    %14 = vsyncpa [#allocation6], 0
    %s15 = scalar_lea.sflag [#allocation6], 1
    %16 = vsyncpa %s15, 0
    loop: start=0, step=1, limit=4
    $region2: #{enhanced_distributed_model_forward_impl.1} parent=1 // loop_pre_header
      _
    $region3: #{enhanced_distributed_model_forward_impl.1} parent=1 // loop_header
      %s18 = sphi 0, %s22
      %p19 = scmp.ge.s32.totalorder %s18, 4
      %s28 = sphi 0, %s30
      %s31 = sphi 0, %s28
      %s32 = sphi 0, %s31
      %s48 = sphi 0, %s32
      %s52 = sphi 0, %s52
      %s54 = sphi 0, %s52
      %s55 = sphi 0, %s54
      %s69 = sphi 0, %s55
      %s73 = sphi 0, %s73
      %s75 = sphi 0, %s73
      %s76 = sphi 0, %s75
      %s90 = sphi 0, %s76
      %s94 = sphi 0, %s94
      %s96 = sphi 0, %s94
      %s97 = sphi 0, %s96
      %s111 = sphi 0, %s97
      %s115 = sphi 0, %s115
      %s117 = sphi 0, %s115
      %s118 = sphi 0, %s117
      %s132 = sphi 0, %s118
      %s136 = sphi 0, %s136
      %s138 = sphi 0, %s136
      %s139 = sphi 0, %s138
      %s153 = sphi 0, %s139
      %s157 = sphi 0, %s157
      %s159 = sphi 0, %s157
      %s160 = sphi 0, %s159
      %s174 = sphi 0, %s160
      %s178 = sphi 0, %s178
      %s180 = sphi 0, %s178
      %s181 = sphi 0, %s180
      %s195 = sphi 0, %s181
      %s199 = sphi 0, %s199
      %s201 = sphi 0, %s199
      %s202 = sphi 0, %s201
      %s216 = sphi 0, %s202
      %s222 = sphi 0, %s224
      %s225 = sphi 0, %s222
      %s226 = sphi 0, %s225
      %s242 = sphi 0, %s226
    $region4: #{enhanced_distributed_model_forward_impl.1} parent=1 // loop_header_branch
      %21 = sbr.rel (%p19) target = $region8
    $region5: #{enhanced_distributed_model_forward_impl.1} parent=1 // loop_body
      %s23 = ssub.s32 %s18, 1
      %s24 = ssub.s32 %s18, 2
      %s25 = sadd.s32 %s18, 1
      %s26 = ssub.s32 %s18, %s25
      %p27 = scmp.eq.s32.totalorder %s26, 0
      %s29 = sadd.s32 %s28, 1
      %s30 = scalar_select %p27, %s28, %s29
      %p33 = pneg %p27
      %p34 = scmp.eq.s32.totalorder %s18, 1
      %p35 = por %p33, %p34
      %p36 = scmp.ne.s32.totalorder %s28, %s31
      %p37 = scmp.eq.s32.totalorder %s18, 0
      %p38 = por %p36, %p37
      %p39 = scmp.ne.s32.totalorder %s28, %s31
      %p40 = scmp.eq.s32.totalorder %s23, 1
      %p41 = por %p39, %p40
      %p42 = scmp.ne.s32.totalorder %s31, %s32
      %p43 = scmp.eq.s32.totalorder %s23, 0
      %p44 = por %p42, %p43
      %p45 = scmp.ne.s32.totalorder %s31, %s32
      %p46 = scmp.eq.s32.totalorder %s24, 1
      %p47 = por %p45, %p46
      %p49 = scmp.ne.s32.totalorder %s32, %s48
      %p50 = scmp.eq.s32.totalorder %s24, 0
      %p51 = por %p49, %p50
      %s53 = sadd.s32 %s52, 1
      %p56 = scmp.eq.s32.totalorder %s18, 1
      %p57 = scmp.ne.s32.totalorder %s52, %s54
      %p58 = scmp.eq.s32.totalorder %s18, 0
      %p59 = por %p57, %p58
      %p60 = scmp.ne.s32.totalorder %s52, %s54
      %p61 = scmp.eq.s32.totalorder %s23, 1
      %p62 = por %p60, %p61
      %p63 = scmp.ne.s32.totalorder %s54, %s55
      %p64 = scmp.eq.s32.totalorder %s23, 0
      %p65 = por %p63, %p64
      %p66 = scmp.ne.s32.totalorder %s54, %s55
      %p67 = scmp.eq.s32.totalorder %s24, 1
      %p68 = por %p66, %p67
      %p70 = scmp.ne.s32.totalorder %s55, %s69
      %p71 = scmp.eq.s32.totalorder %s24, 0
      %p72 = por %p70, %p71
      %s74 = sadd.s32 %s73, 1
      %p77 = scmp.eq.s32.totalorder %s18, 1
      %p78 = scmp.ne.s32.totalorder %s73, %s75
      %p79 = scmp.eq.s32.totalorder %s18, 0
      %p80 = por %p78, %p79
      %p81 = scmp.ne.s32.totalorder %s73, %s75
      %p82 = scmp.eq.s32.totalorder %s23, 1
      %p83 = por %p81, %p82
      %p84 = scmp.ne.s32.totalorder %s75, %s76
      %p85 = scmp.eq.s32.totalorder %s23, 0
      %p86 = por %p84, %p85
      %p87 = scmp.ne.s32.totalorder %s75, %s76
      %p88 = scmp.eq.s32.totalorder %s24, 1
      %p89 = por %p87, %p88
      %p91 = scmp.ne.s32.totalorder %s76, %s90
      %p92 = scmp.eq.s32.totalorder %s24, 0
      %p93 = por %p91, %p92
      %s95 = sadd.s32 %s94, 1
      %p98 = scmp.eq.s32.totalorder %s18, 1
      %p99 = scmp.ne.s32.totalorder %s94, %s96
      %p100 = scmp.eq.s32.totalorder %s18, 0
      %p101 = por %p99, %p100
      %p102 = scmp.ne.s32.totalorder %s94, %s96
      %p103 = scmp.eq.s32.totalorder %s23, 1
      %p104 = por %p102, %p103
      %p105 = scmp.ne.s32.totalorder %s96, %s97
      %p106 = scmp.eq.s32.totalorder %s23, 0
      %p107 = por %p105, %p106
      %p108 = scmp.ne.s32.totalorder %s96, %s97
      %p109 = scmp.eq.s32.totalorder %s24, 1
      %p110 = por %p108, %p109
      %p112 = scmp.ne.s32.totalorder %s97, %s111
      %p113 = scmp.eq.s32.totalorder %s24, 0
      %p114 = por %p112, %p113
      %s116 = sadd.s32 %s115, 1
      %p119 = scmp.eq.s32.totalorder %s18, 1
      %p120 = scmp.ne.s32.totalorder %s115, %s117
      %p121 = scmp.eq.s32.totalorder %s18, 0
      %p122 = por %p120, %p121
      %p123 = scmp.ne.s32.totalorder %s115, %s117
      %p124 = scmp.eq.s32.totalorder %s23, 1
      %p125 = por %p123, %p124
      %p126 = scmp.ne.s32.totalorder %s117, %s118
      %p127 = scmp.eq.s32.totalorder %s23, 0
      %p128 = por %p126, %p127
      %p129 = scmp.ne.s32.totalorder %s117, %s118
      %p130 = scmp.eq.s32.totalorder %s24, 1
      %p131 = por %p129, %p130
      %p133 = scmp.ne.s32.totalorder %s118, %s132
      %p134 = scmp.eq.s32.totalorder %s24, 0
      %p135 = por %p133, %p134
      %s137 = sadd.s32 %s136, 1
      %p140 = scmp.eq.s32.totalorder %s18, 1
      %p141 = scmp.ne.s32.totalorder %s136, %s138
      %p142 = scmp.eq.s32.totalorder %s18, 0
      %p143 = por %p141, %p142
      %p144 = scmp.ne.s32.totalorder %s136, %s138
      %p145 = scmp.eq.s32.totalorder %s23, 1
      %p146 = por %p144, %p145
      %p147 = scmp.ne.s32.totalorder %s138, %s139
      %p148 = scmp.eq.s32.totalorder %s23, 0
      %p149 = por %p147, %p148
      %p150 = scmp.ne.s32.totalorder %s138, %s139
      %p151 = scmp.eq.s32.totalorder %s24, 1
      %p152 = por %p150, %p151
      %p154 = scmp.ne.s32.totalorder %s139, %s153
      %p155 = scmp.eq.s32.totalorder %s24, 0
      %p156 = por %p154, %p155
      %s158 = sadd.s32 %s157, 1
      %p161 = scmp.eq.s32.totalorder %s18, 1
      %p162 = scmp.ne.s32.totalorder %s157, %s159
      %p163 = scmp.eq.s32.totalorder %s18, 0
      %p164 = por %p162, %p163
      %p165 = scmp.ne.s32.totalorder %s157, %s159
      %p166 = scmp.eq.s32.totalorder %s23, 1
      %p167 = por %p165, %p166
      %p168 = scmp.ne.s32.totalorder %s159, %s160
      %p169 = scmp.eq.s32.totalorder %s23, 0
      %p170 = por %p168, %p169
      %p171 = scmp.ne.s32.totalorder %s159, %s160
      %p172 = scmp.eq.s32.totalorder %s24, 1
      %p173 = por %p171, %p172
      %p175 = scmp.ne.s32.totalorder %s160, %s174
      %p176 = scmp.eq.s32.totalorder %s24, 0
      %p177 = por %p175, %p176
      %s179 = sadd.s32 %s178, 1
      %p182 = scmp.eq.s32.totalorder %s18, 1
      %p183 = scmp.ne.s32.totalorder %s178, %s180
      %p184 = scmp.eq.s32.totalorder %s18, 0
      %p185 = por %p183, %p184
      %p186 = scmp.ne.s32.totalorder %s178, %s180
      %p187 = scmp.eq.s32.totalorder %s23, 1
      %p188 = por %p186, %p187
      %p189 = scmp.ne.s32.totalorder %s180, %s181
      %p190 = scmp.eq.s32.totalorder %s23, 0
      %p191 = por %p189, %p190
      %p192 = scmp.ne.s32.totalorder %s180, %s181
      %p193 = scmp.eq.s32.totalorder %s24, 1
      %p194 = por %p192, %p193
      %p196 = scmp.ne.s32.totalorder %s181, %s195
      %p197 = scmp.eq.s32.totalorder %s24, 0
      %p198 = por %p196, %p197
      %s200 = sadd.s32 %s199, 1
      %p203 = scmp.eq.s32.totalorder %s18, 1
      %p204 = scmp.ne.s32.totalorder %s199, %s201
      %p205 = scmp.eq.s32.totalorder %s18, 0
      %p206 = por %p204, %p205
      %p207 = scmp.ne.s32.totalorder %s199, %s201
      %p208 = scmp.eq.s32.totalorder %s23, 1
      %p209 = por %p207, %p208
      %p210 = scmp.ne.s32.totalorder %s201, %s202
      %p211 = scmp.eq.s32.totalorder %s23, 0
      %p212 = por %p210, %p211
      %p213 = scmp.ne.s32.totalorder %s201, %s202
      %p214 = scmp.eq.s32.totalorder %s24, 1
      %p215 = por %p213, %p214
      %p217 = scmp.ne.s32.totalorder %s202, %s216
      %p218 = scmp.eq.s32.totalorder %s24, 0
      %p219 = por %p217, %p218
      %s220 = ssub.s32 %s18, %s25
      %p221 = scmp.eq.s32.totalorder %s220, 0
      %s223 = sadd.s32 %s222, 1
      %s224 = scalar_select %p221, %s222, %s223
      %p227 = pneg %p221
      %p228 = scmp.eq.s32.totalorder %s18, 1
      %p229 = por %p227, %p228
      %p230 = scmp.ne.s32.totalorder %s222, %s225
      %p231 = scmp.eq.s32.totalorder %s18, 0
      %p232 = por %p230, %p231
      %p233 = scmp.ne.s32.totalorder %s222, %s225
      %p234 = scmp.eq.s32.totalorder %s23, 1
      %p235 = por %p233, %p234
      %p236 = scmp.ne.s32.totalorder %s225, %s226
      %p237 = scmp.eq.s32.totalorder %s23, 0
      %p238 = por %p236, %p237
      %p239 = scmp.ne.s32.totalorder %s225, %s226
      %p240 = scmp.eq.s32.totalorder %s24, 1
      %p241 = por %p239, %p240
      %p243 = scmp.ne.s32.totalorder %s226, %s242
      %p244 = scmp.eq.s32.totalorder %s24, 0
      %p245 = por %p243, %p244
      %p246 = scmp.le.s32.totalorder 1, %s18
      %p247 = scmp.lt.s32.totalorder %s18, 3
      %p248 = pnand %p246, %p247
      %p249 = pneg %p248
      // Predicated region
      $region9: #{enhanced_distributed_model_forward_impl.1} parent=5 // pred_check
        _
      $region10: #{enhanced_distributed_model_forward_impl.1} parent=5 // pred_check_branch
        %251 = sbr.rel (%p248) target = $region12
      $region11: #{enhanced_distributed_model_forward_impl.1} parent=5 // pred_region
        %s252 = ssub.s32 %s18, 1
        // Predicated region
        $region13: #{enhanced_distributed_model_forward_impl.1} parent=11 // pred_check
          %p253 = pneg %p65
        $region14: #{enhanced_distributed_model_forward_impl.1} parent=11 // pred_check_branch
          %255 = sbr.rel (%p253) target = $region16
        $region15: #{enhanced_distributed_model_forward_impl.1} parent=11 // pred_region
          _
        $region16: #{enhanced_distributed_model_forward_impl.1} parent=11 // pred_fallthru
          _
        // Predicated region
        $region17: #{enhanced_distributed_model_forward_impl.1} parent=11 // pred_check
          %p256 = pneg %p86
        $region18: #{enhanced_distributed_model_forward_impl.1} parent=11 // pred_check_branch
          %258 = sbr.rel (%p256) target = $region20
        $region19: #{enhanced_distributed_model_forward_impl.1} parent=11 // pred_region
          _
        $region20: #{enhanced_distributed_model_forward_impl.1} parent=11 // pred_fallthru
          _
        // Predicated region
        $region21: #{enhanced_distributed_model_forward_impl.1} parent=11 // pred_check
          %p259 = pneg %p107
        $region22: #{enhanced_distributed_model_forward_impl.1} parent=11 // pred_check_branch
          %261 = sbr.rel (%p259) target = $region24
        $region23: #{enhanced_distributed_model_forward_impl.1} parent=11 // pred_region
          _
        $region24: #{enhanced_distributed_model_forward_impl.1} parent=11 // pred_fallthru
          _
        // Predicated region
        $region25: #{enhanced_distributed_model_forward_impl.1} parent=11 // pred_check
          %p262 = pneg %p128
        $region26: #{enhanced_distributed_model_forward_impl.1} parent=11 // pred_check_branch
          %264 = sbr.rel (%p262) target = $region28
        $region27: #{enhanced_distributed_model_forward_impl.1} parent=11 // pred_region
          _
        $region28: #{enhanced_distributed_model_forward_impl.1} parent=11 // pred_fallthru
          _
        // Predicated region
        $region29: #{enhanced_distributed_model_forward_impl.1} parent=11 // pred_check
          %p265 = pneg %p149
        $region30: #{enhanced_distributed_model_forward_impl.1} parent=11 // pred_check_branch
          %267 = sbr.rel (%p265) target = $region32
        $region31: #{enhanced_distributed_model_forward_impl.1} parent=11 // pred_region
          _
        $region32: #{enhanced_distributed_model_forward_impl.1} parent=11 // pred_fallthru
          _
        // Predicated region
        $region33: #{enhanced_distributed_model_forward_impl.1} parent=11 // pred_check
          %p268 = pneg %p170
        $region34: #{enhanced_distributed_model_forward_impl.1} parent=11 // pred_check_branch
          %270 = sbr.rel (%p268) target = $region36
        $region35: #{enhanced_distributed_model_forward_impl.1} parent=11 // pred_region
          _
        $region36: #{enhanced_distributed_model_forward_impl.1} parent=11 // pred_fallthru
          _
        // Predicated region
        $region37: #{enhanced_distributed_model_forward_impl.1} parent=11 // pred_check
          %p271 = pneg %p191
        $region38: #{enhanced_distributed_model_forward_impl.1} parent=11 // pred_check_branch
          %273 = sbr.rel (%p271) target = $region40
        $region39: #{enhanced_distributed_model_forward_impl.1} parent=11 // pred_region
          _
        $region40: #{enhanced_distributed_model_forward_impl.1} parent=11 // pred_fallthru
          _
        // Predicated region
        $region41: #{enhanced_distributed_model_forward_impl.1} parent=11 // pred_check
          %p274 = pneg %p212
        $region42: #{enhanced_distributed_model_forward_impl.1} parent=11 // pred_check_branch
          %276 = sbr.rel (%p274) target = $region44
        $region43: #{enhanced_distributed_model_forward_impl.1} parent=11 // pred_region
          _
        $region44: #{enhanced_distributed_model_forward_impl.1} parent=11 // pred_fallthru
          _
      $region12: #{enhanced_distributed_model_forward_impl.1} parent=5 // pred_fallthru
        _
      %p277 = scmp.lt.s32.totalorder %s18, 2
      // Predicated region
      $region45: #{enhanced_distributed_model_forward_impl.1} parent=5 // pred_check
        %p278 = pneg %p277
      $region46: #{enhanced_distributed_model_forward_impl.1} parent=5 // pred_check_branch
        %280 = sbr.rel (%p278) target = $region48
      $region47: #{enhanced_distributed_model_forward_impl.1} parent=5 // pred_region
        // Predicated region
        $region49: #{enhanced_distributed_model_forward_impl.1} parent=47 // pred_check
          %p281 = pneg %p38
        $region50: #{enhanced_distributed_model_forward_impl.1} parent=47 // pred_check_branch
          %283 = sbr.rel (%p281) target = $region52
        $region51: #{enhanced_distributed_model_forward_impl.1} parent=47 // pred_region
          %p284 = scmp.lt.s32.totalorder %s18, 1
          %s285 = scalar_select %p284, %s18, 1
          %s286 = smul.addr %s285, 32
          %s287 = smul.addr %s286, 8
          %s288 = scalar_lea.vmem %s0, %s287
        $region52: #{enhanced_distributed_model_forward_impl.1} parent=47 // pred_fallthru
          _
      $region48: #{enhanced_distributed_model_forward_impl.1} parent=5 // pred_fallthru
        _
      %p289 = scmp.le.s32.totalorder 1, %s18
      %p290 = scmp.lt.s32.totalorder %s18, 3
      %p291 = pnand %p289, %p290
      %p292 = pneg %p291
      // Predicated region
      $region53: #{enhanced_distributed_model_forward_impl.1} parent=5 // pred_check
        _
      $region54: #{enhanced_distributed_model_forward_impl.1} parent=5 // pred_check_branch
        %294 = sbr.rel (%p291) target = $region56
      $region55: #{enhanced_distributed_model_forward_impl.1} parent=5 // pred_region
        %s295 = ssub.s32 %s18, 1
        %p296 = scmp.lt.s32.totalorder %s23, 1
        %s297 = scalar_select %p296, %s23, 1
        %s298 = smul.addr %s297, 32
        %s299 = smul.addr %s298, 8
        %s300 = scalar_lea.vmem %s0, %s299
        %p301 = pneg %p44
        %p302 = pneg %p41
        %p303 = pneg %p65
        %p304 = pneg %p62
        %p305 = pneg %p86
        %p306 = pneg %p83
        %p307 = pneg %p107
        %p308 = pneg %p104
        %p309 = pneg %p128
        %p310 = pneg %p125
        %p311 = pneg %p149
        %p312 = pneg %p146
        %p313 = pneg %p170
        %p314 = pneg %p167
        %p315 = pneg %p191
        %p316 = pneg %p188
        %p317 = pneg %p212
        %p318 = pneg %p209
        %p319 = pneg %p238
        %p320 = pneg %p235
        %s321 = sand.u32 %s225, 1
        %s322 = scalar_lea.sflag [#allocation6], %s321
        %s323 = sand.u32 %s225, 1
        %s324 = scalar_lea.vmem [#allocation5], %s323
        %p325 = scmp.lt.s32.totalorder %s23, 1
        %s326 = scalar_select %p325, %s23, 1
        %s327 = smul.addr %s326, 32
        %s328 = smul.addr %s327, 8
        %s329 = scalar_lea.vmem %s0, %s328
        %v330 = vld [vmem:[%s329] sm:$0xff]
        %v331 = vld [vmem:[%s329 + $0x8] sm:$0xff]
        %v332 = vld [vmem:[%s329 + $0x10] sm:$0xff]
        %v333 = vld [vmem:[%s329 + $0x18] sm:$0xff]
        %v334 = vld [vmem:[%s329 + $0x20] sm:$0xff]
        %v335 = vld [vmem:[%s329 + $0x28] sm:$0xff]
        %v336 = vld [vmem:[%s329 + $0x30] sm:$0xff]
        %v337 = vld [vmem:[%s329 + $0x38] sm:$0xff]
        %v338 = vld [vmem:[%s329 + $0x40] sm:$0xff]
        %v339 = vld [vmem:[%s329 + $0x48] sm:$0xff]
        %v340 = vld [vmem:[%s329 + $0x50] sm:$0xff]
        %v341 = vld [vmem:[%s329 + $0x58] sm:$0xff]
        %v342 = vld [vmem:[%s329 + $0x60] sm:$0xff]
        %v343 = vld [vmem:[%s329 + $0x68] sm:$0xff]
        %v344 = vld [vmem:[%s329 + $0x70] sm:$0xff]
        %v345 = vld [vmem:[%s329 + $0x78] sm:$0xff]
        %v346 = vld [vmem:[%s329 + $0x80] sm:$0xff]
        %v347 = vld [vmem:[%s329 + $0x88] sm:$0xff]
        %v348 = vld [vmem:[%s329 + $0x90] sm:$0xff]
        %v349 = vld [vmem:[%s329 + $0x98] sm:$0xff]
        %v350 = vld [vmem:[%s329 + $0xa0] sm:$0xff]
        %v351 = vld [vmem:[%s329 + $0xa8] sm:$0xff]
        %v352 = vld [vmem:[%s329 + $0xb0] sm:$0xff]
        %v353 = vld [vmem:[%s329 + $0xb8] sm:$0xff]
        %v354 = vld [vmem:[%s329 + $0xc0] sm:$0xff]
        %v355 = vld [vmem:[%s329 + $0xc8] sm:$0xff]
        %v356 = vld [vmem:[%s329 + $0xd0] sm:$0xff]
        %v357 = vld [vmem:[%s329 + $0xd8] sm:$0xff]
        %v358 = vld [vmem:[%s329 + $0xe0] sm:$0xff]
        %v359 = vld [vmem:[%s329 + $0xe8] sm:$0xff]
        %v360 = vld [vmem:[%s329 + $0xf0] sm:$0xff]
        %v361 = vld [vmem:[%s329 + $0xf8] sm:$0xff]
        %vm362 = vcmask 31744
        %363 = vst.msk [vmem:[#allocation2] sm:$0xff] %vm362, 0.0
        %364 = vst.msk [vmem:[#allocation2 + $0x8] sm:$0xff] %vm362, 0.0
        %vm365 = vcmask 25600
        %366 = vst.msk [vmem:[#allocation2 + $0x10] sm:$0x3] %vm365, 0.0
        %367 = vst.msk [vmem:[#allocation2 + $0x18] sm:$0xff] %vm362, 0.0
        %368 = vst.msk [vmem:[#allocation2 + $0x20] sm:$0xff] %vm362, 0.0
        %369 = vst.msk [vmem:[#allocation2 + $0x28] sm:$0x3] %vm365, 0.0
        %370 = vst.msk [vmem:[#allocation2 + $0x30] sm:$0xff] %vm362, 0.0
        %371 = vst.msk [vmem:[#allocation2 + $0x38] sm:$0xff] %vm362, 0.0
        %372 = vst.msk [vmem:[#allocation2 + $0x40] sm:$0x3] %vm365, 0.0
        %373 = vst.msk [vmem:[#allocation2 + $0x48] sm:$0xff] %vm362, 0.0
        %374 = vst.msk [vmem:[#allocation2 + $0x50] sm:$0xff] %vm362, 0.0
        %375 = vst.msk [vmem:[#allocation2 + $0x58] sm:$0x3] %vm365, 0.0
        %376 = vst.msk [vmem:[#allocation2 + $0x60] sm:$0xff] %vm362, 0.0
        %377 = vst.msk [vmem:[#allocation2 + $0x68] sm:$0xff] %vm362, 0.0
        %378 = vst.msk [vmem:[#allocation2 + $0x70] sm:$0x3] %vm365, 0.0
        %379 = vst.msk [vmem:[#allocation2 + $0x78] sm:$0xff] %vm362, 0.0
        %380 = vst.msk [vmem:[#allocation2 + $0x80] sm:$0xff] %vm362, 0.0
        %381 = vst.msk [vmem:[#allocation2 + $0x88] sm:$0x3] %vm365, 0.0
        %382 = vst.msk [vmem:[#allocation2 + $0x90] sm:$0xff] %vm362, 0.0
        %383 = vst.msk [vmem:[#allocation2 + $0x98] sm:$0xff] %vm362, 0.0
        %384 = vst.msk [vmem:[#allocation2 + $0xa0] sm:$0x3] %vm365, 0.0
        %385 = vst.msk [vmem:[#allocation2 + $0xa8] sm:$0xff] %vm362, 0.0
        %386 = vst.msk [vmem:[#allocation2 + $0xb0] sm:$0xff] %vm362, 0.0
        %387 = vst.msk [vmem:[#allocation2 + $0xb8] sm:$0x3] %vm365, 0.0
        %388 = vst.msk [vmem:[#allocation2 + $0xc0] sm:$0xff] %vm362, 0.0
        %389 = vst.msk [vmem:[#allocation2 + $0xc8] sm:$0xff] %vm362, 0.0
        %390 = vst.msk [vmem:[#allocation2 + $0xd0] sm:$0x3] %vm365, 0.0
        %391 = vst.msk [vmem:[#allocation2 + $0xd8] sm:$0xff] %vm362, 0.0
        %392 = vst.msk [vmem:[#allocation2 + $0xe0] sm:$0xff] %vm362, 0.0
        %393 = vst.msk [vmem:[#allocation2 + $0xe8] sm:$0x3] %vm365, 0.0
        %394 = vst.msk [vmem:[#allocation2 + $0xf0] sm:$0xff] %vm362, 0.0
        %395 = vst.msk [vmem:[#allocation2 + $0xf8] sm:$0xff] %vm362, 0.0
        %396 = vst.msk [vmem:[#allocation2 + $0x100] sm:$0x3] %vm365, 0.0
        %397 = vst.msk [vmem:[#allocation2 + $0x108] sm:$0xff] %vm362, 0.0
        %398 = vst.msk [vmem:[#allocation2 + $0x110] sm:$0xff] %vm362, 0.0
        %399 = vst.msk [vmem:[#allocation2 + $0x118] sm:$0x3] %vm365, 0.0
        %400 = vst.msk [vmem:[#allocation2 + $0x120] sm:$0xff] %vm362, 0.0
        %401 = vst.msk [vmem:[#allocation2 + $0x128] sm:$0xff] %vm362, 0.0
        %402 = vst.msk [vmem:[#allocation2 + $0x130] sm:$0x3] %vm365, 0.0
        %403 = vst.msk [vmem:[#allocation2 + $0x138] sm:$0xff] %vm362, 0.0
        %404 = vst.msk [vmem:[#allocation2 + $0x140] sm:$0xff] %vm362, 0.0
        %405 = vst.msk [vmem:[#allocation2 + $0x148] sm:$0x3] %vm365, 0.0
        %406 = vst.msk [vmem:[#allocation2 + $0x150] sm:$0xff] %vm362, 0.0
        %407 = vst.msk [vmem:[#allocation2 + $0x158] sm:$0xff] %vm362, 0.0
        %408 = vst.msk [vmem:[#allocation2 + $0x160] sm:$0x3] %vm365, 0.0
        %409 = vst.msk [vmem:[#allocation2 + $0x168] sm:$0xff] %vm362, 0.0
        %410 = vst.msk [vmem:[#allocation2 + $0x170] sm:$0xff] %vm362, 0.0
        %411 = vst.msk [vmem:[#allocation2 + $0x178] sm:$0x3] %vm365, 0.0
        %412 = vst.msk [vmem:[#allocation2 + $0x180] sm:$0xff] %vm362, 0.0
        %413 = vst.msk [vmem:[#allocation2 + $0x188] sm:$0xff] %vm362, 0.0
        %414 = vst.msk [vmem:[#allocation2 + $0x190] sm:$0x3] %vm365, 0.0
        %415 = vst.msk [vmem:[#allocation2 + $0x198] sm:$0xff] %vm362, 0.0
        %416 = vst.msk [vmem:[#allocation2 + $0x1a0] sm:$0xff] %vm362, 0.0
        %417 = vst.msk [vmem:[#allocation2 + $0x1a8] sm:$0x3] %vm365, 0.0
        %s418 = scalar_lea.vmem [#allocation2], 24
        %419 = vst.msk [vmem:[%s418 + $0x1] sm:$0xff] %vm362, %v330
        %420 = vst.msk [vmem:[%s418 + $0x9] sm:$0xff] %vm362, %v331
        %421 = vst.msk [vmem:[%s418 + $0x19] sm:$0xff] %vm362, %v332
        %422 = vst.msk [vmem:[%s418 + $0x21] sm:$0xff] %vm362, %v333
        %423 = vst.msk [vmem:[%s418 + $0x31] sm:$0xff] %vm362, %v334
        %424 = vst.msk [vmem:[%s418 + $0x39] sm:$0xff] %vm362, %v335
        %425 = vst.msk [vmem:[%s418 + $0x49] sm:$0xff] %vm362, %v336
        %426 = vst.msk [vmem:[%s418 + $0x51] sm:$0xff] %vm362, %v337
        %427 = vst.msk [vmem:[%s418 + $0x61] sm:$0xff] %vm362, %v338
        %428 = vst.msk [vmem:[%s418 + $0x69] sm:$0xff] %vm362, %v339
        %429 = vst.msk [vmem:[%s418 + $0x79] sm:$0xff] %vm362, %v340
        %430 = vst.msk [vmem:[%s418 + $0x81] sm:$0xff] %vm362, %v341
        %431 = vst.msk [vmem:[%s418 + $0x91] sm:$0xff] %vm362, %v342
        %432 = vst.msk [vmem:[%s418 + $0x99] sm:$0xff] %vm362, %v343
        %433 = vst.msk [vmem:[%s418 + $0xa9] sm:$0xff] %vm362, %v344
        %434 = vst.msk [vmem:[%s418 + $0xb1] sm:$0xff] %vm362, %v345
        %435 = vst.msk [vmem:[%s418 + $0xc1] sm:$0xff] %vm362, %v346
        %436 = vst.msk [vmem:[%s418 + $0xc9] sm:$0xff] %vm362, %v347
        %437 = vst.msk [vmem:[%s418 + $0xd9] sm:$0xff] %vm362, %v348
        %438 = vst.msk [vmem:[%s418 + $0xe1] sm:$0xff] %vm362, %v349
        %439 = vst.msk [vmem:[%s418 + $0xf1] sm:$0xff] %vm362, %v350
        %440 = vst.msk [vmem:[%s418 + $0xf9] sm:$0xff] %vm362, %v351
        %441 = vst.msk [vmem:[%s418 + $0x109] sm:$0xff] %vm362, %v352
        %442 = vst.msk [vmem:[%s418 + $0x111] sm:$0xff] %vm362, %v353
        %443 = vst.msk [vmem:[%s418 + $0x121] sm:$0xff] %vm362, %v354
        %444 = vst.msk [vmem:[%s418 + $0x129] sm:$0xff] %vm362, %v355
        %445 = vst.msk [vmem:[%s418 + $0x139] sm:$0xff] %vm362, %v356
        %446 = vst.msk [vmem:[%s418 + $0x141] sm:$0xff] %vm362, %v357
        %447 = vst.msk [vmem:[%s418 + $0x151] sm:$0xff] %vm362, %v358
        %448 = vst.msk [vmem:[%s418 + $0x159] sm:$0xff] %vm362, %v359
        %449 = vst.msk [vmem:[%s418 + $0x169] sm:$0xff] %vm362, %v360
        %450 = vst.msk [vmem:[%s418 + $0x171] sm:$0xff] %vm362, %v361
        %v451 = vld [vmem:[#allocation2] sm:$0xff]
        %v452 = vld [vmem:[#allocation2 + $0x8] sm:$0xff]
        %v453 = vld [vmem:[#allocation2 + $0x18] sm:$0xff]
        %v454 = vld [vmem:[#allocation2 + $0x20] sm:$0xff]
        %v455 = vld [vmem:[#allocation2 + $0x30] sm:$0xff]
        %v456 = vld [vmem:[#allocation2 + $0x38] sm:$0xff]
        %v457 = vld [vmem:[#allocation2 + $0x48] sm:$0xff]
        %v458 = vld [vmem:[#allocation2 + $0x50] sm:$0xff]
        %v459 = vld [vmem:[#allocation2 + $0x60] sm:$0xff]
        %v460 = vld [vmem:[#allocation2 + $0x68] sm:$0xff]
        %v461 = vld [vmem:[#allocation2 + $0x78] sm:$0xff]
        %v462 = vld [vmem:[#allocation2 + $0x80] sm:$0xff]
        %v463 = vld [vmem:[#allocation2 + $0x90] sm:$0xff]
        %v464 = vld [vmem:[#allocation2 + $0x98] sm:$0xff]
        %v465 = vld [vmem:[#allocation2 + $0xa8] sm:$0xff]
        %v466 = vld [vmem:[#allocation2 + $0xb0] sm:$0xff]
        %v467 = vld [vmem:[#allocation2 + $0xc0] sm:$0xff]
        %v468 = vld [vmem:[#allocation2 + $0xc8] sm:$0xff]
        %v469 = vld [vmem:[#allocation2 + $0xd8] sm:$0xff]
        %v470 = vld [vmem:[#allocation2 + $0xe0] sm:$0xff]
        %v471 = vld [vmem:[#allocation2 + $0xf0] sm:$0xff]
        %v472 = vld [vmem:[#allocation2 + $0xf8] sm:$0xff]
        %v473 = vld [vmem:[#allocation2 + $0x108] sm:$0xff]
        %v474 = vld [vmem:[#allocation2 + $0x110] sm:$0xff]
        %v475 = vld [vmem:[#allocation2 + $0x120] sm:$0xff]
        %v476 = vld [vmem:[#allocation2 + $0x128] sm:$0xff]
        %v477 = vld [vmem:[#allocation2 + $0x138] sm:$0xff]
        %v478 = vld [vmem:[#allocation2 + $0x140] sm:$0xff]
        %v479 = vld [vmem:[#allocation2 + $0x150] sm:$0xff]
        %v480 = vld [vmem:[#allocation2 + $0x158] sm:$0xff]
        %v481 = vld [vmem:[#allocation2 + $0x168] sm:$0xff]
        %v482 = vld [vmem:[#allocation2 + $0x170] sm:$0xff]
        %v483 = vld [vmem:[#allocation2 + $0x1] sm:$0xff]
        %v484 = vld [vmem:[#allocation2 + $0x9] sm:$0xff]
        %v485 = vld [vmem:[#allocation2 + $0x19] sm:$0xff]
        %v486 = vld [vmem:[#allocation2 + $0x21] sm:$0xff]
        %v487 = vld [vmem:[#allocation2 + $0x31] sm:$0xff]
        %v488 = vld [vmem:[#allocation2 + $0x39] sm:$0xff]
        %v489 = vld [vmem:[#allocation2 + $0x49] sm:$0xff]
        %v490 = vld [vmem:[#allocation2 + $0x51] sm:$0xff]
        %v491 = vld [vmem:[#allocation2 + $0x61] sm:$0xff]
        %v492 = vld [vmem:[#allocation2 + $0x69] sm:$0xff]
        %v493 = vld [vmem:[#allocation2 + $0x79] sm:$0xff]
        %v494 = vld [vmem:[#allocation2 + $0x81] sm:$0xff]
        %v495 = vld [vmem:[#allocation2 + $0x91] sm:$0xff]
        %v496 = vld [vmem:[#allocation2 + $0x99] sm:$0xff]
        %v497 = vld [vmem:[#allocation2 + $0xa9] sm:$0xff]
        %v498 = vld [vmem:[#allocation2 + $0xb1] sm:$0xff]
        %v499 = vld [vmem:[#allocation2 + $0xc1] sm:$0xff]
        %v500 = vld [vmem:[#allocation2 + $0xc9] sm:$0xff]
        %v501 = vld [vmem:[#allocation2 + $0xd9] sm:$0xff]
        %v502 = vld [vmem:[#allocation2 + $0xe1] sm:$0xff]
        %v503 = vld [vmem:[#allocation2 + $0xf1] sm:$0xff]
        %v504 = vld [vmem:[#allocation2 + $0xf9] sm:$0xff]
        %v505 = vld [vmem:[#allocation2 + $0x109] sm:$0xff]
        %v506 = vld [vmem:[#allocation2 + $0x111] sm:$0xff]
        %v507 = vld [vmem:[#allocation2 + $0x121] sm:$0xff]
        %v508 = vld [vmem:[#allocation2 + $0x129] sm:$0xff]
        %v509 = vld [vmem:[#allocation2 + $0x139] sm:$0xff]
        %v510 = vld [vmem:[#allocation2 + $0x141] sm:$0xff]
        %v511 = vld [vmem:[#allocation2 + $0x151] sm:$0xff]
        %v512 = vld [vmem:[#allocation2 + $0x159] sm:$0xff]
        %v513 = vld [vmem:[#allocation2 + $0x169] sm:$0xff]
        %v514 = vld [vmem:[#allocation2 + $0x171] sm:$0xff]
        %v515 = vld [vmem:[#allocation2 + $0x2] sm:$0xff]
        %v516 = vld [vmem:[#allocation2 + $0xa] sm:$0xff]
        %v517 = vld [vmem:[#allocation2 + $0x1a] sm:$0xff]
        %v518 = vld [vmem:[#allocation2 + $0x22] sm:$0xff]
        %v519 = vld [vmem:[#allocation2 + $0x32] sm:$0xff]
        %v520 = vld [vmem:[#allocation2 + $0x3a] sm:$0xff]
        %v521 = vld [vmem:[#allocation2 + $0x4a] sm:$0xff]
        %v522 = vld [vmem:[#allocation2 + $0x52] sm:$0xff]
        %v523 = vld [vmem:[#allocation2 + $0x62] sm:$0xff]
        %v524 = vld [vmem:[#allocation2 + $0x6a] sm:$0xff]
        %v525 = vld [vmem:[#allocation2 + $0x7a] sm:$0xff]
        %v526 = vld [vmem:[#allocation2 + $0x82] sm:$0xff]
        %v527 = vld [vmem:[#allocation2 + $0x92] sm:$0xff]
        %v528 = vld [vmem:[#allocation2 + $0x9a] sm:$0xff]
        %v529 = vld [vmem:[#allocation2 + $0xaa] sm:$0xff]
        %v530 = vld [vmem:[#allocation2 + $0xb2] sm:$0xff]
        %v531 = vld [vmem:[#allocation2 + $0xc2] sm:$0xff]
        %v532 = vld [vmem:[#allocation2 + $0xca] sm:$0xff]
        %v533 = vld [vmem:[#allocation2 + $0xda] sm:$0xff]
        %v534 = vld [vmem:[#allocation2 + $0xe2] sm:$0xff]
        %v535 = vld [vmem:[#allocation2 + $0xf2] sm:$0xff]
        %v536 = vld [vmem:[#allocation2 + $0xfa] sm:$0xff]
        %v537 = vld [vmem:[#allocation2 + $0x10a] sm:$0xff]
        %v538 = vld [vmem:[#allocation2 + $0x112] sm:$0xff]
        %v539 = vld [vmem:[#allocation2 + $0x122] sm:$0xff]
        %v540 = vld [vmem:[#allocation2 + $0x12a] sm:$0xff]
        %v541 = vld [vmem:[#allocation2 + $0x13a] sm:$0xff]
        %v542 = vld [vmem:[#allocation2 + $0x142] sm:$0xff]
        %v543 = vld [vmem:[#allocation2 + $0x152] sm:$0xff]
        %v544 = vld [vmem:[#allocation2 + $0x15a] sm:$0xff]
        %v545 = vld [vmem:[#allocation2 + $0x16a] sm:$0xff]
        %v546 = vld [vmem:[#allocation2 + $0x172] sm:$0xff]
        %v547 = vld [vmem:[%s418] sm:$0xff]
        %v548 = vld [vmem:[%s418 + $0x8] sm:$0xff]
        %v549 = vld [vmem:[%s418 + $0x18] sm:$0xff]
        %v550 = vld [vmem:[%s418 + $0x20] sm:$0xff]
        %v551 = vld [vmem:[%s418 + $0x30] sm:$0xff]
        %v552 = vld [vmem:[%s418 + $0x38] sm:$0xff]
        %v553 = vld [vmem:[%s418 + $0x48] sm:$0xff]
        %v554 = vld [vmem:[%s418 + $0x50] sm:$0xff]
        %v555 = vld [vmem:[%s418 + $0x60] sm:$0xff]
        %v556 = vld [vmem:[%s418 + $0x68] sm:$0xff]
        %v557 = vld [vmem:[%s418 + $0x78] sm:$0xff]
        %v558 = vld [vmem:[%s418 + $0x80] sm:$0xff]
        %v559 = vld [vmem:[%s418 + $0x90] sm:$0xff]
        %v560 = vld [vmem:[%s418 + $0x98] sm:$0xff]
        %v561 = vld [vmem:[%s418 + $0xa8] sm:$0xff]
        %v562 = vld [vmem:[%s418 + $0xb0] sm:$0xff]
        %v563 = vld [vmem:[%s418 + $0xc0] sm:$0xff]
        %v564 = vld [vmem:[%s418 + $0xc8] sm:$0xff]
        %v565 = vld [vmem:[%s418 + $0xd8] sm:$0xff]
        %v566 = vld [vmem:[%s418 + $0xe0] sm:$0xff]
        %v567 = vld [vmem:[%s418 + $0xf0] sm:$0xff]
        %v568 = vld [vmem:[%s418 + $0xf8] sm:$0xff]
        %v569 = vld [vmem:[%s418 + $0x108] sm:$0xff]
        %v570 = vld [vmem:[%s418 + $0x110] sm:$0xff]
        %v571 = vld [vmem:[%s418 + $0x120] sm:$0xff]
        %v572 = vld [vmem:[%s418 + $0x128] sm:$0xff]
        %v573 = vld [vmem:[%s418 + $0x138] sm:$0xff]
        %v574 = vld [vmem:[%s418 + $0x140] sm:$0xff]
        %v575 = vld [vmem:[%s418 + $0x150] sm:$0xff]
        %v576 = vld [vmem:[%s418 + $0x158] sm:$0xff]
        %v577 = vld [vmem:[%s418 + $0x168] sm:$0xff]
        %v578 = vld [vmem:[%s418 + $0x170] sm:$0xff]
        %v579 = vld [vmem:[%s418 + $0x1] sm:$0xff]
        %v580 = vld [vmem:[%s418 + $0x9] sm:$0xff]
        %v581 = vld [vmem:[%s418 + $0x19] sm:$0xff]
        %v582 = vld [vmem:[%s418 + $0x21] sm:$0xff]
        %v583 = vld [vmem:[%s418 + $0x31] sm:$0xff]
        %v584 = vld [vmem:[%s418 + $0x39] sm:$0xff]
        %v585 = vld [vmem:[%s418 + $0x49] sm:$0xff]
        %v586 = vld [vmem:[%s418 + $0x51] sm:$0xff]
        %v587 = vld [vmem:[%s418 + $0x61] sm:$0xff]
        %v588 = vld [vmem:[%s418 + $0x69] sm:$0xff]
        %v589 = vld [vmem:[%s418 + $0x79] sm:$0xff]
        %v590 = vld [vmem:[%s418 + $0x81] sm:$0xff]
        %v591 = vld [vmem:[%s418 + $0x91] sm:$0xff]
        %v592 = vld [vmem:[%s418 + $0x99] sm:$0xff]
        %v593 = vld [vmem:[%s418 + $0xa9] sm:$0xff]
        %v594 = vld [vmem:[%s418 + $0xb1] sm:$0xff]
        %v595 = vld [vmem:[%s418 + $0xc1] sm:$0xff]
        %v596 = vld [vmem:[%s418 + $0xc9] sm:$0xff]
        %v597 = vld [vmem:[%s418 + $0xd9] sm:$0xff]
        %v598 = vld [vmem:[%s418 + $0xe1] sm:$0xff]
        %v599 = vld [vmem:[%s418 + $0xf1] sm:$0xff]
        %v600 = vld [vmem:[%s418 + $0xf9] sm:$0xff]
        %v601 = vld [vmem:[%s418 + $0x109] sm:$0xff]
        %v602 = vld [vmem:[%s418 + $0x111] sm:$0xff]
        %v603 = vld [vmem:[%s418 + $0x121] sm:$0xff]
        %v604 = vld [vmem:[%s418 + $0x129] sm:$0xff]
        %v605 = vld [vmem:[%s418 + $0x139] sm:$0xff]
        %v606 = vld [vmem:[%s418 + $0x141] sm:$0xff]
        %v607 = vld [vmem:[%s418 + $0x151] sm:$0xff]
        %v608 = vld [vmem:[%s418 + $0x159] sm:$0xff]
        %v609 = vld [vmem:[%s418 + $0x169] sm:$0xff]
        %v610 = vld [vmem:[%s418 + $0x171] sm:$0xff]
        %v611 = vld [vmem:[%s418 + $0x2] sm:$0xff]
        %v612 = vld [vmem:[%s418 + $0xa] sm:$0xff]
        %v613 = vld [vmem:[%s418 + $0x1a] sm:$0xff]
        %v614 = vld [vmem:[%s418 + $0x22] sm:$0xff]
        %v615 = vld [vmem:[%s418 + $0x32] sm:$0xff]
        %v616 = vld [vmem:[%s418 + $0x3a] sm:$0xff]
        %v617 = vld [vmem:[%s418 + $0x4a] sm:$0xff]
        %v618 = vld [vmem:[%s418 + $0x52] sm:$0xff]
        %v619 = vld [vmem:[%s418 + $0x62] sm:$0xff]
        %v620 = vld [vmem:[%s418 + $0x6a] sm:$0xff]
        %v621 = vld [vmem:[%s418 + $0x7a] sm:$0xff]
        %v622 = vld [vmem:[%s418 + $0x82] sm:$0xff]
        %v623 = vld [vmem:[%s418 + $0x92] sm:$0xff]
        %v624 = vld [vmem:[%s418 + $0x9a] sm:$0xff]
        %v625 = vld [vmem:[%s418 + $0xaa] sm:$0xff]
        %v626 = vld [vmem:[%s418 + $0xb2] sm:$0xff]
        %v627 = vld [vmem:[%s418 + $0xc2] sm:$0xff]
        %v628 = vld [vmem:[%s418 + $0xca] sm:$0xff]
        %v629 = vld [vmem:[%s418 + $0xda] sm:$0xff]
        %v630 = vld [vmem:[%s418 + $0xe2] sm:$0xff]
        %v631 = vld [vmem:[%s418 + $0xf2] sm:$0xff]
        %v632 = vld [vmem:[%s418 + $0xfa] sm:$0xff]
        %v633 = vld [vmem:[%s418 + $0x10a] sm:$0xff]
        %v634 = vld [vmem:[%s418 + $0x112] sm:$0xff]
        %v635 = vld [vmem:[%s418 + $0x122] sm:$0xff]
        %v636 = vld [vmem:[%s418 + $0x12a] sm:$0xff]
        %v637 = vld [vmem:[%s418 + $0x13a] sm:$0xff]
        %v638 = vld [vmem:[%s418 + $0x142] sm:$0xff]
        %v639 = vld [vmem:[%s418 + $0x152] sm:$0xff]
        %v640 = vld [vmem:[%s418 + $0x15a] sm:$0xff]
        %v641 = vld [vmem:[%s418 + $0x16a] sm:$0xff]
        %v642 = vld [vmem:[%s418 + $0x172] sm:$0xff]
        %s643 = scalar_lea.vmem [#allocation2], 48
        %v644 = vld [vmem:[%s643] sm:$0xff]
        %v645 = vld [vmem:[%s643 + $0x8] sm:$0xff]
        %v646 = vld [vmem:[%s643 + $0x18] sm:$0xff]
        %v647 = vld [vmem:[%s643 + $0x20] sm:$0xff]
        %v648 = vld [vmem:[%s643 + $0x30] sm:$0xff]
        %v649 = vld [vmem:[%s643 + $0x38] sm:$0xff]
        %v650 = vld [vmem:[%s643 + $0x48] sm:$0xff]
        %v651 = vld [vmem:[%s643 + $0x50] sm:$0xff]
        %v652 = vld [vmem:[%s643 + $0x60] sm:$0xff]
        %v653 = vld [vmem:[%s643 + $0x68] sm:$0xff]
        %v654 = vld [vmem:[%s643 + $0x78] sm:$0xff]
        %v655 = vld [vmem:[%s643 + $0x80] sm:$0xff]
        %v656 = vld [vmem:[%s643 + $0x90] sm:$0xff]
        %v657 = vld [vmem:[%s643 + $0x98] sm:$0xff]
        %v658 = vld [vmem:[%s643 + $0xa8] sm:$0xff]
        %v659 = vld [vmem:[%s643 + $0xb0] sm:$0xff]
        %v660 = vld [vmem:[%s643 + $0xc0] sm:$0xff]
        %v661 = vld [vmem:[%s643 + $0xc8] sm:$0xff]
        %v662 = vld [vmem:[%s643 + $0xd8] sm:$0xff]
        %v663 = vld [vmem:[%s643 + $0xe0] sm:$0xff]
        %v664 = vld [vmem:[%s643 + $0xf0] sm:$0xff]
        %v665 = vld [vmem:[%s643 + $0xf8] sm:$0xff]
        %v666 = vld [vmem:[%s643 + $0x108] sm:$0xff]
        %v667 = vld [vmem:[%s643 + $0x110] sm:$0xff]
        %v668 = vld [vmem:[%s643 + $0x120] sm:$0xff]
        %v669 = vld [vmem:[%s643 + $0x128] sm:$0xff]
        %v670 = vld [vmem:[%s643 + $0x138] sm:$0xff]
        %v671 = vld [vmem:[%s643 + $0x140] sm:$0xff]
        %v672 = vld [vmem:[%s643 + $0x150] sm:$0xff]
        %v673 = vld [vmem:[%s643 + $0x158] sm:$0xff]
        %v674 = vld [vmem:[%s643 + $0x168] sm:$0xff]
        %v675 = vld [vmem:[%s643 + $0x170] sm:$0xff]
        %v676 = vld [vmem:[%s643 + $0x1] sm:$0xff]
        %v677 = vld [vmem:[%s643 + $0x9] sm:$0xff]
        %v678 = vld [vmem:[%s643 + $0x19] sm:$0xff]
        %v679 = vld [vmem:[%s643 + $0x21] sm:$0xff]
        %v680 = vld [vmem:[%s643 + $0x31] sm:$0xff]
        %v681 = vld [vmem:[%s643 + $0x39] sm:$0xff]
        %v682 = vld [vmem:[%s643 + $0x49] sm:$0xff]
        %v683 = vld [vmem:[%s643 + $0x51] sm:$0xff]
        %v684 = vld [vmem:[%s643 + $0x61] sm:$0xff]
        %v685 = vld [vmem:[%s643 + $0x69] sm:$0xff]
        %v686 = vld [vmem:[%s643 + $0x79] sm:$0xff]
        %v687 = vld [vmem:[%s643 + $0x81] sm:$0xff]
        %v688 = vld [vmem:[%s643 + $0x91] sm:$0xff]
        %v689 = vld [vmem:[%s643 + $0x99] sm:$0xff]
        %v690 = vld [vmem:[%s643 + $0xa9] sm:$0xff]
        %v691 = vld [vmem:[%s643 + $0xb1] sm:$0xff]
        %v692 = vld [vmem:[%s643 + $0xc1] sm:$0xff]
        %v693 = vld [vmem:[%s643 + $0xc9] sm:$0xff]
        %v694 = vld [vmem:[%s643 + $0xd9] sm:$0xff]
        %v695 = vld [vmem:[%s643 + $0xe1] sm:$0xff]
        %v696 = vld [vmem:[%s643 + $0xf1] sm:$0xff]
        %v697 = vld [vmem:[%s643 + $0xf9] sm:$0xff]
        %v698 = vld [vmem:[%s643 + $0x109] sm:$0xff]
        %v699 = vld [vmem:[%s643 + $0x111] sm:$0xff]
        %v700 = vld [vmem:[%s643 + $0x121] sm:$0xff]
        %v701 = vld [vmem:[%s643 + $0x129] sm:$0xff]
        %v702 = vld [vmem:[%s643 + $0x139] sm:$0xff]
        %v703 = vld [vmem:[%s643 + $0x141] sm:$0xff]
        %v704 = vld [vmem:[%s643 + $0x151] sm:$0xff]
        %v705 = vld [vmem:[%s643 + $0x159] sm:$0xff]
        %v706 = vld [vmem:[%s643 + $0x169] sm:$0xff]
        %v707 = vld [vmem:[%s643 + $0x171] sm:$0xff]
        %v708 = vld [vmem:[%s643 + $0x2] sm:$0xff]
        %v709 = vld [vmem:[%s643 + $0xa] sm:$0xff]
        %v710 = vld [vmem:[%s643 + $0x1a] sm:$0xff]
        %v711 = vld [vmem:[%s643 + $0x22] sm:$0xff]
        %v712 = vld [vmem:[%s643 + $0x32] sm:$0xff]
        %v713 = vld [vmem:[%s643 + $0x3a] sm:$0xff]
        %v714 = vld [vmem:[%s643 + $0x4a] sm:$0xff]
        %v715 = vld [vmem:[%s643 + $0x52] sm:$0xff]
        %v716 = vld [vmem:[%s643 + $0x62] sm:$0xff]
        %v717 = vld [vmem:[%s643 + $0x6a] sm:$0xff]
        %v718 = vld [vmem:[%s643 + $0x7a] sm:$0xff]
        %v719 = vld [vmem:[%s643 + $0x82] sm:$0xff]
        %v720 = vld [vmem:[%s643 + $0x92] sm:$0xff]
        %v721 = vld [vmem:[%s643 + $0x9a] sm:$0xff]
        %v722 = vld [vmem:[%s643 + $0xaa] sm:$0xff]
        %v723 = vld [vmem:[%s643 + $0xb2] sm:$0xff]
        %v724 = vld [vmem:[%s643 + $0xc2] sm:$0xff]
        %v725 = vld [vmem:[%s643 + $0xca] sm:$0xff]
        %v726 = vld [vmem:[%s643 + $0xda] sm:$0xff]
        %v727 = vld [vmem:[%s643 + $0xe2] sm:$0xff]
        %v728 = vld [vmem:[%s643 + $0xf2] sm:$0xff]
        %v729 = vld [vmem:[%s643 + $0xfa] sm:$0xff]
        %v730 = vld [vmem:[%s643 + $0x10a] sm:$0xff]
        %v731 = vld [vmem:[%s643 + $0x112] sm:$0xff]
        %v732 = vld [vmem:[%s643 + $0x122] sm:$0xff]
        %v733 = vld [vmem:[%s643 + $0x12a] sm:$0xff]
        %v734 = vld [vmem:[%s643 + $0x13a] sm:$0xff]
        %v735 = vld [vmem:[%s643 + $0x142] sm:$0xff]
        %v736 = vld [vmem:[%s643 + $0x152] sm:$0xff]
        %v737 = vld [vmem:[%s643 + $0x15a] sm:$0xff]
        %v738 = vld [vmem:[%s643 + $0x16a] sm:$0xff]
        %v739 = vld [vmem:[%s643 + $0x172] sm:$0xff]
        %772 = vrot.lane.b32.xlu0 %v483, 4
        %v773 = vpop.permute.xlu0 %772
        %774 = vrot.lane.b32.xlu0 %v484, 4
        %v775 = vpop.permute.xlu0 %774
        %776 = vrot.lane.b32.xlu0 %v485, 4
        %v777 = vpop.permute.xlu0 %776
        %778 = vrot.lane.b32.xlu0 %v486, 4
        %v779 = vpop.permute.xlu0 %778
        %780 = vrot.lane.b32.xlu0 %v487, 4
        %v781 = vpop.permute.xlu0 %780
        %782 = vrot.lane.b32.xlu0 %v488, 4
        %v783 = vpop.permute.xlu0 %782
        %784 = vrot.lane.b32.xlu0 %v489, 4
        %v785 = vpop.permute.xlu0 %784
        %786 = vrot.lane.b32.xlu0 %v490, 4
        %v787 = vpop.permute.xlu0 %786
        %788 = vrot.lane.b32.xlu0 %v491, 4
        %v789 = vpop.permute.xlu0 %788
        %790 = vrot.lane.b32.xlu0 %v492, 4
        %v791 = vpop.permute.xlu0 %790
        %792 = vrot.lane.b32.xlu0 %v493, 4
        %v793 = vpop.permute.xlu0 %792
        %794 = vrot.lane.b32.xlu0 %v494, 4
        %v795 = vpop.permute.xlu0 %794
        %796 = vrot.lane.b32.xlu0 %v495, 4
        %v797 = vpop.permute.xlu0 %796
        %798 = vrot.lane.b32.xlu0 %v496, 4
        %v799 = vpop.permute.xlu0 %798
        %800 = vrot.lane.b32.xlu0 %v497, 4
        %v801 = vpop.permute.xlu0 %800
        %802 = vrot.lane.b32.xlu0 %v498, 4
        %v803 = vpop.permute.xlu0 %802
        %804 = vrot.lane.b32.xlu0 %v499, 4
        %v805 = vpop.permute.xlu0 %804
        %806 = vrot.lane.b32.xlu0 %v500, 4
        %v807 = vpop.permute.xlu0 %806
        %808 = vrot.lane.b32.xlu0 %v501, 4
        %v809 = vpop.permute.xlu0 %808
        %810 = vrot.lane.b32.xlu0 %v502, 4
        %v811 = vpop.permute.xlu0 %810
        %812 = vrot.lane.b32.xlu0 %v503, 4
        %v813 = vpop.permute.xlu0 %812
        %814 = vrot.lane.b32.xlu0 %v504, 4
        %v815 = vpop.permute.xlu0 %814
        %816 = vrot.lane.b32.xlu0 %v505, 4
        %v817 = vpop.permute.xlu0 %816
        %818 = vrot.lane.b32.xlu0 %v506, 4
        %v819 = vpop.permute.xlu0 %818
        %820 = vrot.lane.b32.xlu0 %v507, 4
        %v821 = vpop.permute.xlu0 %820
        %822 = vrot.lane.b32.xlu0 %v508, 4
        %v823 = vpop.permute.xlu0 %822
        %824 = vrot.lane.b32.xlu0 %v509, 4
        %v825 = vpop.permute.xlu0 %824
        %826 = vrot.lane.b32.xlu0 %v510, 4
        %v827 = vpop.permute.xlu0 %826
        %828 = vrot.lane.b32.xlu0 %v511, 4
        %v829 = vpop.permute.xlu0 %828
        %830 = vrot.lane.b32.xlu0 %v512, 4
        %v831 = vpop.permute.xlu0 %830
        %832 = vrot.lane.b32.xlu0 %v513, 4
        %v833 = vpop.permute.xlu0 %832
        %834 = vrot.lane.b32.xlu0 %v514, 4
        %v835 = vpop.permute.xlu0 %834
        %900 = vrot.lane.b32.xlu0 %v515, 8
        %v901 = vpop.permute.xlu0 %900
        %902 = vrot.lane.b32.xlu0 %v516, 8
        %v903 = vpop.permute.xlu0 %902
        %904 = vrot.lane.b32.xlu0 %v517, 8
        %v905 = vpop.permute.xlu0 %904
        %906 = vrot.lane.b32.xlu0 %v518, 8
        %v907 = vpop.permute.xlu0 %906
        %908 = vrot.lane.b32.xlu0 %v519, 8
        %v909 = vpop.permute.xlu0 %908
        %910 = vrot.lane.b32.xlu0 %v520, 8
        %v911 = vpop.permute.xlu0 %910
        %912 = vrot.lane.b32.xlu0 %v521, 8
        %v913 = vpop.permute.xlu0 %912
        %914 = vrot.lane.b32.xlu0 %v522, 8
        %v915 = vpop.permute.xlu0 %914
        %916 = vrot.lane.b32.xlu0 %v523, 8
        %v917 = vpop.permute.xlu0 %916
        %918 = vrot.lane.b32.xlu0 %v524, 8
        %v919 = vpop.permute.xlu0 %918
        %920 = vrot.lane.b32.xlu0 %v525, 8
        %v921 = vpop.permute.xlu0 %920
        %922 = vrot.lane.b32.xlu0 %v526, 8
        %v923 = vpop.permute.xlu0 %922
        %924 = vrot.lane.b32.xlu0 %v527, 8
        %v925 = vpop.permute.xlu0 %924
        %926 = vrot.lane.b32.xlu0 %v528, 8
        %v927 = vpop.permute.xlu0 %926
        %928 = vrot.lane.b32.xlu0 %v529, 8
        %v929 = vpop.permute.xlu0 %928
        %930 = vrot.lane.b32.xlu0 %v530, 8
        %v931 = vpop.permute.xlu0 %930
        %932 = vrot.lane.b32.xlu0 %v531, 8
        %v933 = vpop.permute.xlu0 %932
        %934 = vrot.lane.b32.xlu0 %v532, 8
        %v935 = vpop.permute.xlu0 %934
        %936 = vrot.lane.b32.xlu0 %v533, 8
        %v937 = vpop.permute.xlu0 %936
        %938 = vrot.lane.b32.xlu0 %v534, 8
        %v939 = vpop.permute.xlu0 %938
        %940 = vrot.lane.b32.xlu0 %v535, 8
        %v941 = vpop.permute.xlu0 %940
        %942 = vrot.lane.b32.xlu0 %v536, 8
        %v943 = vpop.permute.xlu0 %942
        %944 = vrot.lane.b32.xlu0 %v537, 8
        %v945 = vpop.permute.xlu0 %944
        %946 = vrot.lane.b32.xlu0 %v538, 8
        %v947 = vpop.permute.xlu0 %946
        %948 = vrot.lane.b32.xlu0 %v539, 8
        %v949 = vpop.permute.xlu0 %948
        %950 = vrot.lane.b32.xlu0 %v540, 8
        %v951 = vpop.permute.xlu0 %950
        %952 = vrot.lane.b32.xlu0 %v541, 8
        %v953 = vpop.permute.xlu0 %952
        %954 = vrot.lane.b32.xlu0 %v542, 8
        %v955 = vpop.permute.xlu0 %954
        %956 = vrot.lane.b32.xlu0 %v543, 8
        %v957 = vpop.permute.xlu0 %956
        %958 = vrot.lane.b32.xlu0 %v544, 8
        %v959 = vpop.permute.xlu0 %958
        %960 = vrot.lane.b32.xlu0 %v545, 8
        %v961 = vpop.permute.xlu0 %960
        %962 = vrot.lane.b32.xlu0 %v546, 8
        %v963 = vpop.permute.xlu0 %962
        %1028 = vrot.lane.b32.xlu0 %v547, 12
        %v1029 = vpop.permute.xlu0 %1028
        %1030 = vrot.lane.b32.xlu0 %v548, 12
        %v1031 = vpop.permute.xlu0 %1030
        %1032 = vrot.lane.b32.xlu0 %v549, 12
        %v1033 = vpop.permute.xlu0 %1032
        %1034 = vrot.lane.b32.xlu0 %v550, 12
        %v1035 = vpop.permute.xlu0 %1034
        %1036 = vrot.lane.b32.xlu0 %v551, 12
        %v1037 = vpop.permute.xlu0 %1036
        %1038 = vrot.lane.b32.xlu0 %v552, 12
        %v1039 = vpop.permute.xlu0 %1038
        %1040 = vrot.lane.b32.xlu0 %v553, 12
        %v1041 = vpop.permute.xlu0 %1040
        %1042 = vrot.lane.b32.xlu0 %v554, 12
        %v1043 = vpop.permute.xlu0 %1042
        %1044 = vrot.lane.b32.xlu0 %v555, 12
        %v1045 = vpop.permute.xlu0 %1044
        %1046 = vrot.lane.b32.xlu0 %v556, 12
        %v1047 = vpop.permute.xlu0 %1046
        %1048 = vrot.lane.b32.xlu0 %v557, 12
        %v1049 = vpop.permute.xlu0 %1048
        %1050 = vrot.lane.b32.xlu0 %v558, 12
        %v1051 = vpop.permute.xlu0 %1050
        %1052 = vrot.lane.b32.xlu0 %v559, 12
        %v1053 = vpop.permute.xlu0 %1052
        %1054 = vrot.lane.b32.xlu0 %v560, 12
        %v1055 = vpop.permute.xlu0 %1054
        %1056 = vrot.lane.b32.xlu0 %v561, 12
        %v1057 = vpop.permute.xlu0 %1056
        %1058 = vrot.lane.b32.xlu0 %v562, 12
        %v1059 = vpop.permute.xlu0 %1058
        %1060 = vrot.lane.b32.xlu0 %v563, 12
        %v1061 = vpop.permute.xlu0 %1060
        %1062 = vrot.lane.b32.xlu0 %v564, 12
        %v1063 = vpop.permute.xlu0 %1062
        %1064 = vrot.lane.b32.xlu0 %v565, 12
        %v1065 = vpop.permute.xlu0 %1064
        %1066 = vrot.lane.b32.xlu0 %v566, 12
        %v1067 = vpop.permute.xlu0 %1066
        %1068 = vrot.lane.b32.xlu0 %v567, 12
        %v1069 = vpop.permute.xlu0 %1068
        %1070 = vrot.lane.b32.xlu0 %v568, 12
        %v1071 = vpop.permute.xlu0 %1070
        %1072 = vrot.lane.b32.xlu0 %v569, 12
        %v1073 = vpop.permute.xlu0 %1072
        %1074 = vrot.lane.b32.xlu0 %v570, 12
        %v1075 = vpop.permute.xlu0 %1074
        %1076 = vrot.lane.b32.xlu0 %v571, 12
        %v1077 = vpop.permute.xlu0 %1076
        %1078 = vrot.lane.b32.xlu0 %v572, 12
        %v1079 = vpop.permute.xlu0 %1078
        %1080 = vrot.lane.b32.xlu0 %v573, 12
        %v1081 = vpop.permute.xlu0 %1080
        %1082 = vrot.lane.b32.xlu0 %v574, 12
        %v1083 = vpop.permute.xlu0 %1082
        %1084 = vrot.lane.b32.xlu0 %v575, 12
        %v1085 = vpop.permute.xlu0 %1084
        %1086 = vrot.lane.b32.xlu0 %v576, 12
        %v1087 = vpop.permute.xlu0 %1086
        %1088 = vrot.lane.b32.xlu0 %v577, 12
        %v1089 = vpop.permute.xlu0 %1088
        %1090 = vrot.lane.b32.xlu0 %v578, 12
        %v1091 = vpop.permute.xlu0 %1090
        %1156 = vrot.lane.b32.xlu0 %v579, 16
        %v1157 = vpop.permute.xlu0 %1156
        %1158 = vrot.lane.b32.xlu0 %v580, 16
        %v1159 = vpop.permute.xlu0 %1158
        %1160 = vrot.lane.b32.xlu0 %v581, 16
        %v1161 = vpop.permute.xlu0 %1160
        %1162 = vrot.lane.b32.xlu0 %v582, 16
        %v1163 = vpop.permute.xlu0 %1162
        %1164 = vrot.lane.b32.xlu0 %v583, 16
        %v1165 = vpop.permute.xlu0 %1164
        %1166 = vrot.lane.b32.xlu0 %v584, 16
        %v1167 = vpop.permute.xlu0 %1166
        %1168 = vrot.lane.b32.xlu0 %v585, 16
        %v1169 = vpop.permute.xlu0 %1168
        %1170 = vrot.lane.b32.xlu0 %v586, 16
        %v1171 = vpop.permute.xlu0 %1170
        %1172 = vrot.lane.b32.xlu0 %v587, 16
        %v1173 = vpop.permute.xlu0 %1172
        %1174 = vrot.lane.b32.xlu0 %v588, 16
        %v1175 = vpop.permute.xlu0 %1174
        %1176 = vrot.lane.b32.xlu0 %v589, 16
        %v1177 = vpop.permute.xlu0 %1176
        %1178 = vrot.lane.b32.xlu0 %v590, 16
        %v1179 = vpop.permute.xlu0 %1178
        %1180 = vrot.lane.b32.xlu0 %v591, 16
        %v1181 = vpop.permute.xlu0 %1180
        %1182 = vrot.lane.b32.xlu0 %v592, 16
        %v1183 = vpop.permute.xlu0 %1182
        %1184 = vrot.lane.b32.xlu0 %v593, 16
        %v1185 = vpop.permute.xlu0 %1184
        %1186 = vrot.lane.b32.xlu0 %v594, 16
        %v1187 = vpop.permute.xlu0 %1186
        %1188 = vrot.lane.b32.xlu0 %v595, 16
        %v1189 = vpop.permute.xlu0 %1188
        %1190 = vrot.lane.b32.xlu0 %v596, 16
        %v1191 = vpop.permute.xlu0 %1190
        %1192 = vrot.lane.b32.xlu0 %v597, 16
        %v1193 = vpop.permute.xlu0 %1192
        %1194 = vrot.lane.b32.xlu0 %v598, 16
        %v1195 = vpop.permute.xlu0 %1194
        %1196 = vrot.lane.b32.xlu0 %v599, 16
        %v1197 = vpop.permute.xlu0 %1196
        %1198 = vrot.lane.b32.xlu0 %v600, 16
        %v1199 = vpop.permute.xlu0 %1198
        %1200 = vrot.lane.b32.xlu0 %v601, 16
        %v1201 = vpop.permute.xlu0 %1200
        %1202 = vrot.lane.b32.xlu0 %v602, 16
        %v1203 = vpop.permute.xlu0 %1202
        %1204 = vrot.lane.b32.xlu0 %v603, 16
        %v1205 = vpop.permute.xlu0 %1204
        %1206 = vrot.lane.b32.xlu0 %v604, 16
        %v1207 = vpop.permute.xlu0 %1206
        %1208 = vrot.lane.b32.xlu0 %v605, 16
        %v1209 = vpop.permute.xlu0 %1208
        %1210 = vrot.lane.b32.xlu0 %v606, 16
        %v1211 = vpop.permute.xlu0 %1210
        %1212 = vrot.lane.b32.xlu0 %v607, 16
        %v1213 = vpop.permute.xlu0 %1212
        %1214 = vrot.lane.b32.xlu0 %v608, 16
        %v1215 = vpop.permute.xlu0 %1214
        %1216 = vrot.lane.b32.xlu0 %v609, 16
        %v1217 = vpop.permute.xlu0 %1216
        %1218 = vrot.lane.b32.xlu0 %v610, 16
        %v1219 = vpop.permute.xlu0 %1218
        %1284 = vrot.lane.b32.xlu0 %v611, 20
        %v1285 = vpop.permute.xlu0 %1284
        %1286 = vrot.lane.b32.xlu0 %v612, 20
        %v1287 = vpop.permute.xlu0 %1286
        %1288 = vrot.lane.b32.xlu0 %v613, 20
        %v1289 = vpop.permute.xlu0 %1288
        %1290 = vrot.lane.b32.xlu0 %v614, 20
        %v1291 = vpop.permute.xlu0 %1290
        %1292 = vrot.lane.b32.xlu0 %v615, 20
        %v1293 = vpop.permute.xlu0 %1292
        %1294 = vrot.lane.b32.xlu0 %v616, 20
        %v1295 = vpop.permute.xlu0 %1294
        %1296 = vrot.lane.b32.xlu0 %v617, 20
        %v1297 = vpop.permute.xlu0 %1296
        %1298 = vrot.lane.b32.xlu0 %v618, 20
        %v1299 = vpop.permute.xlu0 %1298
        %1300 = vrot.lane.b32.xlu0 %v619, 20
        %v1301 = vpop.permute.xlu0 %1300
        %1302 = vrot.lane.b32.xlu0 %v620, 20
        %v1303 = vpop.permute.xlu0 %1302
        %1304 = vrot.lane.b32.xlu0 %v621, 20
        %v1305 = vpop.permute.xlu0 %1304
        %1306 = vrot.lane.b32.xlu0 %v622, 20
        %v1307 = vpop.permute.xlu0 %1306
        %1308 = vrot.lane.b32.xlu0 %v623, 20
        %v1309 = vpop.permute.xlu0 %1308
        %1310 = vrot.lane.b32.xlu0 %v624, 20
        %v1311 = vpop.permute.xlu0 %1310
        %1312 = vrot.lane.b32.xlu0 %v625, 20
        %v1313 = vpop.permute.xlu0 %1312
        %1314 = vrot.lane.b32.xlu0 %v626, 20
        %v1315 = vpop.permute.xlu0 %1314
        %1316 = vrot.lane.b32.xlu0 %v627, 20
        %v1317 = vpop.permute.xlu0 %1316
        %1318 = vrot.lane.b32.xlu0 %v628, 20
        %v1319 = vpop.permute.xlu0 %1318
        %1320 = vrot.lane.b32.xlu0 %v629, 20
        %v1321 = vpop.permute.xlu0 %1320
        %1322 = vrot.lane.b32.xlu0 %v630, 20
        %v1323 = vpop.permute.xlu0 %1322
        %1324 = vrot.lane.b32.xlu0 %v631, 20
        %v1325 = vpop.permute.xlu0 %1324
        %1326 = vrot.lane.b32.xlu0 %v632, 20
        %v1327 = vpop.permute.xlu0 %1326
        %1328 = vrot.lane.b32.xlu0 %v633, 20
        %v1329 = vpop.permute.xlu0 %1328
        %1330 = vrot.lane.b32.xlu0 %v634, 20
        %v1331 = vpop.permute.xlu0 %1330
        %1332 = vrot.lane.b32.xlu0 %v635, 20
        %v1333 = vpop.permute.xlu0 %1332
        %1334 = vrot.lane.b32.xlu0 %v636, 20
        %v1335 = vpop.permute.xlu0 %1334
        %1336 = vrot.lane.b32.xlu0 %v637, 20
        %v1337 = vpop.permute.xlu0 %1336
        %1338 = vrot.lane.b32.xlu0 %v638, 20
        %v1339 = vpop.permute.xlu0 %1338
        %1340 = vrot.lane.b32.xlu0 %v639, 20
        %v1341 = vpop.permute.xlu0 %1340
        %1342 = vrot.lane.b32.xlu0 %v640, 20
        %v1343 = vpop.permute.xlu0 %1342
        %1344 = vrot.lane.b32.xlu0 %v641, 20
        %v1345 = vpop.permute.xlu0 %1344
        %1346 = vrot.lane.b32.xlu0 %v642, 20
        %v1347 = vpop.permute.xlu0 %1346
        %1412 = vrot.lane.b32.xlu0 %v644, 24
        %v1413 = vpop.permute.xlu0 %1412
        %1414 = vrot.lane.b32.xlu0 %v645, 24
        %v1415 = vpop.permute.xlu0 %1414
        %1416 = vrot.lane.b32.xlu0 %v646, 24
        %v1417 = vpop.permute.xlu0 %1416
        %1418 = vrot.lane.b32.xlu0 %v647, 24
        %v1419 = vpop.permute.xlu0 %1418
        %1420 = vrot.lane.b32.xlu0 %v648, 24
        %v1421 = vpop.permute.xlu0 %1420
        %1422 = vrot.lane.b32.xlu0 %v649, 24
        %v1423 = vpop.permute.xlu0 %1422
        %1424 = vrot.lane.b32.xlu0 %v650, 24
        %v1425 = vpop.permute.xlu0 %1424
        %1426 = vrot.lane.b32.xlu0 %v651, 24
        %v1427 = vpop.permute.xlu0 %1426
        %1428 = vrot.lane.b32.xlu0 %v652, 24
        %v1429 = vpop.permute.xlu0 %1428
        %1430 = vrot.lane.b32.xlu0 %v653, 24
        %v1431 = vpop.permute.xlu0 %1430
        %1432 = vrot.lane.b32.xlu0 %v654, 24
        %v1433 = vpop.permute.xlu0 %1432
        %1434 = vrot.lane.b32.xlu0 %v655, 24
        %v1435 = vpop.permute.xlu0 %1434
        %1436 = vrot.lane.b32.xlu0 %v656, 24
        %v1437 = vpop.permute.xlu0 %1436
        %1438 = vrot.lane.b32.xlu0 %v657, 24
        %v1439 = vpop.permute.xlu0 %1438
        %1440 = vrot.lane.b32.xlu0 %v658, 24
        %v1441 = vpop.permute.xlu0 %1440
        %1442 = vrot.lane.b32.xlu0 %v659, 24
        %v1443 = vpop.permute.xlu0 %1442
        %1444 = vrot.lane.b32.xlu0 %v660, 24
        %v1445 = vpop.permute.xlu0 %1444
        %1446 = vrot.lane.b32.xlu0 %v661, 24
        %v1447 = vpop.permute.xlu0 %1446
        %1448 = vrot.lane.b32.xlu0 %v662, 24
        %v1449 = vpop.permute.xlu0 %1448
        %1450 = vrot.lane.b32.xlu0 %v663, 24
        %v1451 = vpop.permute.xlu0 %1450
        %1452 = vrot.lane.b32.xlu0 %v664, 24
        %v1453 = vpop.permute.xlu0 %1452
        %1454 = vrot.lane.b32.xlu0 %v665, 24
        %v1455 = vpop.permute.xlu0 %1454
        %1456 = vrot.lane.b32.xlu0 %v666, 24
        %v1457 = vpop.permute.xlu0 %1456
        %1458 = vrot.lane.b32.xlu0 %v667, 24
        %v1459 = vpop.permute.xlu0 %1458
        %1460 = vrot.lane.b32.xlu0 %v668, 24
        %v1461 = vpop.permute.xlu0 %1460
        %1462 = vrot.lane.b32.xlu0 %v669, 24
        %v1463 = vpop.permute.xlu0 %1462
        %1464 = vrot.lane.b32.xlu0 %v670, 24
        %v1465 = vpop.permute.xlu0 %1464
        %1466 = vrot.lane.b32.xlu0 %v671, 24
        %v1467 = vpop.permute.xlu0 %1466
        %1468 = vrot.lane.b32.xlu0 %v672, 24
        %v1469 = vpop.permute.xlu0 %1468
        %1470 = vrot.lane.b32.xlu0 %v673, 24
        %v1471 = vpop.permute.xlu0 %1470
        %1472 = vrot.lane.b32.xlu0 %v674, 24
        %v1473 = vpop.permute.xlu0 %1472
        %1474 = vrot.lane.b32.xlu0 %v675, 24
        %v1475 = vpop.permute.xlu0 %1474
        %1540 = vrot.lane.b32.xlu0 %v676, 28
        %v1541 = vpop.permute.xlu0 %1540
        %1542 = vrot.lane.b32.xlu0 %v677, 28
        %v1543 = vpop.permute.xlu0 %1542
        %1544 = vrot.lane.b32.xlu0 %v678, 28
        %v1545 = vpop.permute.xlu0 %1544
        %1546 = vrot.lane.b32.xlu0 %v679, 28
        %v1547 = vpop.permute.xlu0 %1546
        %1548 = vrot.lane.b32.xlu0 %v680, 28
        %v1549 = vpop.permute.xlu0 %1548
        %1550 = vrot.lane.b32.xlu0 %v681, 28
        %v1551 = vpop.permute.xlu0 %1550
        %1552 = vrot.lane.b32.xlu0 %v682, 28
        %v1553 = vpop.permute.xlu0 %1552
        %1554 = vrot.lane.b32.xlu0 %v683, 28
        %v1555 = vpop.permute.xlu0 %1554
        %1556 = vrot.lane.b32.xlu0 %v684, 28
        %v1557 = vpop.permute.xlu0 %1556
        %1558 = vrot.lane.b32.xlu0 %v685, 28
        %v1559 = vpop.permute.xlu0 %1558
        %1560 = vrot.lane.b32.xlu0 %v686, 28
        %v1561 = vpop.permute.xlu0 %1560
        %1562 = vrot.lane.b32.xlu0 %v687, 28
        %v1563 = vpop.permute.xlu0 %1562
        %1564 = vrot.lane.b32.xlu0 %v688, 28
        %v1565 = vpop.permute.xlu0 %1564
        %1566 = vrot.lane.b32.xlu0 %v689, 28
        %v1567 = vpop.permute.xlu0 %1566
        %1568 = vrot.lane.b32.xlu0 %v690, 28
        %v1569 = vpop.permute.xlu0 %1568
        %1570 = vrot.lane.b32.xlu0 %v691, 28
        %v1571 = vpop.permute.xlu0 %1570
        %1572 = vrot.lane.b32.xlu0 %v692, 28
        %v1573 = vpop.permute.xlu0 %1572
        %1574 = vrot.lane.b32.xlu0 %v693, 28
        %v1575 = vpop.permute.xlu0 %1574
        %1576 = vrot.lane.b32.xlu0 %v694, 28
        %v1577 = vpop.permute.xlu0 %1576
        %1578 = vrot.lane.b32.xlu0 %v695, 28
        %v1579 = vpop.permute.xlu0 %1578
        %1580 = vrot.lane.b32.xlu0 %v696, 28
        %v1581 = vpop.permute.xlu0 %1580
        %1582 = vrot.lane.b32.xlu0 %v697, 28
        %v1583 = vpop.permute.xlu0 %1582
        %1584 = vrot.lane.b32.xlu0 %v698, 28
        %v1585 = vpop.permute.xlu0 %1584
        %1586 = vrot.lane.b32.xlu0 %v699, 28
        %v1587 = vpop.permute.xlu0 %1586
        %1588 = vrot.lane.b32.xlu0 %v700, 28
        %v1589 = vpop.permute.xlu0 %1588
        %1590 = vrot.lane.b32.xlu0 %v701, 28
        %v1591 = vpop.permute.xlu0 %1590
        %1592 = vrot.lane.b32.xlu0 %v702, 28
        %v1593 = vpop.permute.xlu0 %1592
        %1594 = vrot.lane.b32.xlu0 %v703, 28
        %v1595 = vpop.permute.xlu0 %1594
        %1596 = vrot.lane.b32.xlu0 %v704, 28
        %v1597 = vpop.permute.xlu0 %1596
        %1598 = vrot.lane.b32.xlu0 %v705, 28
        %v1599 = vpop.permute.xlu0 %1598
        %1600 = vrot.lane.b32.xlu0 %v706, 28
        %v1601 = vpop.permute.xlu0 %1600
        %1602 = vrot.lane.b32.xlu0 %v707, 28
        %v1603 = vpop.permute.xlu0 %1602
        %1668 = vrot.lane.b32.xlu0 %v708, 32
        %v1669 = vpop.permute.xlu0 %1668
        %1670 = vrot.lane.b32.xlu0 %v709, 32
        %v1671 = vpop.permute.xlu0 %1670
        %1672 = vrot.lane.b32.xlu0 %v710, 32
        %v1673 = vpop.permute.xlu0 %1672
        %1674 = vrot.lane.b32.xlu0 %v711, 32
        %v1675 = vpop.permute.xlu0 %1674
        %1676 = vrot.lane.b32.xlu0 %v712, 32
        %v1677 = vpop.permute.xlu0 %1676
        %1678 = vrot.lane.b32.xlu0 %v713, 32
        %v1679 = vpop.permute.xlu0 %1678
        %1680 = vrot.lane.b32.xlu0 %v714, 32
        %v1681 = vpop.permute.xlu0 %1680
        %1682 = vrot.lane.b32.xlu0 %v715, 32
        %v1683 = vpop.permute.xlu0 %1682
        %1684 = vrot.lane.b32.xlu0 %v716, 32
        %v1685 = vpop.permute.xlu0 %1684
        %1686 = vrot.lane.b32.xlu0 %v717, 32
        %v1687 = vpop.permute.xlu0 %1686
        %1688 = vrot.lane.b32.xlu0 %v718, 32
        %v1689 = vpop.permute.xlu0 %1688
        %1690 = vrot.lane.b32.xlu0 %v719, 32
        %v1691 = vpop.permute.xlu0 %1690
        %1692 = vrot.lane.b32.xlu0 %v720, 32
        %v1693 = vpop.permute.xlu0 %1692
        %1694 = vrot.lane.b32.xlu0 %v721, 32
        %v1695 = vpop.permute.xlu0 %1694
        %1696 = vrot.lane.b32.xlu0 %v722, 32
        %v1697 = vpop.permute.xlu0 %1696
        %1698 = vrot.lane.b32.xlu0 %v723, 32
        %v1699 = vpop.permute.xlu0 %1698
        %1700 = vrot.lane.b32.xlu0 %v724, 32
        %v1701 = vpop.permute.xlu0 %1700
        %1702 = vrot.lane.b32.xlu0 %v725, 32
        %v1703 = vpop.permute.xlu0 %1702
        %1704 = vrot.lane.b32.xlu0 %v726, 32
        %v1705 = vpop.permute.xlu0 %1704
        %1706 = vrot.lane.b32.xlu0 %v727, 32
        %v1707 = vpop.permute.xlu0 %1706
        %1708 = vrot.lane.b32.xlu0 %v728, 32
        %v1709 = vpop.permute.xlu0 %1708
        %1710 = vrot.lane.b32.xlu0 %v729, 32
        %v1711 = vpop.permute.xlu0 %1710
        %1712 = vrot.lane.b32.xlu0 %v730, 32
        %v1713 = vpop.permute.xlu0 %1712
        %1714 = vrot.lane.b32.xlu0 %v731, 32
        %v1715 = vpop.permute.xlu0 %1714
        %1716 = vrot.lane.b32.xlu0 %v732, 32
        %v1717 = vpop.permute.xlu0 %1716
        %1718 = vrot.lane.b32.xlu0 %v733, 32
        %v1719 = vpop.permute.xlu0 %1718
        %1720 = vrot.lane.b32.xlu0 %v734, 32
        %v1721 = vpop.permute.xlu0 %1720
        %1722 = vrot.lane.b32.xlu0 %v735, 32
        %v1723 = vpop.permute.xlu0 %1722
        %1724 = vrot.lane.b32.xlu0 %v736, 32
        %v1725 = vpop.permute.xlu0 %1724
        %1726 = vrot.lane.b32.xlu0 %v737, 32
        %v1727 = vpop.permute.xlu0 %1726
        %1728 = vrot.lane.b32.xlu0 %v738, 32
        %v1729 = vpop.permute.xlu0 %1728
        %1730 = vrot.lane.b32.xlu0 %v739, 32
        %v1731 = vpop.permute.xlu0 %1730
        %v1764 = vsel %vm362, %v451, %v773
        %v1765 = vsel %vm362, %v452, %v775
        %v1766 = vsel %vm362, %v453, %v777
        %v1767 = vsel %vm362, %v454, %v779
        %v1768 = vsel %vm362, %v455, %v781
        %v1769 = vsel %vm362, %v456, %v783
        %v1770 = vsel %vm362, %v457, %v785
        %v1771 = vsel %vm362, %v458, %v787
        %v1772 = vsel %vm362, %v459, %v789
        %v1773 = vsel %vm362, %v460, %v791
        %v1774 = vsel %vm362, %v461, %v793
        %v1775 = vsel %vm362, %v462, %v795
        %v1776 = vsel %vm362, %v463, %v797
        %v1777 = vsel %vm362, %v464, %v799
        %v1778 = vsel %vm362, %v465, %v801
        %v1779 = vsel %vm362, %v466, %v803
        %v1780 = vsel %vm362, %v467, %v805
        %v1781 = vsel %vm362, %v468, %v807
        %v1782 = vsel %vm362, %v469, %v809
        %v1783 = vsel %vm362, %v470, %v811
        %v1784 = vsel %vm362, %v471, %v813
        %v1785 = vsel %vm362, %v472, %v815
        %v1786 = vsel %vm362, %v473, %v817
        %v1787 = vsel %vm362, %v474, %v819
        %v1788 = vsel %vm362, %v475, %v821
        %v1789 = vsel %vm362, %v476, %v823
        %v1790 = vsel %vm362, %v477, %v825
        %v1791 = vsel %vm362, %v478, %v827
        %v1792 = vsel %vm362, %v479, %v829
        %v1793 = vsel %vm362, %v480, %v831
        %v1794 = vsel %vm362, %v481, %v833
        %v1795 = vsel %vm362, %v482, %v835
        %vm1796 = vcmask 64512
        %v1797 = vsel %vm1796, %v1764, %v901
        %v1798 = vsel %vm1796, %v1765, %v903
        %v1799 = vsel %vm1796, %v1766, %v905
        %v1800 = vsel %vm1796, %v1767, %v907
        %v1801 = vsel %vm1796, %v1768, %v909
        %v1802 = vsel %vm1796, %v1769, %v911
        %v1803 = vsel %vm1796, %v1770, %v913
        %v1804 = vsel %vm1796, %v1771, %v915
        %v1805 = vsel %vm1796, %v1772, %v917
        %v1806 = vsel %vm1796, %v1773, %v919
        %v1807 = vsel %vm1796, %v1774, %v921
        %v1808 = vsel %vm1796, %v1775, %v923
        %v1809 = vsel %vm1796, %v1776, %v925
        %v1810 = vsel %vm1796, %v1777, %v927
        %v1811 = vsel %vm1796, %v1778, %v929
        %v1812 = vsel %vm1796, %v1779, %v931
        %v1813 = vsel %vm1796, %v1780, %v933
        %v1814 = vsel %vm1796, %v1781, %v935
        %v1815 = vsel %vm1796, %v1782, %v937
        %v1816 = vsel %vm1796, %v1783, %v939
        %v1817 = vsel %vm1796, %v1784, %v941
        %v1818 = vsel %vm1796, %v1785, %v943
        %v1819 = vsel %vm1796, %v1786, %v945
        %v1820 = vsel %vm1796, %v1787, %v947
        %v1821 = vsel %vm1796, %v1788, %v949
        %v1822 = vsel %vm1796, %v1789, %v951
        %v1823 = vsel %vm1796, %v1790, %v953
        %v1824 = vsel %vm1796, %v1791, %v955
        %v1825 = vsel %vm1796, %v1792, %v957
        %v1826 = vsel %vm1796, %v1793, %v959
        %v1827 = vsel %vm1796, %v1794, %v961
        %v1828 = vsel %vm1796, %v1795, %v963
        %vm1829 = vcmask 97280
        %v1830 = vsel %vm1829, %v1797, %v1029
        %v1831 = vsel %vm1829, %v1798, %v1031
        %v1832 = vsel %vm1829, %v1799, %v1033
        %v1833 = vsel %vm1829, %v1800, %v1035
        %v1834 = vsel %vm1829, %v1801, %v1037
        %v1835 = vsel %vm1829, %v1802, %v1039
        %v1836 = vsel %vm1829, %v1803, %v1041
        %v1837 = vsel %vm1829, %v1804, %v1043
        %v1838 = vsel %vm1829, %v1805, %v1045
        %v1839 = vsel %vm1829, %v1806, %v1047
        %v1840 = vsel %vm1829, %v1807, %v1049
        %v1841 = vsel %vm1829, %v1808, %v1051
        %v1842 = vsel %vm1829, %v1809, %v1053
        %v1843 = vsel %vm1829, %v1810, %v1055
        %v1844 = vsel %vm1829, %v1811, %v1057
        %v1845 = vsel %vm1829, %v1812, %v1059
        %v1846 = vsel %vm1829, %v1813, %v1061
        %v1847 = vsel %vm1829, %v1814, %v1063
        %v1848 = vsel %vm1829, %v1815, %v1065
        %v1849 = vsel %vm1829, %v1816, %v1067
        %v1850 = vsel %vm1829, %v1817, %v1069
        %v1851 = vsel %vm1829, %v1818, %v1071
        %v1852 = vsel %vm1829, %v1819, %v1073
        %v1853 = vsel %vm1829, %v1820, %v1075
        %v1854 = vsel %vm1829, %v1821, %v1077
        %v1855 = vsel %vm1829, %v1822, %v1079
        %v1856 = vsel %vm1829, %v1823, %v1081
        %v1857 = vsel %vm1829, %v1824, %v1083
        %v1858 = vsel %vm1829, %v1825, %v1085
        %v1859 = vsel %vm1829, %v1826, %v1087
        %v1860 = vsel %vm1829, %v1827, %v1089
        %v1861 = vsel %vm1829, %v1828, %v1091
        %vm1862 = vcmask 130048
        %v1863 = vsel %vm1862, %v1830, %v1157
        %v1864 = vsel %vm1862, %v1831, %v1159
        %v1865 = vsel %vm1862, %v1832, %v1161
        %v1866 = vsel %vm1862, %v1833, %v1163
        %v1867 = vsel %vm1862, %v1834, %v1165
        %v1868 = vsel %vm1862, %v1835, %v1167
        %v1869 = vsel %vm1862, %v1836, %v1169
        %v1870 = vsel %vm1862, %v1837, %v1171
        %v1871 = vsel %vm1862, %v1838, %v1173
        %v1872 = vsel %vm1862, %v1839, %v1175
        %v1873 = vsel %vm1862, %v1840, %v1177
        %v1874 = vsel %vm1862, %v1841, %v1179
        %v1875 = vsel %vm1862, %v1842, %v1181
        %v1876 = vsel %vm1862, %v1843, %v1183
        %v1877 = vsel %vm1862, %v1844, %v1185
        %v1878 = vsel %vm1862, %v1845, %v1187
        %v1879 = vsel %vm1862, %v1846, %v1189
        %v1880 = vsel %vm1862, %v1847, %v1191
        %v1881 = vsel %vm1862, %v1848, %v1193
        %v1882 = vsel %vm1862, %v1849, %v1195
        %v1883 = vsel %vm1862, %v1850, %v1197
        %v1884 = vsel %vm1862, %v1851, %v1199
        %v1885 = vsel %vm1862, %v1852, %v1201
        %v1886 = vsel %vm1862, %v1853, %v1203
        %v1887 = vsel %vm1862, %v1854, %v1205
        %v1888 = vsel %vm1862, %v1855, %v1207
        %v1889 = vsel %vm1862, %v1856, %v1209
        %v1890 = vsel %vm1862, %v1857, %v1211
        %v1891 = vsel %vm1862, %v1858, %v1213
        %v1892 = vsel %vm1862, %v1859, %v1215
        %v1893 = vsel %vm1862, %v1860, %v1217
        %v1894 = vsel %vm1862, %v1861, %v1219
        %vm1895 = vcmask 162816
        %v1896 = vsel %vm1895, %v1863, %v1285
        %v1897 = vsel %vm1895, %v1864, %v1287
        %v1898 = vsel %vm1895, %v1865, %v1289
        %v1899 = vsel %vm1895, %v1866, %v1291
        %v1900 = vsel %vm1895, %v1867, %v1293
        %v1901 = vsel %vm1895, %v1868, %v1295
        %v1902 = vsel %vm1895, %v1869, %v1297
        %v1903 = vsel %vm1895, %v1870, %v1299
        %v1904 = vsel %vm1895, %v1871, %v1301
        %v1905 = vsel %vm1895, %v1872, %v1303
        %v1906 = vsel %vm1895, %v1873, %v1305
        %v1907 = vsel %vm1895, %v1874, %v1307
        %v1908 = vsel %vm1895, %v1875, %v1309
        %v1909 = vsel %vm1895, %v1876, %v1311
        %v1910 = vsel %vm1895, %v1877, %v1313
        %v1911 = vsel %vm1895, %v1878, %v1315
        %v1912 = vsel %vm1895, %v1879, %v1317
        %v1913 = vsel %vm1895, %v1880, %v1319
        %v1914 = vsel %vm1895, %v1881, %v1321
        %v1915 = vsel %vm1895, %v1882, %v1323
        %v1916 = vsel %vm1895, %v1883, %v1325
        %v1917 = vsel %vm1895, %v1884, %v1327
        %v1918 = vsel %vm1895, %v1885, %v1329
        %v1919 = vsel %vm1895, %v1886, %v1331
        %v1920 = vsel %vm1895, %v1887, %v1333
        %v1921 = vsel %vm1895, %v1888, %v1335
        %v1922 = vsel %vm1895, %v1889, %v1337
        %v1923 = vsel %vm1895, %v1890, %v1339
        %v1924 = vsel %vm1895, %v1891, %v1341
        %v1925 = vsel %vm1895, %v1892, %v1343
        %v1926 = vsel %vm1895, %v1893, %v1345
        %v1927 = vsel %vm1895, %v1894, %v1347
        %vm1928 = vcmask 195584
        %v1929 = vsel %vm1928, %v1896, %v1413
        %v1930 = vsel %vm1928, %v1897, %v1415
        %v1931 = vsel %vm1928, %v1898, %v1417
        %v1932 = vsel %vm1928, %v1899, %v1419
        %v1933 = vsel %vm1928, %v1900, %v1421
        %v1934 = vsel %vm1928, %v1901, %v1423
        %v1935 = vsel %vm1928, %v1902, %v1425
        %v1936 = vsel %vm1928, %v1903, %v1427
        %v1937 = vsel %vm1928, %v1904, %v1429
        %v1938 = vsel %vm1928, %v1905, %v1431
        %v1939 = vsel %vm1928, %v1906, %v1433
        %v1940 = vsel %vm1928, %v1907, %v1435
        %v1941 = vsel %vm1928, %v1908, %v1437
        %v1942 = vsel %vm1928, %v1909, %v1439
        %v1943 = vsel %vm1928, %v1910, %v1441
        %v1944 = vsel %vm1928, %v1911, %v1443
        %v1945 = vsel %vm1928, %v1912, %v1445
        %v1946 = vsel %vm1928, %v1913, %v1447
        %v1947 = vsel %vm1928, %v1914, %v1449
        %v1948 = vsel %vm1928, %v1915, %v1451
        %v1949 = vsel %vm1928, %v1916, %v1453
        %v1950 = vsel %vm1928, %v1917, %v1455
        %v1951 = vsel %vm1928, %v1918, %v1457
        %v1952 = vsel %vm1928, %v1919, %v1459
        %v1953 = vsel %vm1928, %v1920, %v1461
        %v1954 = vsel %vm1928, %v1921, %v1463
        %v1955 = vsel %vm1928, %v1922, %v1465
        %v1956 = vsel %vm1928, %v1923, %v1467
        %v1957 = vsel %vm1928, %v1924, %v1469
        %v1958 = vsel %vm1928, %v1925, %v1471
        %v1959 = vsel %vm1928, %v1926, %v1473
        %v1960 = vsel %vm1928, %v1927, %v1475
        %vm1961 = vcmask 228352
        %v1962 = vsel %vm1961, %v1929, %v1541
        %v1963 = vsel %vm1961, %v1930, %v1543
        %v1964 = vsel %vm1961, %v1931, %v1545
        %v1965 = vsel %vm1961, %v1932, %v1547
        %v1966 = vsel %vm1961, %v1933, %v1549
        %v1967 = vsel %vm1961, %v1934, %v1551
        %v1968 = vsel %vm1961, %v1935, %v1553
        %v1969 = vsel %vm1961, %v1936, %v1555
        %v1970 = vsel %vm1961, %v1937, %v1557
        %v1971 = vsel %vm1961, %v1938, %v1559
        %v1972 = vsel %vm1961, %v1939, %v1561
        %v1973 = vsel %vm1961, %v1940, %v1563
        %v1974 = vsel %vm1961, %v1941, %v1565
        %v1975 = vsel %vm1961, %v1942, %v1567
        %v1976 = vsel %vm1961, %v1943, %v1569
        %v1977 = vsel %vm1961, %v1944, %v1571
        %v1978 = vsel %vm1961, %v1945, %v1573
        %v1979 = vsel %vm1961, %v1946, %v1575
        %v1980 = vsel %vm1961, %v1947, %v1577
        %v1981 = vsel %vm1961, %v1948, %v1579
        %v1982 = vsel %vm1961, %v1949, %v1581
        %v1983 = vsel %vm1961, %v1950, %v1583
        %v1984 = vsel %vm1961, %v1951, %v1585
        %v1985 = vsel %vm1961, %v1952, %v1587
        %v1986 = vsel %vm1961, %v1953, %v1589
        %v1987 = vsel %vm1961, %v1954, %v1591
        %v1988 = vsel %vm1961, %v1955, %v1593
        %v1989 = vsel %vm1961, %v1956, %v1595
        %v1990 = vsel %vm1961, %v1957, %v1597
        %v1991 = vsel %vm1961, %v1958, %v1599
        %v1992 = vsel %vm1961, %v1959, %v1601
        %v1993 = vsel %vm1961, %v1960, %v1603
        %vm1994 = vcmask 261120
        %v1995 = vsel %vm1994, %v1962, %v1669
        %v1996 = vsel %vm1994, %v1963, %v1671
        %v1997 = vsel %vm1994, %v1964, %v1673
        %v1998 = vsel %vm1994, %v1965, %v1675
        %v1999 = vsel %vm1994, %v1966, %v1677
        %v2000 = vsel %vm1994, %v1967, %v1679
        %v2001 = vsel %vm1994, %v1968, %v1681
        %v2002 = vsel %vm1994, %v1969, %v1683
        %v2003 = vsel %vm1994, %v1970, %v1685
        %v2004 = vsel %vm1994, %v1971, %v1687
        %v2005 = vsel %vm1994, %v1972, %v1689
        %v2006 = vsel %vm1994, %v1973, %v1691
        %v2007 = vsel %vm1994, %v1974, %v1693
        %v2008 = vsel %vm1994, %v1975, %v1695
        %v2009 = vsel %vm1994, %v1976, %v1697
        %v2010 = vsel %vm1994, %v1977, %v1699
        %v2011 = vsel %vm1994, %v1978, %v1701
        %v2012 = vsel %vm1994, %v1979, %v1703
        %v2013 = vsel %vm1994, %v1980, %v1705
        %v2014 = vsel %vm1994, %v1981, %v1707
        %v2015 = vsel %vm1994, %v1982, %v1709
        %v2016 = vsel %vm1994, %v1983, %v1711
        %v2017 = vsel %vm1994, %v1984, %v1713
        %v2018 = vsel %vm1994, %v1985, %v1715
        %v2019 = vsel %vm1994, %v1986, %v1717
        %v2020 = vsel %vm1994, %v1987, %v1719
        %v2021 = vsel %vm1994, %v1988, %v1721
        %v2022 = vsel %vm1994, %v1989, %v1723
        %v2023 = vsel %vm1994, %v1990, %v1725
        %v2024 = vsel %vm1994, %v1991, %v1727
        %v2025 = vsel %vm1994, %v1992, %v1729
        %v2026 = vsel %vm1994, %v1993, %v1731
        %v2027 = vld [vmem:[%s1] sm:$0xff]
        %v2028 = vld [vmem:[%s1 + $0x8] sm:$0xff]
        %v2029 = vld [vmem:[%s1 + $0x10] sm:$0xff]
        %v2030 = vld [vmem:[%s1 + $0x18] sm:$0xff]
        %v2031 = vld [vmem:[%s1 + $0x20] sm:$0xf]
        %v2032 = vld [vmem:[%s2] sm:$0x1]
        %v2034 = vlaneseq
        %v2035 = vshrl.u32 %v2034, 7
        %v2036 = vsub.s32 0, %v2035
        %v2037 = vrot.slane %v2032, %v2036
        %vm2039 = vcmask 293888
        %v2041 = vsel %vm2039, %v1995, 0
        %v2044 = vsel %vm2039, %v1996, 0
        %v2047 = vsel %vm2039, %v1997, 0
        %v2050 = vsel %vm2039, %v1998, 0
        %v2053 = vsel %vm2039, %v1999, 0
        %v2056 = vsel %vm2039, %v2000, 0
        %v2059 = vsel %vm2039, %v2001, 0
        %v2062 = vsel %vm2039, %v2002, 0
        %v2065 = vsel %vm2039, %v2003, 0
        %v2068 = vsel %vm2039, %v2004, 0
        %v2071 = vsel %vm2039, %v2005, 0
        %v2074 = vsel %vm2039, %v2006, 0
        %v2077 = vsel %vm2039, %v2007, 0
        %v2080 = vsel %vm2039, %v2008, 0
        %v2083 = vsel %vm2039, %v2009, 0
        %v2086 = vsel %vm2039, %v2010, 0
        %v2089 = vsel %vm2039, %v2011, 0
        %v2092 = vsel %vm2039, %v2012, 0
        %v2095 = vsel %vm2039, %v2013, 0
        %v2098 = vsel %vm2039, %v2014, 0
        %v2101 = vsel %vm2039, %v2015, 0
        %v2104 = vsel %vm2039, %v2016, 0
        %v2107 = vsel %vm2039, %v2017, 0
        %v2110 = vsel %vm2039, %v2018, 0
        %v2113 = vsel %vm2039, %v2019, 0
        %v2116 = vsel %vm2039, %v2020, 0
        %v2119 = vsel %vm2039, %v2021, 0
        %v2122 = vsel %vm2039, %v2022, 0
        %v2125 = vsel %vm2039, %v2023, 0
        %v2128 = vsel %vm2039, %v2024, 0
        %v2131 = vsel %vm2039, %v2025, 0
        %v2134 = vsel %vm2039, %v2026, 0
        %vm2136 = vcmask 1043456
        %v2138 = vsel %vm2136, %v2031, 0
        %2140 = vmatprep.subr.mxu0 0.0
        %2141 = vmatpush1.msra.mxu0 0.0
        %2142 = vmatprep.subr.mxu0 0.0
        %2143 = vmatpush1.msra.mxu0 0.0
        %2144 = vmatprep.subr.mxu0 0.0
        %2145 = vmatpush1.msra.mxu0 0.0
        %2146 = vmatprep.subr.mxu0 0.0
        %2147 = vmatpush1.msra.mxu0 0.0
        %2148 = vmatprep.subr.mxu0 0.0
        %2149 = vmatpush1.msra.mxu0 0.0
        %2150 = vmatprep.subr.mxu0 0.0
        %2151 = vmatpush1.msra.mxu0 0.0
        %2152 = vmatprep.subr.mxu0 0.0
        %2153 = vmatpush1.msra.mxu0 0.0
        %2154 = vmatprep.subr.mxu0 0.0
        %2155 = vmatpush1.msra.mxu0 0.0
        %2156 = vmatprep.subr.mxu0 0.0
        %2157 = vmatpush1.msra.mxu0 0.0
        %2158 = vmatprep.subr.mxu0 0.0
        %2159 = vmatpush1.msra.mxu0 0.0
        %2160 = vmatprep.subr.mxu0 0.0
        %2161 = vmatpush1.msra.mxu0 0.0
        %2162 = vmatprep.subr.mxu0 0.0
        %2163 = vmatpush1.msra.mxu0 %v2138
        %2164 = vmatprep.subr.mxu0 0.0
        %2165 = vmatpush1.msra.mxu0 %v2030
        %2166 = vmatprep.subr.mxu0 0.0
        %2167 = vmatpush1.msra.mxu0 %v2029
        %2168 = vmatprep.subr.mxu0 0.0
        %2169 = vmatpush1.msra.mxu0 %v2028
        %2170 = vmatprep.subr.mxu0 0.0
        %2171 = vmatpush1.msra.mxu0 %v2027
        %2172 = vmatprep.subr.mxu0 0.0
        %2173 = vmatpush2.msra.mxu0 0.0
        %2174 = vmatprep.subr.mxu0 0.0
        %2175 = vmatpush2.msra.mxu0 0.0
        %2176 = vmatprep.subr.mxu0 0.0
        %2177 = vmatpush2.msra.mxu0 0.0
        %2178 = vmatprep.subr.mxu0 0.0
        %2179 = vmatpush2.msra.mxu0 0.0
        %2180 = vmatprep.subr.mxu0 0.0
        %2181 = vmatpush2.msra.mxu0 0.0
        %2182 = vmatprep.subr.mxu0 0.0
        %2183 = vmatpush2.msra.mxu0 0.0
        %2184 = vmatprep.subr.mxu0 0.0
        %2185 = vmatpush2.msra.mxu0 0.0
        %2186 = vmatprep.subr.mxu0 0.0
        %2187 = vmatpush2.msra.mxu0 0.0
        %2188 = vmatprep.subr.mxu0 0.0
        %2189 = vmatpush2.msra.mxu0 0.0
        %2190 = vmatprep.subr.mxu0 0.0
        %2191 = vmatpush2.msra.mxu0 0.0
        %2192 = vmatprep.subr.mxu0 0.0
        %2193 = vmatpush2.msra.mxu0 0.0
        %2194 = vmatprep.subr.mxu0 0.0
        %2195 = vmatpush2.msra.mxu0 0.0
        %2196 = vmatprep.subr.mxu0 0.0
        %2197 = vmatpush2.msra.mxu0 0.0
        %2198 = vmatprep.subr.mxu0 0.0
        %2199 = vmatpush2.msra.mxu0 0.0
        %2200 = vmatprep.subr.mxu0 0.0
        %2201 = vmatpush2.msra.mxu0 0.0
        %2202 = vmatprep.subr.mxu0 0.0
        %2203 = vmatpush2.msra.mxu0 0.0
        %2204 = vmatprep.mubr.f32.mxu0 0.0
        %2205 = vmatmul.mubr.f32.gmra.mxu0 %v2041
        %v2206 = vpop.f32.mrf.mxu0
        %v2207 = vadd.f32 %v2037, %v2206
        %v2208 = vpop.f32.mrf.mxu0
        %2209 = vmatprep.mubr.f32.mxu0 0.0
        %2210 = vmatmul.mubr.f32.gmra.mxu0 %v2044
        %v2211 = vpop.f32.mrf.mxu0
        %v2212 = vadd.f32 %v2037, %v2211
        %v2213 = vpop.f32.mrf.mxu0
        %2214 = vmatprep.mubr.f32.mxu0 0.0
        %2215 = vmatmul.mubr.f32.gmra.mxu0 %v2047
        %v2216 = vpop.f32.mrf.mxu0
        %v2217 = vadd.f32 %v2037, %v2216
        %v2218 = vpop.f32.mrf.mxu0
        %2219 = vmatprep.mubr.f32.mxu0 0.0
        %2220 = vmatmul.mubr.f32.gmra.mxu0 %v2050
        %v2221 = vpop.f32.mrf.mxu0
        %v2222 = vadd.f32 %v2037, %v2221
        %v2223 = vpop.f32.mrf.mxu0
        %2224 = vmatprep.mubr.f32.mxu0 0.0
        %2225 = vmatmul.mubr.f32.gmra.mxu0 %v2053
        %v2226 = vpop.f32.mrf.mxu0
        %v2227 = vadd.f32 %v2037, %v2226
        %v2228 = vpop.f32.mrf.mxu0
        %2229 = vmatprep.mubr.f32.mxu0 0.0
        %2230 = vmatmul.mubr.f32.gmra.mxu0 %v2056
        %v2231 = vpop.f32.mrf.mxu0
        %v2232 = vadd.f32 %v2037, %v2231
        %v2233 = vpop.f32.mrf.mxu0
        %2234 = vmatprep.mubr.f32.mxu0 0.0
        %2235 = vmatmul.mubr.f32.gmra.mxu0 %v2059
        %v2236 = vpop.f32.mrf.mxu0
        %v2237 = vadd.f32 %v2037, %v2236
        %v2238 = vpop.f32.mrf.mxu0
        %2239 = vmatprep.mubr.f32.mxu0 0.0
        %2240 = vmatmul.mubr.f32.gmra.mxu0 %v2062
        %v2241 = vpop.f32.mrf.mxu0
        %v2242 = vadd.f32 %v2037, %v2241
        %v2243 = vpop.f32.mrf.mxu0
        %2244 = vmatprep.mubr.f32.mxu0 0.0
        %2245 = vmatmul.mubr.f32.gmra.mxu0 %v2065
        %v2246 = vpop.f32.mrf.mxu0
        %v2247 = vadd.f32 %v2037, %v2246
        %v2248 = vpop.f32.mrf.mxu0
        %2249 = vmatprep.mubr.f32.mxu0 0.0
        %2250 = vmatmul.mubr.f32.gmra.mxu0 %v2068
        %v2251 = vpop.f32.mrf.mxu0
        %v2252 = vadd.f32 %v2037, %v2251
        %v2253 = vpop.f32.mrf.mxu0
        %2254 = vmatprep.mubr.f32.mxu0 0.0
        %2255 = vmatmul.mubr.f32.gmra.mxu0 %v2071
        %v2256 = vpop.f32.mrf.mxu0
        %v2257 = vadd.f32 %v2037, %v2256
        %v2258 = vpop.f32.mrf.mxu0
        %2259 = vmatprep.mubr.f32.mxu0 0.0
        %2260 = vmatmul.mubr.f32.gmra.mxu0 %v2074
        %v2261 = vpop.f32.mrf.mxu0
        %v2262 = vadd.f32 %v2037, %v2261
        %v2263 = vpop.f32.mrf.mxu0
        %2264 = vmatprep.mubr.f32.mxu0 0.0
        %2265 = vmatmul.mubr.f32.gmra.mxu0 %v2077
        %v2266 = vpop.f32.mrf.mxu0
        %v2267 = vadd.f32 %v2037, %v2266
        %v2268 = vpop.f32.mrf.mxu0
        %2269 = vmatprep.mubr.f32.mxu0 0.0
        %2270 = vmatmul.mubr.f32.gmra.mxu0 %v2080
        %v2271 = vpop.f32.mrf.mxu0
        %v2272 = vadd.f32 %v2037, %v2271
        %v2273 = vpop.f32.mrf.mxu0
        %2274 = vmatprep.mubr.f32.mxu0 0.0
        %2275 = vmatmul.mubr.f32.gmra.mxu0 %v2083
        %v2276 = vpop.f32.mrf.mxu0
        %v2277 = vadd.f32 %v2037, %v2276
        %v2278 = vpop.f32.mrf.mxu0
        %2279 = vmatprep.mubr.f32.mxu0 0.0
        %2280 = vmatmul.mubr.f32.gmra.mxu0 %v2086
        %v2281 = vpop.f32.mrf.mxu0
        %v2282 = vadd.f32 %v2037, %v2281
        %v2283 = vpop.f32.mrf.mxu0
        %2284 = vmatprep.mubr.f32.mxu0 0.0
        %2285 = vmatmul.mubr.f32.gmra.mxu0 %v2089
        %v2286 = vpop.f32.mrf.mxu0
        %v2287 = vadd.f32 %v2037, %v2286
        %v2288 = vpop.f32.mrf.mxu0
        %2289 = vmatprep.mubr.f32.mxu0 0.0
        %2290 = vmatmul.mubr.f32.gmra.mxu0 %v2092
        %v2291 = vpop.f32.mrf.mxu0
        %v2292 = vadd.f32 %v2037, %v2291
        %v2293 = vpop.f32.mrf.mxu0
        %2294 = vmatprep.mubr.f32.mxu0 0.0
        %2295 = vmatmul.mubr.f32.gmra.mxu0 %v2095
        %v2296 = vpop.f32.mrf.mxu0
        %v2297 = vadd.f32 %v2037, %v2296
        %v2298 = vpop.f32.mrf.mxu0
        %2299 = vmatprep.mubr.f32.mxu0 0.0
        %2300 = vmatmul.mubr.f32.gmra.mxu0 %v2098
        %v2301 = vpop.f32.mrf.mxu0
        %v2302 = vadd.f32 %v2037, %v2301
        %v2303 = vpop.f32.mrf.mxu0
        %2304 = vmatprep.mubr.f32.mxu0 0.0
        %2305 = vmatmul.mubr.f32.gmra.mxu0 %v2101
        %v2306 = vpop.f32.mrf.mxu0
        %v2307 = vadd.f32 %v2037, %v2306
        %v2308 = vpop.f32.mrf.mxu0
        %2309 = vmatprep.mubr.f32.mxu0 0.0
        %2310 = vmatmul.mubr.f32.gmra.mxu0 %v2104
        %v2311 = vpop.f32.mrf.mxu0
        %v2312 = vadd.f32 %v2037, %v2311
        %v2313 = vpop.f32.mrf.mxu0
        %2314 = vmatprep.mubr.f32.mxu0 0.0
        %2315 = vmatmul.mubr.f32.gmra.mxu0 %v2107
        %v2316 = vpop.f32.mrf.mxu0
        %v2317 = vadd.f32 %v2037, %v2316
        %v2318 = vpop.f32.mrf.mxu0
        %2319 = vmatprep.mubr.f32.mxu0 0.0
        %2320 = vmatmul.mubr.f32.gmra.mxu0 %v2110
        %v2321 = vpop.f32.mrf.mxu0
        %v2322 = vadd.f32 %v2037, %v2321
        %v2323 = vpop.f32.mrf.mxu0
        %2324 = vmatprep.mubr.f32.mxu0 0.0
        %2325 = vmatmul.mubr.f32.gmra.mxu0 %v2113
        %v2326 = vpop.f32.mrf.mxu0
        %v2327 = vadd.f32 %v2037, %v2326
        %v2328 = vpop.f32.mrf.mxu0
        %2329 = vmatprep.mubr.f32.mxu0 0.0
        %2330 = vmatmul.mubr.f32.gmra.mxu0 %v2116
        %v2331 = vpop.f32.mrf.mxu0
        %v2332 = vadd.f32 %v2037, %v2331
        %v2333 = vpop.f32.mrf.mxu0
        %2334 = vmatprep.mubr.f32.mxu0 0.0
        %2335 = vmatmul.mubr.f32.gmra.mxu0 %v2119
        %v2336 = vpop.f32.mrf.mxu0
        %v2337 = vadd.f32 %v2037, %v2336
        %v2338 = vpop.f32.mrf.mxu0
        %2339 = vmatprep.mubr.f32.mxu0 0.0
        %2340 = vmatmul.mubr.f32.gmra.mxu0 %v2122
        %v2341 = vpop.f32.mrf.mxu0
        %v2342 = vadd.f32 %v2037, %v2341
        %v2343 = vpop.f32.mrf.mxu0
        %2344 = vmatprep.mubr.f32.mxu0 0.0
        %2345 = vmatmul.mubr.f32.gmra.mxu0 %v2125
        %v2346 = vpop.f32.mrf.mxu0
        %v2347 = vadd.f32 %v2037, %v2346
        %v2348 = vpop.f32.mrf.mxu0
        %2349 = vmatprep.mubr.f32.mxu0 0.0
        %2350 = vmatmul.mubr.f32.gmra.mxu0 %v2128
        %v2351 = vpop.f32.mrf.mxu0
        %v2352 = vadd.f32 %v2037, %v2351
        %v2353 = vpop.f32.mrf.mxu0
        %2354 = vmatprep.mubr.f32.mxu0 0.0
        %2355 = vmatmul.mubr.f32.gmra.mxu0 %v2131
        %v2356 = vpop.f32.mrf.mxu0
        %v2357 = vadd.f32 %v2037, %v2356
        %v2358 = vpop.f32.mrf.mxu0
        %2359 = vmatprep.mubr.f32.mxu0 0.0
        %2360 = vmatmul.mubr.f32.gmra.mxu0 %v2134
        %v2361 = vpop.f32.mrf.mxu0
        %v2362 = vadd.f32 %v2037, %v2361
        %v2363 = vpop.f32.mrf.mxu0
        %2364 = vdwg.mxu0
        %v2365 = vmax.f32 %v2207, 0.0
        %v2366 = vmax.f32 %v2212, 0.0
        %v2367 = vmax.f32 %v2217, 0.0
        %v2368 = vmax.f32 %v2222, 0.0
        %v2369 = vmax.f32 %v2227, 0.0
        %v2370 = vmax.f32 %v2232, 0.0
        %v2371 = vmax.f32 %v2237, 0.0
        %v2372 = vmax.f32 %v2242, 0.0
        %v2373 = vmax.f32 %v2247, 0.0
        %v2374 = vmax.f32 %v2252, 0.0
        %v2375 = vmax.f32 %v2257, 0.0
        %v2376 = vmax.f32 %v2262, 0.0
        %v2377 = vmax.f32 %v2267, 0.0
        %v2378 = vmax.f32 %v2272, 0.0
        %v2379 = vmax.f32 %v2277, 0.0
        %v2380 = vmax.f32 %v2282, 0.0
        %v2381 = vmax.f32 %v2287, 0.0
        %v2382 = vmax.f32 %v2292, 0.0
        %v2383 = vmax.f32 %v2297, 0.0
        %v2384 = vmax.f32 %v2302, 0.0
        %v2385 = vmax.f32 %v2307, 0.0
        %v2386 = vmax.f32 %v2312, 0.0
        %v2387 = vmax.f32 %v2317, 0.0
        %v2388 = vmax.f32 %v2322, 0.0
        %v2389 = vmax.f32 %v2327, 0.0
        %v2390 = vmax.f32 %v2332, 0.0
        %v2391 = vmax.f32 %v2337, 0.0
        %v2392 = vmax.f32 %v2342, 0.0
        %v2393 = vmax.f32 %v2347, 0.0
        %v2394 = vmax.f32 %v2352, 0.0
        %v2395 = vmax.f32 %v2357, 0.0
        %v2396 = vmax.f32 %v2362, 0.0
        %2397 = vst.msk [vmem:[#allocation3] sm:$0xff] %vm1796, 0.0
        %2398 = vst.msk [vmem:[#allocation3 + $0x8] sm:$0xff] %vm1796, 0.0
        %vm2399 = vcmask 58368
        %2400 = vst.msk [vmem:[#allocation3 + $0x10] sm:$0x3] %vm2399, 0.0
        %2401 = vst.msk [vmem:[#allocation3 + $0x18] sm:$0xff] %vm1796, 0.0
        %2402 = vst.msk [vmem:[#allocation3 + $0x20] sm:$0xff] %vm1796, 0.0
        %2403 = vst.msk [vmem:[#allocation3 + $0x28] sm:$0x3] %vm2399, 0.0
        %2404 = vst.msk [vmem:[#allocation3 + $0x30] sm:$0xff] %vm1796, 0.0
        %2405 = vst.msk [vmem:[#allocation3 + $0x38] sm:$0xff] %vm1796, 0.0
        %2406 = vst.msk [vmem:[#allocation3 + $0x40] sm:$0x3] %vm2399, 0.0
        %2407 = vst.msk [vmem:[#allocation3 + $0x48] sm:$0xff] %vm1796, 0.0
        %2408 = vst.msk [vmem:[#allocation3 + $0x50] sm:$0xff] %vm1796, 0.0
        %2409 = vst.msk [vmem:[#allocation3 + $0x58] sm:$0x3] %vm2399, 0.0
        %2410 = vst.msk [vmem:[#allocation3 + $0x60] sm:$0xff] %vm1796, 0.0
        %2411 = vst.msk [vmem:[#allocation3 + $0x68] sm:$0xff] %vm1796, 0.0
        %2412 = vst.msk [vmem:[#allocation3 + $0x70] sm:$0x3] %vm2399, 0.0
        %2413 = vst.msk [vmem:[#allocation3 + $0x78] sm:$0xff] %vm1796, 0.0
        %2414 = vst.msk [vmem:[#allocation3 + $0x80] sm:$0xff] %vm1796, 0.0
        %2415 = vst.msk [vmem:[#allocation3 + $0x88] sm:$0x3] %vm2399, 0.0
        %2416 = vst.msk [vmem:[#allocation3 + $0x90] sm:$0xff] %vm1796, 0.0
        %2417 = vst.msk [vmem:[#allocation3 + $0x98] sm:$0xff] %vm1796, 0.0
        %2418 = vst.msk [vmem:[#allocation3 + $0xa0] sm:$0x3] %vm2399, 0.0
        %2419 = vst.msk [vmem:[#allocation3 + $0xa8] sm:$0xff] %vm1796, 0.0
        %2420 = vst.msk [vmem:[#allocation3 + $0xb0] sm:$0xff] %vm1796, 0.0
        %2421 = vst.msk [vmem:[#allocation3 + $0xb8] sm:$0x3] %vm2399, 0.0
        %2422 = vst.msk [vmem:[#allocation3 + $0xc0] sm:$0xff] %vm1796, 0.0
        %2423 = vst.msk [vmem:[#allocation3 + $0xc8] sm:$0xff] %vm1796, 0.0
        %2424 = vst.msk [vmem:[#allocation3 + $0xd0] sm:$0x3] %vm2399, 0.0
        %2425 = vst.msk [vmem:[#allocation3 + $0xd8] sm:$0xff] %vm1796, 0.0
        %2426 = vst.msk [vmem:[#allocation3 + $0xe0] sm:$0xff] %vm1796, 0.0
        %2427 = vst.msk [vmem:[#allocation3 + $0xe8] sm:$0x3] %vm2399, 0.0
        %2428 = vst.msk [vmem:[#allocation3 + $0xf0] sm:$0xff] %vm1796, 0.0
        %2429 = vst.msk [vmem:[#allocation3 + $0xf8] sm:$0xff] %vm1796, 0.0
        %2430 = vst.msk [vmem:[#allocation3 + $0x100] sm:$0x3] %vm2399, 0.0
        %2431 = vst.msk [vmem:[#allocation3 + $0x108] sm:$0xff] %vm1796, 0.0
        %2432 = vst.msk [vmem:[#allocation3 + $0x110] sm:$0xff] %vm1796, 0.0
        %2433 = vst.msk [vmem:[#allocation3 + $0x118] sm:$0x3] %vm2399, 0.0
        %2434 = vst.msk [vmem:[#allocation3 + $0x120] sm:$0xff] %vm1796, 0.0
        %2435 = vst.msk [vmem:[#allocation3 + $0x128] sm:$0xff] %vm1796, 0.0
        %2436 = vst.msk [vmem:[#allocation3 + $0x130] sm:$0x3] %vm2399, 0.0
        %2437 = vst.msk [vmem:[#allocation3 + $0x138] sm:$0xff] %vm1796, 0.0
        %2438 = vst.msk [vmem:[#allocation3 + $0x140] sm:$0xff] %vm1796, 0.0
        %2439 = vst.msk [vmem:[#allocation3 + $0x148] sm:$0x3] %vm2399, 0.0
        %2440 = vst.msk [vmem:[#allocation3 + $0x150] sm:$0xff] %vm1796, 0.0
        %2441 = vst.msk [vmem:[#allocation3 + $0x158] sm:$0xff] %vm1796, 0.0
        %2442 = vst.msk [vmem:[#allocation3 + $0x160] sm:$0x3] %vm2399, 0.0
        %2443 = vst.msk [vmem:[#allocation3 + $0x168] sm:$0xff] %vm1796, 0.0
        %2444 = vst.msk [vmem:[#allocation3 + $0x170] sm:$0xff] %vm1796, 0.0
        %2445 = vst.msk [vmem:[#allocation3 + $0x178] sm:$0x3] %vm2399, 0.0
        %2446 = vst.msk [vmem:[#allocation3 + $0x180] sm:$0xff] %vm1796, 0.0
        %2447 = vst.msk [vmem:[#allocation3 + $0x188] sm:$0xff] %vm1796, 0.0
        %2448 = vst.msk [vmem:[#allocation3 + $0x190] sm:$0x3] %vm2399, 0.0
        %2449 = vst.msk [vmem:[#allocation3 + $0x198] sm:$0xff] %vm1796, 0.0
        %2450 = vst.msk [vmem:[#allocation3 + $0x1a0] sm:$0xff] %vm1796, 0.0
        %2451 = vst.msk [vmem:[#allocation3 + $0x1a8] sm:$0x3] %vm2399, 0.0
        %s2452 = scalar_lea.vmem [#allocation3], 24
        %2453 = vst.msk [vmem:[%s2452 + $0x1] sm:$0xff] %vm1796, %v2365
        %2454 = vst.msk [vmem:[%s2452 + $0x9] sm:$0xff] %vm1796, %v2366
        %2455 = vst.msk [vmem:[%s2452 + $0x19] sm:$0xff] %vm1796, %v2367
        %2456 = vst.msk [vmem:[%s2452 + $0x21] sm:$0xff] %vm1796, %v2368
        %2457 = vst.msk [vmem:[%s2452 + $0x31] sm:$0xff] %vm1796, %v2369
        %2458 = vst.msk [vmem:[%s2452 + $0x39] sm:$0xff] %vm1796, %v2370
        %2459 = vst.msk [vmem:[%s2452 + $0x49] sm:$0xff] %vm1796, %v2371
        %2460 = vst.msk [vmem:[%s2452 + $0x51] sm:$0xff] %vm1796, %v2372
        %2461 = vst.msk [vmem:[%s2452 + $0x61] sm:$0xff] %vm1796, %v2373
        %2462 = vst.msk [vmem:[%s2452 + $0x69] sm:$0xff] %vm1796, %v2374
        %2463 = vst.msk [vmem:[%s2452 + $0x79] sm:$0xff] %vm1796, %v2375
        %2464 = vst.msk [vmem:[%s2452 + $0x81] sm:$0xff] %vm1796, %v2376
        %2465 = vst.msk [vmem:[%s2452 + $0x91] sm:$0xff] %vm1796, %v2377
        %2466 = vst.msk [vmem:[%s2452 + $0x99] sm:$0xff] %vm1796, %v2378
        %2467 = vst.msk [vmem:[%s2452 + $0xa9] sm:$0xff] %vm1796, %v2379
        %2468 = vst.msk [vmem:[%s2452 + $0xb1] sm:$0xff] %vm1796, %v2380
        %2469 = vst.msk [vmem:[%s2452 + $0xc1] sm:$0xff] %vm1796, %v2381
        %2470 = vst.msk [vmem:[%s2452 + $0xc9] sm:$0xff] %vm1796, %v2382
        %2471 = vst.msk [vmem:[%s2452 + $0xd9] sm:$0xff] %vm1796, %v2383
        %2472 = vst.msk [vmem:[%s2452 + $0xe1] sm:$0xff] %vm1796, %v2384
        %2473 = vst.msk [vmem:[%s2452 + $0xf1] sm:$0xff] %vm1796, %v2385
        %2474 = vst.msk [vmem:[%s2452 + $0xf9] sm:$0xff] %vm1796, %v2386
        %2475 = vst.msk [vmem:[%s2452 + $0x109] sm:$0xff] %vm1796, %v2387
        %2476 = vst.msk [vmem:[%s2452 + $0x111] sm:$0xff] %vm1796, %v2388
        %2477 = vst.msk [vmem:[%s2452 + $0x121] sm:$0xff] %vm1796, %v2389
        %2478 = vst.msk [vmem:[%s2452 + $0x129] sm:$0xff] %vm1796, %v2390
        %2479 = vst.msk [vmem:[%s2452 + $0x139] sm:$0xff] %vm1796, %v2391
        %2480 = vst.msk [vmem:[%s2452 + $0x141] sm:$0xff] %vm1796, %v2392
        %2481 = vst.msk [vmem:[%s2452 + $0x151] sm:$0xff] %vm1796, %v2393
        %2482 = vst.msk [vmem:[%s2452 + $0x159] sm:$0xff] %vm1796, %v2394
        %2483 = vst.msk [vmem:[%s2452 + $0x169] sm:$0xff] %vm1796, %v2395
        %2484 = vst.msk [vmem:[%s2452 + $0x171] sm:$0xff] %vm1796, %v2396
        %v2485 = vld [vmem:[#allocation3] sm:$0xff]
        %v2486 = vld [vmem:[#allocation3 + $0x8] sm:$0xff]
        %v2487 = vld [vmem:[#allocation3 + $0x18] sm:$0xff]
        %v2488 = vld [vmem:[#allocation3 + $0x20] sm:$0xff]
        %v2489 = vld [vmem:[#allocation3 + $0x30] sm:$0xff]
        %v2490 = vld [vmem:[#allocation3 + $0x38] sm:$0xff]
        %v2491 = vld [vmem:[#allocation3 + $0x48] sm:$0xff]
        %v2492 = vld [vmem:[#allocation3 + $0x50] sm:$0xff]
        %v2493 = vld [vmem:[#allocation3 + $0x60] sm:$0xff]
        %v2494 = vld [vmem:[#allocation3 + $0x68] sm:$0xff]
        %v2495 = vld [vmem:[#allocation3 + $0x78] sm:$0xff]
        %v2496 = vld [vmem:[#allocation3 + $0x80] sm:$0xff]
        %v2497 = vld [vmem:[#allocation3 + $0x90] sm:$0xff]
        %v2498 = vld [vmem:[#allocation3 + $0x98] sm:$0xff]
        %v2499 = vld [vmem:[#allocation3 + $0xa8] sm:$0xff]
        %v2500 = vld [vmem:[#allocation3 + $0xb0] sm:$0xff]
        %v2501 = vld [vmem:[#allocation3 + $0xc0] sm:$0xff]
        %v2502 = vld [vmem:[#allocation3 + $0xc8] sm:$0xff]
        %v2503 = vld [vmem:[#allocation3 + $0xd8] sm:$0xff]
        %v2504 = vld [vmem:[#allocation3 + $0xe0] sm:$0xff]
        %v2505 = vld [vmem:[#allocation3 + $0xf0] sm:$0xff]
        %v2506 = vld [vmem:[#allocation3 + $0xf8] sm:$0xff]
        %v2507 = vld [vmem:[#allocation3 + $0x108] sm:$0xff]
        %v2508 = vld [vmem:[#allocation3 + $0x110] sm:$0xff]
        %v2509 = vld [vmem:[#allocation3 + $0x120] sm:$0xff]
        %v2510 = vld [vmem:[#allocation3 + $0x128] sm:$0xff]
        %v2511 = vld [vmem:[#allocation3 + $0x138] sm:$0xff]
        %v2512 = vld [vmem:[#allocation3 + $0x140] sm:$0xff]
        %v2513 = vld [vmem:[#allocation3 + $0x150] sm:$0xff]
        %v2514 = vld [vmem:[#allocation3 + $0x158] sm:$0xff]
        %v2515 = vld [vmem:[#allocation3 + $0x168] sm:$0xff]
        %v2516 = vld [vmem:[#allocation3 + $0x170] sm:$0xff]
        %v2517 = vld [vmem:[#allocation3 + $0x1] sm:$0xff]
        %v2518 = vld [vmem:[#allocation3 + $0x9] sm:$0xff]
        %v2519 = vld [vmem:[#allocation3 + $0x19] sm:$0xff]
        %v2520 = vld [vmem:[#allocation3 + $0x21] sm:$0xff]
        %v2521 = vld [vmem:[#allocation3 + $0x31] sm:$0xff]
        %v2522 = vld [vmem:[#allocation3 + $0x39] sm:$0xff]
        %v2523 = vld [vmem:[#allocation3 + $0x49] sm:$0xff]
        %v2524 = vld [vmem:[#allocation3 + $0x51] sm:$0xff]
        %v2525 = vld [vmem:[#allocation3 + $0x61] sm:$0xff]
        %v2526 = vld [vmem:[#allocation3 + $0x69] sm:$0xff]
        %v2527 = vld [vmem:[#allocation3 + $0x79] sm:$0xff]
        %v2528 = vld [vmem:[#allocation3 + $0x81] sm:$0xff]
        %v2529 = vld [vmem:[#allocation3 + $0x91] sm:$0xff]
        %v2530 = vld [vmem:[#allocation3 + $0x99] sm:$0xff]
        %v2531 = vld [vmem:[#allocation3 + $0xa9] sm:$0xff]
        %v2532 = vld [vmem:[#allocation3 + $0xb1] sm:$0xff]
        %v2533 = vld [vmem:[#allocation3 + $0xc1] sm:$0xff]
        %v2534 = vld [vmem:[#allocation3 + $0xc9] sm:$0xff]
        %v2535 = vld [vmem:[#allocation3 + $0xd9] sm:$0xff]
        %v2536 = vld [vmem:[#allocation3 + $0xe1] sm:$0xff]
        %v2537 = vld [vmem:[#allocation3 + $0xf1] sm:$0xff]
        %v2538 = vld [vmem:[#allocation3 + $0xf9] sm:$0xff]
        %v2539 = vld [vmem:[#allocation3 + $0x109] sm:$0xff]
        %v2540 = vld [vmem:[#allocation3 + $0x111] sm:$0xff]
        %v2541 = vld [vmem:[#allocation3 + $0x121] sm:$0xff]
        %v2542 = vld [vmem:[#allocation3 + $0x129] sm:$0xff]
        %v2543 = vld [vmem:[#allocation3 + $0x139] sm:$0xff]
        %v2544 = vld [vmem:[#allocation3 + $0x141] sm:$0xff]
        %v2545 = vld [vmem:[#allocation3 + $0x151] sm:$0xff]
        %v2546 = vld [vmem:[#allocation3 + $0x159] sm:$0xff]
        %v2547 = vld [vmem:[#allocation3 + $0x169] sm:$0xff]
        %v2548 = vld [vmem:[#allocation3 + $0x171] sm:$0xff]
        %v2549 = vld [vmem:[#allocation3 + $0x2] sm:$0xff]
        %v2550 = vld [vmem:[#allocation3 + $0xa] sm:$0xff]
        %v2551 = vld [vmem:[#allocation3 + $0x1a] sm:$0xff]
        %v2552 = vld [vmem:[#allocation3 + $0x22] sm:$0xff]
        %v2553 = vld [vmem:[#allocation3 + $0x32] sm:$0xff]
        %v2554 = vld [vmem:[#allocation3 + $0x3a] sm:$0xff]
        %v2555 = vld [vmem:[#allocation3 + $0x4a] sm:$0xff]
        %v2556 = vld [vmem:[#allocation3 + $0x52] sm:$0xff]
        %v2557 = vld [vmem:[#allocation3 + $0x62] sm:$0xff]
        %v2558 = vld [vmem:[#allocation3 + $0x6a] sm:$0xff]
        %v2559 = vld [vmem:[#allocation3 + $0x7a] sm:$0xff]
        %v2560 = vld [vmem:[#allocation3 + $0x82] sm:$0xff]
        %v2561 = vld [vmem:[#allocation3 + $0x92] sm:$0xff]
        %v2562 = vld [vmem:[#allocation3 + $0x9a] sm:$0xff]
        %v2563 = vld [vmem:[#allocation3 + $0xaa] sm:$0xff]
        %v2564 = vld [vmem:[#allocation3 + $0xb2] sm:$0xff]
        %v2565 = vld [vmem:[#allocation3 + $0xc2] sm:$0xff]
        %v2566 = vld [vmem:[#allocation3 + $0xca] sm:$0xff]
        %v2567 = vld [vmem:[#allocation3 + $0xda] sm:$0xff]
        %v2568 = vld [vmem:[#allocation3 + $0xe2] sm:$0xff]
        %v2569 = vld [vmem:[#allocation3 + $0xf2] sm:$0xff]
        %v2570 = vld [vmem:[#allocation3 + $0xfa] sm:$0xff]
        %v2571 = vld [vmem:[#allocation3 + $0x10a] sm:$0xff]
        %v2572 = vld [vmem:[#allocation3 + $0x112] sm:$0xff]
        %v2573 = vld [vmem:[#allocation3 + $0x122] sm:$0xff]
        %v2574 = vld [vmem:[#allocation3 + $0x12a] sm:$0xff]
        %v2575 = vld [vmem:[#allocation3 + $0x13a] sm:$0xff]
        %v2576 = vld [vmem:[#allocation3 + $0x142] sm:$0xff]
        %v2577 = vld [vmem:[#allocation3 + $0x152] sm:$0xff]
        %v2578 = vld [vmem:[#allocation3 + $0x15a] sm:$0xff]
        %v2579 = vld [vmem:[#allocation3 + $0x16a] sm:$0xff]
        %v2580 = vld [vmem:[#allocation3 + $0x172] sm:$0xff]
        %v2581 = vld [vmem:[%s2452] sm:$0xff]
        %v2582 = vld [vmem:[%s2452 + $0x8] sm:$0xff]
        %v2583 = vld [vmem:[%s2452 + $0x18] sm:$0xff]
        %v2584 = vld [vmem:[%s2452 + $0x20] sm:$0xff]
        %v2585 = vld [vmem:[%s2452 + $0x30] sm:$0xff]
        %v2586 = vld [vmem:[%s2452 + $0x38] sm:$0xff]
        %v2587 = vld [vmem:[%s2452 + $0x48] sm:$0xff]
        %v2588 = vld [vmem:[%s2452 + $0x50] sm:$0xff]
        %v2589 = vld [vmem:[%s2452 + $0x60] sm:$0xff]
        %v2590 = vld [vmem:[%s2452 + $0x68] sm:$0xff]
        %v2591 = vld [vmem:[%s2452 + $0x78] sm:$0xff]
        %v2592 = vld [vmem:[%s2452 + $0x80] sm:$0xff]
        %v2593 = vld [vmem:[%s2452 + $0x90] sm:$0xff]
        %v2594 = vld [vmem:[%s2452 + $0x98] sm:$0xff]
        %v2595 = vld [vmem:[%s2452 + $0xa8] sm:$0xff]
        %v2596 = vld [vmem:[%s2452 + $0xb0] sm:$0xff]
        %v2597 = vld [vmem:[%s2452 + $0xc0] sm:$0xff]
        %v2598 = vld [vmem:[%s2452 + $0xc8] sm:$0xff]
        %v2599 = vld [vmem:[%s2452 + $0xd8] sm:$0xff]
        %v2600 = vld [vmem:[%s2452 + $0xe0] sm:$0xff]
        %v2601 = vld [vmem:[%s2452 + $0xf0] sm:$0xff]
        %v2602 = vld [vmem:[%s2452 + $0xf8] sm:$0xff]
        %v2603 = vld [vmem:[%s2452 + $0x108] sm:$0xff]
        %v2604 = vld [vmem:[%s2452 + $0x110] sm:$0xff]
        %v2605 = vld [vmem:[%s2452 + $0x120] sm:$0xff]
        %v2606 = vld [vmem:[%s2452 + $0x128] sm:$0xff]
        %v2607 = vld [vmem:[%s2452 + $0x138] sm:$0xff]
        %v2608 = vld [vmem:[%s2452 + $0x140] sm:$0xff]
        %v2609 = vld [vmem:[%s2452 + $0x150] sm:$0xff]
        %v2610 = vld [vmem:[%s2452 + $0x158] sm:$0xff]
        %v2611 = vld [vmem:[%s2452 + $0x168] sm:$0xff]
        %v2612 = vld [vmem:[%s2452 + $0x170] sm:$0xff]
        %v2613 = vld [vmem:[%s2452 + $0x1] sm:$0xff]
        %v2614 = vld [vmem:[%s2452 + $0x9] sm:$0xff]
        %v2615 = vld [vmem:[%s2452 + $0x19] sm:$0xff]
        %v2616 = vld [vmem:[%s2452 + $0x21] sm:$0xff]
        %v2617 = vld [vmem:[%s2452 + $0x31] sm:$0xff]
        %v2618 = vld [vmem:[%s2452 + $0x39] sm:$0xff]
        %v2619 = vld [vmem:[%s2452 + $0x49] sm:$0xff]
        %v2620 = vld [vmem:[%s2452 + $0x51] sm:$0xff]
        %v2621 = vld [vmem:[%s2452 + $0x61] sm:$0xff]
        %v2622 = vld [vmem:[%s2452 + $0x69] sm:$0xff]
        %v2623 = vld [vmem:[%s2452 + $0x79] sm:$0xff]
        %v2624 = vld [vmem:[%s2452 + $0x81] sm:$0xff]
        %v2625 = vld [vmem:[%s2452 + $0x91] sm:$0xff]
        %v2626 = vld [vmem:[%s2452 + $0x99] sm:$0xff]
        %v2627 = vld [vmem:[%s2452 + $0xa9] sm:$0xff]
        %v2628 = vld [vmem:[%s2452 + $0xb1] sm:$0xff]
        %v2629 = vld [vmem:[%s2452 + $0xc1] sm:$0xff]
        %v2630 = vld [vmem:[%s2452 + $0xc9] sm:$0xff]
        %v2631 = vld [vmem:[%s2452 + $0xd9] sm:$0xff]
        %v2632 = vld [vmem:[%s2452 + $0xe1] sm:$0xff]
        %v2633 = vld [vmem:[%s2452 + $0xf1] sm:$0xff]
        %v2634 = vld [vmem:[%s2452 + $0xf9] sm:$0xff]
        %v2635 = vld [vmem:[%s2452 + $0x109] sm:$0xff]
        %v2636 = vld [vmem:[%s2452 + $0x111] sm:$0xff]
        %v2637 = vld [vmem:[%s2452 + $0x121] sm:$0xff]
        %v2638 = vld [vmem:[%s2452 + $0x129] sm:$0xff]
        %v2639 = vld [vmem:[%s2452 + $0x139] sm:$0xff]
        %v2640 = vld [vmem:[%s2452 + $0x141] sm:$0xff]
        %v2641 = vld [vmem:[%s2452 + $0x151] sm:$0xff]
        %v2642 = vld [vmem:[%s2452 + $0x159] sm:$0xff]
        %v2643 = vld [vmem:[%s2452 + $0x169] sm:$0xff]
        %v2644 = vld [vmem:[%s2452 + $0x171] sm:$0xff]
        %v2645 = vld [vmem:[%s2452 + $0x2] sm:$0xff]
        %v2646 = vld [vmem:[%s2452 + $0xa] sm:$0xff]
        %v2647 = vld [vmem:[%s2452 + $0x1a] sm:$0xff]
        %v2648 = vld [vmem:[%s2452 + $0x22] sm:$0xff]
        %v2649 = vld [vmem:[%s2452 + $0x32] sm:$0xff]
        %v2650 = vld [vmem:[%s2452 + $0x3a] sm:$0xff]
        %v2651 = vld [vmem:[%s2452 + $0x4a] sm:$0xff]
        %v2652 = vld [vmem:[%s2452 + $0x52] sm:$0xff]
        %v2653 = vld [vmem:[%s2452 + $0x62] sm:$0xff]
        %v2654 = vld [vmem:[%s2452 + $0x6a] sm:$0xff]
        %v2655 = vld [vmem:[%s2452 + $0x7a] sm:$0xff]
        %v2656 = vld [vmem:[%s2452 + $0x82] sm:$0xff]
        %v2657 = vld [vmem:[%s2452 + $0x92] sm:$0xff]
        %v2658 = vld [vmem:[%s2452 + $0x9a] sm:$0xff]
        %v2659 = vld [vmem:[%s2452 + $0xaa] sm:$0xff]
        %v2660 = vld [vmem:[%s2452 + $0xb2] sm:$0xff]
        %v2661 = vld [vmem:[%s2452 + $0xc2] sm:$0xff]
        %v2662 = vld [vmem:[%s2452 + $0xca] sm:$0xff]
        %v2663 = vld [vmem:[%s2452 + $0xda] sm:$0xff]
        %v2664 = vld [vmem:[%s2452 + $0xe2] sm:$0xff]
        %v2665 = vld [vmem:[%s2452 + $0xf2] sm:$0xff]
        %v2666 = vld [vmem:[%s2452 + $0xfa] sm:$0xff]
        %v2667 = vld [vmem:[%s2452 + $0x10a] sm:$0xff]
        %v2668 = vld [vmem:[%s2452 + $0x112] sm:$0xff]
        %v2669 = vld [vmem:[%s2452 + $0x122] sm:$0xff]
        %v2670 = vld [vmem:[%s2452 + $0x12a] sm:$0xff]
        %v2671 = vld [vmem:[%s2452 + $0x13a] sm:$0xff]
        %v2672 = vld [vmem:[%s2452 + $0x142] sm:$0xff]
        %v2673 = vld [vmem:[%s2452 + $0x152] sm:$0xff]
        %v2674 = vld [vmem:[%s2452 + $0x15a] sm:$0xff]
        %v2675 = vld [vmem:[%s2452 + $0x16a] sm:$0xff]
        %v2676 = vld [vmem:[%s2452 + $0x172] sm:$0xff]
        %s2677 = scalar_lea.vmem [#allocation3], 48
        %v2678 = vld [vmem:[%s2677] sm:$0xff]
        %v2679 = vld [vmem:[%s2677 + $0x8] sm:$0xff]
        %v2680 = vld [vmem:[%s2677 + $0x18] sm:$0xff]
        %v2681 = vld [vmem:[%s2677 + $0x20] sm:$0xff]
        %v2682 = vld [vmem:[%s2677 + $0x30] sm:$0xff]
        %v2683 = vld [vmem:[%s2677 + $0x38] sm:$0xff]
        %v2684 = vld [vmem:[%s2677 + $0x48] sm:$0xff]
        %v2685 = vld [vmem:[%s2677 + $0x50] sm:$0xff]
        %v2686 = vld [vmem:[%s2677 + $0x60] sm:$0xff]
        %v2687 = vld [vmem:[%s2677 + $0x68] sm:$0xff]
        %v2688 = vld [vmem:[%s2677 + $0x78] sm:$0xff]
        %v2689 = vld [vmem:[%s2677 + $0x80] sm:$0xff]
        %v2690 = vld [vmem:[%s2677 + $0x90] sm:$0xff]
        %v2691 = vld [vmem:[%s2677 + $0x98] sm:$0xff]
        %v2692 = vld [vmem:[%s2677 + $0xa8] sm:$0xff]
        %v2693 = vld [vmem:[%s2677 + $0xb0] sm:$0xff]
        %v2694 = vld [vmem:[%s2677 + $0xc0] sm:$0xff]
        %v2695 = vld [vmem:[%s2677 + $0xc8] sm:$0xff]
        %v2696 = vld [vmem:[%s2677 + $0xd8] sm:$0xff]
        %v2697 = vld [vmem:[%s2677 + $0xe0] sm:$0xff]
        %v2698 = vld [vmem:[%s2677 + $0xf0] sm:$0xff]
        %v2699 = vld [vmem:[%s2677 + $0xf8] sm:$0xff]
        %v2700 = vld [vmem:[%s2677 + $0x108] sm:$0xff]
        %v2701 = vld [vmem:[%s2677 + $0x110] sm:$0xff]
        %v2702 = vld [vmem:[%s2677 + $0x120] sm:$0xff]
        %v2703 = vld [vmem:[%s2677 + $0x128] sm:$0xff]
        %v2704 = vld [vmem:[%s2677 + $0x138] sm:$0xff]
        %v2705 = vld [vmem:[%s2677 + $0x140] sm:$0xff]
        %v2706 = vld [vmem:[%s2677 + $0x150] sm:$0xff]
        %v2707 = vld [vmem:[%s2677 + $0x158] sm:$0xff]
        %v2708 = vld [vmem:[%s2677 + $0x168] sm:$0xff]
        %v2709 = vld [vmem:[%s2677 + $0x170] sm:$0xff]
        %v2710 = vld [vmem:[%s2677 + $0x1] sm:$0xff]
        %v2711 = vld [vmem:[%s2677 + $0x9] sm:$0xff]
        %v2712 = vld [vmem:[%s2677 + $0x19] sm:$0xff]
        %v2713 = vld [vmem:[%s2677 + $0x21] sm:$0xff]
        %v2714 = vld [vmem:[%s2677 + $0x31] sm:$0xff]
        %v2715 = vld [vmem:[%s2677 + $0x39] sm:$0xff]
        %v2716 = vld [vmem:[%s2677 + $0x49] sm:$0xff]
        %v2717 = vld [vmem:[%s2677 + $0x51] sm:$0xff]
        %v2718 = vld [vmem:[%s2677 + $0x61] sm:$0xff]
        %v2719 = vld [vmem:[%s2677 + $0x69] sm:$0xff]
        %v2720 = vld [vmem:[%s2677 + $0x79] sm:$0xff]
        %v2721 = vld [vmem:[%s2677 + $0x81] sm:$0xff]
        %v2722 = vld [vmem:[%s2677 + $0x91] sm:$0xff]
        %v2723 = vld [vmem:[%s2677 + $0x99] sm:$0xff]
        %v2724 = vld [vmem:[%s2677 + $0xa9] sm:$0xff]
        %v2725 = vld [vmem:[%s2677 + $0xb1] sm:$0xff]
        %v2726 = vld [vmem:[%s2677 + $0xc1] sm:$0xff]
        %v2727 = vld [vmem:[%s2677 + $0xc9] sm:$0xff]
        %v2728 = vld [vmem:[%s2677 + $0xd9] sm:$0xff]
        %v2729 = vld [vmem:[%s2677 + $0xe1] sm:$0xff]
        %v2730 = vld [vmem:[%s2677 + $0xf1] sm:$0xff]
        %v2731 = vld [vmem:[%s2677 + $0xf9] sm:$0xff]
        %v2732 = vld [vmem:[%s2677 + $0x109] sm:$0xff]
        %v2733 = vld [vmem:[%s2677 + $0x111] sm:$0xff]
        %v2734 = vld [vmem:[%s2677 + $0x121] sm:$0xff]
        %v2735 = vld [vmem:[%s2677 + $0x129] sm:$0xff]
        %v2736 = vld [vmem:[%s2677 + $0x139] sm:$0xff]
        %v2737 = vld [vmem:[%s2677 + $0x141] sm:$0xff]
        %v2738 = vld [vmem:[%s2677 + $0x151] sm:$0xff]
        %v2739 = vld [vmem:[%s2677 + $0x159] sm:$0xff]
        %v2740 = vld [vmem:[%s2677 + $0x169] sm:$0xff]
        %v2741 = vld [vmem:[%s2677 + $0x171] sm:$0xff]
        %v2742 = vld [vmem:[%s2677 + $0x2] sm:$0xff]
        %v2743 = vld [vmem:[%s2677 + $0xa] sm:$0xff]
        %v2744 = vld [vmem:[%s2677 + $0x1a] sm:$0xff]
        %v2745 = vld [vmem:[%s2677 + $0x22] sm:$0xff]
        %v2746 = vld [vmem:[%s2677 + $0x32] sm:$0xff]
        %v2747 = vld [vmem:[%s2677 + $0x3a] sm:$0xff]
        %v2748 = vld [vmem:[%s2677 + $0x4a] sm:$0xff]
        %v2749 = vld [vmem:[%s2677 + $0x52] sm:$0xff]
        %v2750 = vld [vmem:[%s2677 + $0x62] sm:$0xff]
        %v2751 = vld [vmem:[%s2677 + $0x6a] sm:$0xff]
        %v2752 = vld [vmem:[%s2677 + $0x7a] sm:$0xff]
        %v2753 = vld [vmem:[%s2677 + $0x82] sm:$0xff]
        %v2754 = vld [vmem:[%s2677 + $0x92] sm:$0xff]
        %v2755 = vld [vmem:[%s2677 + $0x9a] sm:$0xff]
        %v2756 = vld [vmem:[%s2677 + $0xaa] sm:$0xff]
        %v2757 = vld [vmem:[%s2677 + $0xb2] sm:$0xff]
        %v2758 = vld [vmem:[%s2677 + $0xc2] sm:$0xff]
        %v2759 = vld [vmem:[%s2677 + $0xca] sm:$0xff]
        %v2760 = vld [vmem:[%s2677 + $0xda] sm:$0xff]
        %v2761 = vld [vmem:[%s2677 + $0xe2] sm:$0xff]
        %v2762 = vld [vmem:[%s2677 + $0xf2] sm:$0xff]
        %v2763 = vld [vmem:[%s2677 + $0xfa] sm:$0xff]
        %v2764 = vld [vmem:[%s2677 + $0x10a] sm:$0xff]
        %v2765 = vld [vmem:[%s2677 + $0x112] sm:$0xff]
        %v2766 = vld [vmem:[%s2677 + $0x122] sm:$0xff]
        %v2767 = vld [vmem:[%s2677 + $0x12a] sm:$0xff]
        %v2768 = vld [vmem:[%s2677 + $0x13a] sm:$0xff]
        %v2769 = vld [vmem:[%s2677 + $0x142] sm:$0xff]
        %v2770 = vld [vmem:[%s2677 + $0x152] sm:$0xff]
        %v2771 = vld [vmem:[%s2677 + $0x15a] sm:$0xff]
        %v2772 = vld [vmem:[%s2677 + $0x16a] sm:$0xff]
        %v2773 = vld [vmem:[%s2677 + $0x172] sm:$0xff]
        %2806 = vrot.lane.b32.xlu0 %v2517, 8
        %v2807 = vpop.permute.xlu0 %2806
        %2808 = vrot.lane.b32.xlu0 %v2518, 8
        %v2809 = vpop.permute.xlu0 %2808
        %2810 = vrot.lane.b32.xlu0 %v2519, 8
        %v2811 = vpop.permute.xlu0 %2810
        %2812 = vrot.lane.b32.xlu0 %v2520, 8
        %v2813 = vpop.permute.xlu0 %2812
        %2814 = vrot.lane.b32.xlu0 %v2521, 8
        %v2815 = vpop.permute.xlu0 %2814
        %2816 = vrot.lane.b32.xlu0 %v2522, 8
        %v2817 = vpop.permute.xlu0 %2816
        %2818 = vrot.lane.b32.xlu0 %v2523, 8
        %v2819 = vpop.permute.xlu0 %2818
        %2820 = vrot.lane.b32.xlu0 %v2524, 8
        %v2821 = vpop.permute.xlu0 %2820
        %2822 = vrot.lane.b32.xlu0 %v2525, 8
        %v2823 = vpop.permute.xlu0 %2822
        %2824 = vrot.lane.b32.xlu0 %v2526, 8
        %v2825 = vpop.permute.xlu0 %2824
        %2826 = vrot.lane.b32.xlu0 %v2527, 8
        %v2827 = vpop.permute.xlu0 %2826
        %2828 = vrot.lane.b32.xlu0 %v2528, 8
        %v2829 = vpop.permute.xlu0 %2828
        %2830 = vrot.lane.b32.xlu0 %v2529, 8
        %v2831 = vpop.permute.xlu0 %2830
        %2832 = vrot.lane.b32.xlu0 %v2530, 8
        %v2833 = vpop.permute.xlu0 %2832
        %2834 = vrot.lane.b32.xlu0 %v2531, 8
        %v2835 = vpop.permute.xlu0 %2834
        %2836 = vrot.lane.b32.xlu0 %v2532, 8
        %v2837 = vpop.permute.xlu0 %2836
        %2838 = vrot.lane.b32.xlu0 %v2533, 8
        %v2839 = vpop.permute.xlu0 %2838
        %2840 = vrot.lane.b32.xlu0 %v2534, 8
        %v2841 = vpop.permute.xlu0 %2840
        %2842 = vrot.lane.b32.xlu0 %v2535, 8
        %v2843 = vpop.permute.xlu0 %2842
        %2844 = vrot.lane.b32.xlu0 %v2536, 8
        %v2845 = vpop.permute.xlu0 %2844
        %2846 = vrot.lane.b32.xlu0 %v2537, 8
        %v2847 = vpop.permute.xlu0 %2846
        %2848 = vrot.lane.b32.xlu0 %v2538, 8
        %v2849 = vpop.permute.xlu0 %2848
        %2850 = vrot.lane.b32.xlu0 %v2539, 8
        %v2851 = vpop.permute.xlu0 %2850
        %2852 = vrot.lane.b32.xlu0 %v2540, 8
        %v2853 = vpop.permute.xlu0 %2852
        %2854 = vrot.lane.b32.xlu0 %v2541, 8
        %v2855 = vpop.permute.xlu0 %2854
        %2856 = vrot.lane.b32.xlu0 %v2542, 8
        %v2857 = vpop.permute.xlu0 %2856
        %2858 = vrot.lane.b32.xlu0 %v2543, 8
        %v2859 = vpop.permute.xlu0 %2858
        %2860 = vrot.lane.b32.xlu0 %v2544, 8
        %v2861 = vpop.permute.xlu0 %2860
        %2862 = vrot.lane.b32.xlu0 %v2545, 8
        %v2863 = vpop.permute.xlu0 %2862
        %2864 = vrot.lane.b32.xlu0 %v2546, 8
        %v2865 = vpop.permute.xlu0 %2864
        %2866 = vrot.lane.b32.xlu0 %v2547, 8
        %v2867 = vpop.permute.xlu0 %2866
        %2868 = vrot.lane.b32.xlu0 %v2548, 8
        %v2869 = vpop.permute.xlu0 %2868
        %2934 = vrot.lane.b32.xlu0 %v2549, 16
        %v2935 = vpop.permute.xlu0 %2934
        %2936 = vrot.lane.b32.xlu0 %v2550, 16
        %v2937 = vpop.permute.xlu0 %2936
        %2938 = vrot.lane.b32.xlu0 %v2551, 16
        %v2939 = vpop.permute.xlu0 %2938
        %2940 = vrot.lane.b32.xlu0 %v2552, 16
        %v2941 = vpop.permute.xlu0 %2940
        %2942 = vrot.lane.b32.xlu0 %v2553, 16
        %v2943 = vpop.permute.xlu0 %2942
        %2944 = vrot.lane.b32.xlu0 %v2554, 16
        %v2945 = vpop.permute.xlu0 %2944
        %2946 = vrot.lane.b32.xlu0 %v2555, 16
        %v2947 = vpop.permute.xlu0 %2946
        %2948 = vrot.lane.b32.xlu0 %v2556, 16
        %v2949 = vpop.permute.xlu0 %2948
        %2950 = vrot.lane.b32.xlu0 %v2557, 16
        %v2951 = vpop.permute.xlu0 %2950
        %2952 = vrot.lane.b32.xlu0 %v2558, 16
        %v2953 = vpop.permute.xlu0 %2952
        %2954 = vrot.lane.b32.xlu0 %v2559, 16
        %v2955 = vpop.permute.xlu0 %2954
        %2956 = vrot.lane.b32.xlu0 %v2560, 16
        %v2957 = vpop.permute.xlu0 %2956
        %2958 = vrot.lane.b32.xlu0 %v2561, 16
        %v2959 = vpop.permute.xlu0 %2958
        %2960 = vrot.lane.b32.xlu0 %v2562, 16
        %v2961 = vpop.permute.xlu0 %2960
        %2962 = vrot.lane.b32.xlu0 %v2563, 16
        %v2963 = vpop.permute.xlu0 %2962
        %2964 = vrot.lane.b32.xlu0 %v2564, 16
        %v2965 = vpop.permute.xlu0 %2964
        %2966 = vrot.lane.b32.xlu0 %v2565, 16
        %v2967 = vpop.permute.xlu0 %2966
        %2968 = vrot.lane.b32.xlu0 %v2566, 16
        %v2969 = vpop.permute.xlu0 %2968
        %2970 = vrot.lane.b32.xlu0 %v2567, 16
        %v2971 = vpop.permute.xlu0 %2970
        %2972 = vrot.lane.b32.xlu0 %v2568, 16
        %v2973 = vpop.permute.xlu0 %2972
        %2974 = vrot.lane.b32.xlu0 %v2569, 16
        %v2975 = vpop.permute.xlu0 %2974
        %2976 = vrot.lane.b32.xlu0 %v2570, 16
        %v2977 = vpop.permute.xlu0 %2976
        %2978 = vrot.lane.b32.xlu0 %v2571, 16
        %v2979 = vpop.permute.xlu0 %2978
        %2980 = vrot.lane.b32.xlu0 %v2572, 16
        %v2981 = vpop.permute.xlu0 %2980
        %2982 = vrot.lane.b32.xlu0 %v2573, 16
        %v2983 = vpop.permute.xlu0 %2982
        %2984 = vrot.lane.b32.xlu0 %v2574, 16
        %v2985 = vpop.permute.xlu0 %2984
        %2986 = vrot.lane.b32.xlu0 %v2575, 16
        %v2987 = vpop.permute.xlu0 %2986
        %2988 = vrot.lane.b32.xlu0 %v2576, 16
        %v2989 = vpop.permute.xlu0 %2988
        %2990 = vrot.lane.b32.xlu0 %v2577, 16
        %v2991 = vpop.permute.xlu0 %2990
        %2992 = vrot.lane.b32.xlu0 %v2578, 16
        %v2993 = vpop.permute.xlu0 %2992
        %2994 = vrot.lane.b32.xlu0 %v2579, 16
        %v2995 = vpop.permute.xlu0 %2994
        %2996 = vrot.lane.b32.xlu0 %v2580, 16
        %v2997 = vpop.permute.xlu0 %2996
        %3062 = vrot.lane.b32.xlu0 %v2581, 24
        %v3063 = vpop.permute.xlu0 %3062
        %3064 = vrot.lane.b32.xlu0 %v2582, 24
        %v3065 = vpop.permute.xlu0 %3064
        %3066 = vrot.lane.b32.xlu0 %v2583, 24
        %v3067 = vpop.permute.xlu0 %3066
        %3068 = vrot.lane.b32.xlu0 %v2584, 24
        %v3069 = vpop.permute.xlu0 %3068
        %3070 = vrot.lane.b32.xlu0 %v2585, 24
        %v3071 = vpop.permute.xlu0 %3070
        %3072 = vrot.lane.b32.xlu0 %v2586, 24
        %v3073 = vpop.permute.xlu0 %3072
        %3074 = vrot.lane.b32.xlu0 %v2587, 24
        %v3075 = vpop.permute.xlu0 %3074
        %3076 = vrot.lane.b32.xlu0 %v2588, 24
        %v3077 = vpop.permute.xlu0 %3076
        %3078 = vrot.lane.b32.xlu0 %v2589, 24
        %v3079 = vpop.permute.xlu0 %3078
        %3080 = vrot.lane.b32.xlu0 %v2590, 24
        %v3081 = vpop.permute.xlu0 %3080
        %3082 = vrot.lane.b32.xlu0 %v2591, 24
        %v3083 = vpop.permute.xlu0 %3082
        %3084 = vrot.lane.b32.xlu0 %v2592, 24
        %v3085 = vpop.permute.xlu0 %3084
        %3086 = vrot.lane.b32.xlu0 %v2593, 24
        %v3087 = vpop.permute.xlu0 %3086
        %3088 = vrot.lane.b32.xlu0 %v2594, 24
        %v3089 = vpop.permute.xlu0 %3088
        %3090 = vrot.lane.b32.xlu0 %v2595, 24
        %v3091 = vpop.permute.xlu0 %3090
        %3092 = vrot.lane.b32.xlu0 %v2596, 24
        %v3093 = vpop.permute.xlu0 %3092
        %3094 = vrot.lane.b32.xlu0 %v2597, 24
        %v3095 = vpop.permute.xlu0 %3094
        %3096 = vrot.lane.b32.xlu0 %v2598, 24
        %v3097 = vpop.permute.xlu0 %3096
        %3098 = vrot.lane.b32.xlu0 %v2599, 24
        %v3099 = vpop.permute.xlu0 %3098
        %3100 = vrot.lane.b32.xlu0 %v2600, 24
        %v3101 = vpop.permute.xlu0 %3100
        %3102 = vrot.lane.b32.xlu0 %v2601, 24
        %v3103 = vpop.permute.xlu0 %3102
        %3104 = vrot.lane.b32.xlu0 %v2602, 24
        %v3105 = vpop.permute.xlu0 %3104
        %3106 = vrot.lane.b32.xlu0 %v2603, 24
        %v3107 = vpop.permute.xlu0 %3106
        %3108 = vrot.lane.b32.xlu0 %v2604, 24
        %v3109 = vpop.permute.xlu0 %3108
        %3110 = vrot.lane.b32.xlu0 %v2605, 24
        %v3111 = vpop.permute.xlu0 %3110
        %3112 = vrot.lane.b32.xlu0 %v2606, 24
        %v3113 = vpop.permute.xlu0 %3112
        %3114 = vrot.lane.b32.xlu0 %v2607, 24
        %v3115 = vpop.permute.xlu0 %3114
        %3116 = vrot.lane.b32.xlu0 %v2608, 24
        %v3117 = vpop.permute.xlu0 %3116
        %3118 = vrot.lane.b32.xlu0 %v2609, 24
        %v3119 = vpop.permute.xlu0 %3118
        %3120 = vrot.lane.b32.xlu0 %v2610, 24
        %v3121 = vpop.permute.xlu0 %3120
        %3122 = vrot.lane.b32.xlu0 %v2611, 24
        %v3123 = vpop.permute.xlu0 %3122
        %3124 = vrot.lane.b32.xlu0 %v2612, 24
        %v3125 = vpop.permute.xlu0 %3124
        %3190 = vrot.lane.b32.xlu0 %v2613, 32
        %v3191 = vpop.permute.xlu0 %3190
        %3192 = vrot.lane.b32.xlu0 %v2614, 32
        %v3193 = vpop.permute.xlu0 %3192
        %3194 = vrot.lane.b32.xlu0 %v2615, 32
        %v3195 = vpop.permute.xlu0 %3194
        %3196 = vrot.lane.b32.xlu0 %v2616, 32
        %v3197 = vpop.permute.xlu0 %3196
        %3198 = vrot.lane.b32.xlu0 %v2617, 32
        %v3199 = vpop.permute.xlu0 %3198
        %3200 = vrot.lane.b32.xlu0 %v2618, 32
        %v3201 = vpop.permute.xlu0 %3200
        %3202 = vrot.lane.b32.xlu0 %v2619, 32
        %v3203 = vpop.permute.xlu0 %3202
        %3204 = vrot.lane.b32.xlu0 %v2620, 32
        %v3205 = vpop.permute.xlu0 %3204
        %3206 = vrot.lane.b32.xlu0 %v2621, 32
        %v3207 = vpop.permute.xlu0 %3206
        %3208 = vrot.lane.b32.xlu0 %v2622, 32
        %v3209 = vpop.permute.xlu0 %3208
        %3210 = vrot.lane.b32.xlu0 %v2623, 32
        %v3211 = vpop.permute.xlu0 %3210
        %3212 = vrot.lane.b32.xlu0 %v2624, 32
        %v3213 = vpop.permute.xlu0 %3212
        %3214 = vrot.lane.b32.xlu0 %v2625, 32
        %v3215 = vpop.permute.xlu0 %3214
        %3216 = vrot.lane.b32.xlu0 %v2626, 32
        %v3217 = vpop.permute.xlu0 %3216
        %3218 = vrot.lane.b32.xlu0 %v2627, 32
        %v3219 = vpop.permute.xlu0 %3218
        %3220 = vrot.lane.b32.xlu0 %v2628, 32
        %v3221 = vpop.permute.xlu0 %3220
        %3222 = vrot.lane.b32.xlu0 %v2629, 32
        %v3223 = vpop.permute.xlu0 %3222
        %3224 = vrot.lane.b32.xlu0 %v2630, 32
        %v3225 = vpop.permute.xlu0 %3224
        %3226 = vrot.lane.b32.xlu0 %v2631, 32
        %v3227 = vpop.permute.xlu0 %3226
        %3228 = vrot.lane.b32.xlu0 %v2632, 32
        %v3229 = vpop.permute.xlu0 %3228
        %3230 = vrot.lane.b32.xlu0 %v2633, 32
        %v3231 = vpop.permute.xlu0 %3230
        %3232 = vrot.lane.b32.xlu0 %v2634, 32
        %v3233 = vpop.permute.xlu0 %3232
        %3234 = vrot.lane.b32.xlu0 %v2635, 32
        %v3235 = vpop.permute.xlu0 %3234
        %3236 = vrot.lane.b32.xlu0 %v2636, 32
        %v3237 = vpop.permute.xlu0 %3236
        %3238 = vrot.lane.b32.xlu0 %v2637, 32
        %v3239 = vpop.permute.xlu0 %3238
        %3240 = vrot.lane.b32.xlu0 %v2638, 32
        %v3241 = vpop.permute.xlu0 %3240
        %3242 = vrot.lane.b32.xlu0 %v2639, 32
        %v3243 = vpop.permute.xlu0 %3242
        %3244 = vrot.lane.b32.xlu0 %v2640, 32
        %v3245 = vpop.permute.xlu0 %3244
        %3246 = vrot.lane.b32.xlu0 %v2641, 32
        %v3247 = vpop.permute.xlu0 %3246
        %3248 = vrot.lane.b32.xlu0 %v2642, 32
        %v3249 = vpop.permute.xlu0 %3248
        %3250 = vrot.lane.b32.xlu0 %v2643, 32
        %v3251 = vpop.permute.xlu0 %3250
        %3252 = vrot.lane.b32.xlu0 %v2644, 32
        %v3253 = vpop.permute.xlu0 %3252
        %3318 = vrot.lane.b32.xlu0 %v2645, 40
        %v3319 = vpop.permute.xlu0 %3318
        %3320 = vrot.lane.b32.xlu0 %v2646, 40
        %v3321 = vpop.permute.xlu0 %3320
        %3322 = vrot.lane.b32.xlu0 %v2647, 40
        %v3323 = vpop.permute.xlu0 %3322
        %3324 = vrot.lane.b32.xlu0 %v2648, 40
        %v3325 = vpop.permute.xlu0 %3324
        %3326 = vrot.lane.b32.xlu0 %v2649, 40
        %v3327 = vpop.permute.xlu0 %3326
        %3328 = vrot.lane.b32.xlu0 %v2650, 40
        %v3329 = vpop.permute.xlu0 %3328
        %3330 = vrot.lane.b32.xlu0 %v2651, 40
        %v3331 = vpop.permute.xlu0 %3330
        %3332 = vrot.lane.b32.xlu0 %v2652, 40
        %v3333 = vpop.permute.xlu0 %3332
        %3334 = vrot.lane.b32.xlu0 %v2653, 40
        %v3335 = vpop.permute.xlu0 %3334
        %3336 = vrot.lane.b32.xlu0 %v2654, 40
        %v3337 = vpop.permute.xlu0 %3336
        %3338 = vrot.lane.b32.xlu0 %v2655, 40
        %v3339 = vpop.permute.xlu0 %3338
        %3340 = vrot.lane.b32.xlu0 %v2656, 40
        %v3341 = vpop.permute.xlu0 %3340
        %3342 = vrot.lane.b32.xlu0 %v2657, 40
        %v3343 = vpop.permute.xlu0 %3342
        %3344 = vrot.lane.b32.xlu0 %v2658, 40
        %v3345 = vpop.permute.xlu0 %3344
        %3346 = vrot.lane.b32.xlu0 %v2659, 40
        %v3347 = vpop.permute.xlu0 %3346
        %3348 = vrot.lane.b32.xlu0 %v2660, 40
        %v3349 = vpop.permute.xlu0 %3348
        %3350 = vrot.lane.b32.xlu0 %v2661, 40
        %v3351 = vpop.permute.xlu0 %3350
        %3352 = vrot.lane.b32.xlu0 %v2662, 40
        %v3353 = vpop.permute.xlu0 %3352
        %3354 = vrot.lane.b32.xlu0 %v2663, 40
        %v3355 = vpop.permute.xlu0 %3354
        %3356 = vrot.lane.b32.xlu0 %v2664, 40
        %v3357 = vpop.permute.xlu0 %3356
        %3358 = vrot.lane.b32.xlu0 %v2665, 40
        %v3359 = vpop.permute.xlu0 %3358
        %3360 = vrot.lane.b32.xlu0 %v2666, 40
        %v3361 = vpop.permute.xlu0 %3360
        %3362 = vrot.lane.b32.xlu0 %v2667, 40
        %v3363 = vpop.permute.xlu0 %3362
        %3364 = vrot.lane.b32.xlu0 %v2668, 40
        %v3365 = vpop.permute.xlu0 %3364
        %3366 = vrot.lane.b32.xlu0 %v2669, 40
        %v3367 = vpop.permute.xlu0 %3366
        %3368 = vrot.lane.b32.xlu0 %v2670, 40
        %v3369 = vpop.permute.xlu0 %3368
        %3370 = vrot.lane.b32.xlu0 %v2671, 40
        %v3371 = vpop.permute.xlu0 %3370
        %3372 = vrot.lane.b32.xlu0 %v2672, 40
        %v3373 = vpop.permute.xlu0 %3372
        %3374 = vrot.lane.b32.xlu0 %v2673, 40
        %v3375 = vpop.permute.xlu0 %3374
        %3376 = vrot.lane.b32.xlu0 %v2674, 40
        %v3377 = vpop.permute.xlu0 %3376
        %3378 = vrot.lane.b32.xlu0 %v2675, 40
        %v3379 = vpop.permute.xlu0 %3378
        %3380 = vrot.lane.b32.xlu0 %v2676, 40
        %v3381 = vpop.permute.xlu0 %3380
        %3446 = vrot.lane.b32.xlu0 %v2678, 48
        %v3447 = vpop.permute.xlu0 %3446
        %3448 = vrot.lane.b32.xlu0 %v2679, 48
        %v3449 = vpop.permute.xlu0 %3448
        %3450 = vrot.lane.b32.xlu0 %v2680, 48
        %v3451 = vpop.permute.xlu0 %3450
        %3452 = vrot.lane.b32.xlu0 %v2681, 48
        %v3453 = vpop.permute.xlu0 %3452
        %3454 = vrot.lane.b32.xlu0 %v2682, 48
        %v3455 = vpop.permute.xlu0 %3454
        %3456 = vrot.lane.b32.xlu0 %v2683, 48
        %v3457 = vpop.permute.xlu0 %3456
        %3458 = vrot.lane.b32.xlu0 %v2684, 48
        %v3459 = vpop.permute.xlu0 %3458
        %3460 = vrot.lane.b32.xlu0 %v2685, 48
        %v3461 = vpop.permute.xlu0 %3460
        %3462 = vrot.lane.b32.xlu0 %v2686, 48
        %v3463 = vpop.permute.xlu0 %3462
        %3464 = vrot.lane.b32.xlu0 %v2687, 48
        %v3465 = vpop.permute.xlu0 %3464
        %3466 = vrot.lane.b32.xlu0 %v2688, 48
        %v3467 = vpop.permute.xlu0 %3466
        %3468 = vrot.lane.b32.xlu0 %v2689, 48
        %v3469 = vpop.permute.xlu0 %3468
        %3470 = vrot.lane.b32.xlu0 %v2690, 48
        %v3471 = vpop.permute.xlu0 %3470
        %3472 = vrot.lane.b32.xlu0 %v2691, 48
        %v3473 = vpop.permute.xlu0 %3472
        %3474 = vrot.lane.b32.xlu0 %v2692, 48
        %v3475 = vpop.permute.xlu0 %3474
        %3476 = vrot.lane.b32.xlu0 %v2693, 48
        %v3477 = vpop.permute.xlu0 %3476
        %3478 = vrot.lane.b32.xlu0 %v2694, 48
        %v3479 = vpop.permute.xlu0 %3478
        %3480 = vrot.lane.b32.xlu0 %v2695, 48
        %v3481 = vpop.permute.xlu0 %3480
        %3482 = vrot.lane.b32.xlu0 %v2696, 48
        %v3483 = vpop.permute.xlu0 %3482
        %3484 = vrot.lane.b32.xlu0 %v2697, 48
        %v3485 = vpop.permute.xlu0 %3484
        %3486 = vrot.lane.b32.xlu0 %v2698, 48
        %v3487 = vpop.permute.xlu0 %3486
        %3488 = vrot.lane.b32.xlu0 %v2699, 48
        %v3489 = vpop.permute.xlu0 %3488
        %3490 = vrot.lane.b32.xlu0 %v2700, 48
        %v3491 = vpop.permute.xlu0 %3490
        %3492 = vrot.lane.b32.xlu0 %v2701, 48
        %v3493 = vpop.permute.xlu0 %3492
        %3494 = vrot.lane.b32.xlu0 %v2702, 48
        %v3495 = vpop.permute.xlu0 %3494
        %3496 = vrot.lane.b32.xlu0 %v2703, 48
        %v3497 = vpop.permute.xlu0 %3496
        %3498 = vrot.lane.b32.xlu0 %v2704, 48
        %v3499 = vpop.permute.xlu0 %3498
        %3500 = vrot.lane.b32.xlu0 %v2705, 48
        %v3501 = vpop.permute.xlu0 %3500
        %3502 = vrot.lane.b32.xlu0 %v2706, 48
        %v3503 = vpop.permute.xlu0 %3502
        %3504 = vrot.lane.b32.xlu0 %v2707, 48
        %v3505 = vpop.permute.xlu0 %3504
        %3506 = vrot.lane.b32.xlu0 %v2708, 48
        %v3507 = vpop.permute.xlu0 %3506
        %3508 = vrot.lane.b32.xlu0 %v2709, 48
        %v3509 = vpop.permute.xlu0 %3508
        %3574 = vrot.lane.b32.xlu0 %v2710, 56
        %v3575 = vpop.permute.xlu0 %3574
        %3576 = vrot.lane.b32.xlu0 %v2711, 56
        %v3577 = vpop.permute.xlu0 %3576
        %3578 = vrot.lane.b32.xlu0 %v2712, 56
        %v3579 = vpop.permute.xlu0 %3578
        %3580 = vrot.lane.b32.xlu0 %v2713, 56
        %v3581 = vpop.permute.xlu0 %3580
        %3582 = vrot.lane.b32.xlu0 %v2714, 56
        %v3583 = vpop.permute.xlu0 %3582
        %3584 = vrot.lane.b32.xlu0 %v2715, 56
        %v3585 = vpop.permute.xlu0 %3584
        %3586 = vrot.lane.b32.xlu0 %v2716, 56
        %v3587 = vpop.permute.xlu0 %3586
        %3588 = vrot.lane.b32.xlu0 %v2717, 56
        %v3589 = vpop.permute.xlu0 %3588
        %3590 = vrot.lane.b32.xlu0 %v2718, 56
        %v3591 = vpop.permute.xlu0 %3590
        %3592 = vrot.lane.b32.xlu0 %v2719, 56
        %v3593 = vpop.permute.xlu0 %3592
        %3594 = vrot.lane.b32.xlu0 %v2720, 56
        %v3595 = vpop.permute.xlu0 %3594
        %3596 = vrot.lane.b32.xlu0 %v2721, 56
        %v3597 = vpop.permute.xlu0 %3596
        %3598 = vrot.lane.b32.xlu0 %v2722, 56
        %v3599 = vpop.permute.xlu0 %3598
        %3600 = vrot.lane.b32.xlu0 %v2723, 56
        %v3601 = vpop.permute.xlu0 %3600
        %3602 = vrot.lane.b32.xlu0 %v2724, 56
        %v3603 = vpop.permute.xlu0 %3602
        %3604 = vrot.lane.b32.xlu0 %v2725, 56
        %v3605 = vpop.permute.xlu0 %3604
        %3606 = vrot.lane.b32.xlu0 %v2726, 56
        %v3607 = vpop.permute.xlu0 %3606
        %3608 = vrot.lane.b32.xlu0 %v2727, 56
        %v3609 = vpop.permute.xlu0 %3608
        %3610 = vrot.lane.b32.xlu0 %v2728, 56
        %v3611 = vpop.permute.xlu0 %3610
        %3612 = vrot.lane.b32.xlu0 %v2729, 56
        %v3613 = vpop.permute.xlu0 %3612
        %3614 = vrot.lane.b32.xlu0 %v2730, 56
        %v3615 = vpop.permute.xlu0 %3614
        %3616 = vrot.lane.b32.xlu0 %v2731, 56
        %v3617 = vpop.permute.xlu0 %3616
        %3618 = vrot.lane.b32.xlu0 %v2732, 56
        %v3619 = vpop.permute.xlu0 %3618
        %3620 = vrot.lane.b32.xlu0 %v2733, 56
        %v3621 = vpop.permute.xlu0 %3620
        %3622 = vrot.lane.b32.xlu0 %v2734, 56
        %v3623 = vpop.permute.xlu0 %3622
        %3624 = vrot.lane.b32.xlu0 %v2735, 56
        %v3625 = vpop.permute.xlu0 %3624
        %3626 = vrot.lane.b32.xlu0 %v2736, 56
        %v3627 = vpop.permute.xlu0 %3626
        %3628 = vrot.lane.b32.xlu0 %v2737, 56
        %v3629 = vpop.permute.xlu0 %3628
        %3630 = vrot.lane.b32.xlu0 %v2738, 56
        %v3631 = vpop.permute.xlu0 %3630
        %3632 = vrot.lane.b32.xlu0 %v2739, 56
        %v3633 = vpop.permute.xlu0 %3632
        %3634 = vrot.lane.b32.xlu0 %v2740, 56
        %v3635 = vpop.permute.xlu0 %3634
        %3636 = vrot.lane.b32.xlu0 %v2741, 56
        %v3637 = vpop.permute.xlu0 %3636
        %3702 = vrot.lane.b32.xlu0 %v2742, 64
        %v3703 = vpop.permute.xlu0 %3702
        %3704 = vrot.lane.b32.xlu0 %v2743, 64
        %v3705 = vpop.permute.xlu0 %3704
        %3706 = vrot.lane.b32.xlu0 %v2744, 64
        %v3707 = vpop.permute.xlu0 %3706
        %3708 = vrot.lane.b32.xlu0 %v2745, 64
        %v3709 = vpop.permute.xlu0 %3708
        %3710 = vrot.lane.b32.xlu0 %v2746, 64
        %v3711 = vpop.permute.xlu0 %3710
        %3712 = vrot.lane.b32.xlu0 %v2747, 64
        %v3713 = vpop.permute.xlu0 %3712
        %3714 = vrot.lane.b32.xlu0 %v2748, 64
        %v3715 = vpop.permute.xlu0 %3714
        %3716 = vrot.lane.b32.xlu0 %v2749, 64
        %v3717 = vpop.permute.xlu0 %3716
        %3718 = vrot.lane.b32.xlu0 %v2750, 64
        %v3719 = vpop.permute.xlu0 %3718
        %3720 = vrot.lane.b32.xlu0 %v2751, 64
        %v3721 = vpop.permute.xlu0 %3720
        %3722 = vrot.lane.b32.xlu0 %v2752, 64
        %v3723 = vpop.permute.xlu0 %3722
        %3724 = vrot.lane.b32.xlu0 %v2753, 64
        %v3725 = vpop.permute.xlu0 %3724
        %3726 = vrot.lane.b32.xlu0 %v2754, 64
        %v3727 = vpop.permute.xlu0 %3726
        %3728 = vrot.lane.b32.xlu0 %v2755, 64
        %v3729 = vpop.permute.xlu0 %3728
        %3730 = vrot.lane.b32.xlu0 %v2756, 64
        %v3731 = vpop.permute.xlu0 %3730
        %3732 = vrot.lane.b32.xlu0 %v2757, 64
        %v3733 = vpop.permute.xlu0 %3732
        %3734 = vrot.lane.b32.xlu0 %v2758, 64
        %v3735 = vpop.permute.xlu0 %3734
        %3736 = vrot.lane.b32.xlu0 %v2759, 64
        %v3737 = vpop.permute.xlu0 %3736
        %3738 = vrot.lane.b32.xlu0 %v2760, 64
        %v3739 = vpop.permute.xlu0 %3738
        %3740 = vrot.lane.b32.xlu0 %v2761, 64
        %v3741 = vpop.permute.xlu0 %3740
        %3742 = vrot.lane.b32.xlu0 %v2762, 64
        %v3743 = vpop.permute.xlu0 %3742
        %3744 = vrot.lane.b32.xlu0 %v2763, 64
        %v3745 = vpop.permute.xlu0 %3744
        %3746 = vrot.lane.b32.xlu0 %v2764, 64
        %v3747 = vpop.permute.xlu0 %3746
        %3748 = vrot.lane.b32.xlu0 %v2765, 64
        %v3749 = vpop.permute.xlu0 %3748
        %3750 = vrot.lane.b32.xlu0 %v2766, 64
        %v3751 = vpop.permute.xlu0 %3750
        %3752 = vrot.lane.b32.xlu0 %v2767, 64
        %v3753 = vpop.permute.xlu0 %3752
        %3754 = vrot.lane.b32.xlu0 %v2768, 64
        %v3755 = vpop.permute.xlu0 %3754
        %3756 = vrot.lane.b32.xlu0 %v2769, 64
        %v3757 = vpop.permute.xlu0 %3756
        %3758 = vrot.lane.b32.xlu0 %v2770, 64
        %v3759 = vpop.permute.xlu0 %3758
        %3760 = vrot.lane.b32.xlu0 %v2771, 64
        %v3761 = vpop.permute.xlu0 %3760
        %3762 = vrot.lane.b32.xlu0 %v2772, 64
        %v3763 = vpop.permute.xlu0 %3762
        %3764 = vrot.lane.b32.xlu0 %v2773, 64
        %v3765 = vpop.permute.xlu0 %3764
        %v3798 = vsel %vm1796, %v2485, %v2807
        %v3799 = vsel %vm1796, %v2486, %v2809
        %v3800 = vsel %vm1796, %v2487, %v2811
        %v3801 = vsel %vm1796, %v2488, %v2813
        %v3802 = vsel %vm1796, %v2489, %v2815
        %v3803 = vsel %vm1796, %v2490, %v2817
        %v3804 = vsel %vm1796, %v2491, %v2819
        %v3805 = vsel %vm1796, %v2492, %v2821
        %v3806 = vsel %vm1796, %v2493, %v2823
        %v3807 = vsel %vm1796, %v2494, %v2825
        %v3808 = vsel %vm1796, %v2495, %v2827
        %v3809 = vsel %vm1796, %v2496, %v2829
        %v3810 = vsel %vm1796, %v2497, %v2831
        %v3811 = vsel %vm1796, %v2498, %v2833
        %v3812 = vsel %vm1796, %v2499, %v2835
        %v3813 = vsel %vm1796, %v2500, %v2837
        %v3814 = vsel %vm1796, %v2501, %v2839
        %v3815 = vsel %vm1796, %v2502, %v2841
        %v3816 = vsel %vm1796, %v2503, %v2843
        %v3817 = vsel %vm1796, %v2504, %v2845
        %v3818 = vsel %vm1796, %v2505, %v2847
        %v3819 = vsel %vm1796, %v2506, %v2849
        %v3820 = vsel %vm1796, %v2507, %v2851
        %v3821 = vsel %vm1796, %v2508, %v2853
        %v3822 = vsel %vm1796, %v2509, %v2855
        %v3823 = vsel %vm1796, %v2510, %v2857
        %v3824 = vsel %vm1796, %v2511, %v2859
        %v3825 = vsel %vm1796, %v2512, %v2861
        %v3826 = vsel %vm1796, %v2513, %v2863
        %v3827 = vsel %vm1796, %v2514, %v2865
        %v3828 = vsel %vm1796, %v2515, %v2867
        %v3829 = vsel %vm1796, %v2516, %v2869
        %v3830 = vsel %vm1862, %v3798, %v2935
        %v3831 = vsel %vm1862, %v3799, %v2937
        %v3832 = vsel %vm1862, %v3800, %v2939
        %v3833 = vsel %vm1862, %v3801, %v2941
        %v3834 = vsel %vm1862, %v3802, %v2943
        %v3835 = vsel %vm1862, %v3803, %v2945
        %v3836 = vsel %vm1862, %v3804, %v2947
        %v3837 = vsel %vm1862, %v3805, %v2949
        %v3838 = vsel %vm1862, %v3806, %v2951
        %v3839 = vsel %vm1862, %v3807, %v2953
        %v3840 = vsel %vm1862, %v3808, %v2955
        %v3841 = vsel %vm1862, %v3809, %v2957
        %v3842 = vsel %vm1862, %v3810, %v2959
        %v3843 = vsel %vm1862, %v3811, %v2961
        %v3844 = vsel %vm1862, %v3812, %v2963
        %v3845 = vsel %vm1862, %v3813, %v2965
        %v3846 = vsel %vm1862, %v3814, %v2967
        %v3847 = vsel %vm1862, %v3815, %v2969
        %v3848 = vsel %vm1862, %v3816, %v2971
        %v3849 = vsel %vm1862, %v3817, %v2973
        %v3850 = vsel %vm1862, %v3818, %v2975
        %v3851 = vsel %vm1862, %v3819, %v2977
        %v3852 = vsel %vm1862, %v3820, %v2979
        %v3853 = vsel %vm1862, %v3821, %v2981
        %v3854 = vsel %vm1862, %v3822, %v2983
        %v3855 = vsel %vm1862, %v3823, %v2985
        %v3856 = vsel %vm1862, %v3824, %v2987
        %v3857 = vsel %vm1862, %v3825, %v2989
        %v3858 = vsel %vm1862, %v3826, %v2991
        %v3859 = vsel %vm1862, %v3827, %v2993
        %v3860 = vsel %vm1862, %v3828, %v2995
        %v3861 = vsel %vm1862, %v3829, %v2997
        %v3862 = vsel %vm1928, %v3830, %v3063
        %v3863 = vsel %vm1928, %v3831, %v3065
        %v3864 = vsel %vm1928, %v3832, %v3067
        %v3865 = vsel %vm1928, %v3833, %v3069
        %v3866 = vsel %vm1928, %v3834, %v3071
        %v3867 = vsel %vm1928, %v3835, %v3073
        %v3868 = vsel %vm1928, %v3836, %v3075
        %v3869 = vsel %vm1928, %v3837, %v3077
        %v3870 = vsel %vm1928, %v3838, %v3079
        %v3871 = vsel %vm1928, %v3839, %v3081
        %v3872 = vsel %vm1928, %v3840, %v3083
        %v3873 = vsel %vm1928, %v3841, %v3085
        %v3874 = vsel %vm1928, %v3842, %v3087
        %v3875 = vsel %vm1928, %v3843, %v3089
        %v3876 = vsel %vm1928, %v3844, %v3091
        %v3877 = vsel %vm1928, %v3845, %v3093
        %v3878 = vsel %vm1928, %v3846, %v3095
        %v3879 = vsel %vm1928, %v3847, %v3097
        %v3880 = vsel %vm1928, %v3848, %v3099
        %v3881 = vsel %vm1928, %v3849, %v3101
        %v3882 = vsel %vm1928, %v3850, %v3103
        %v3883 = vsel %vm1928, %v3851, %v3105
        %v3884 = vsel %vm1928, %v3852, %v3107
        %v3885 = vsel %vm1928, %v3853, %v3109
        %v3886 = vsel %vm1928, %v3854, %v3111
        %v3887 = vsel %vm1928, %v3855, %v3113
        %v3888 = vsel %vm1928, %v3856, %v3115
        %v3889 = vsel %vm1928, %v3857, %v3117
        %v3890 = vsel %vm1928, %v3858, %v3119
        %v3891 = vsel %vm1928, %v3859, %v3121
        %v3892 = vsel %vm1928, %v3860, %v3123
        %v3893 = vsel %vm1928, %v3861, %v3125
        %v3894 = vsel %vm1994, %v3862, %v3191
        %v3895 = vsel %vm1994, %v3863, %v3193
        %v3896 = vsel %vm1994, %v3864, %v3195
        %v3897 = vsel %vm1994, %v3865, %v3197
        %v3898 = vsel %vm1994, %v3866, %v3199
        %v3899 = vsel %vm1994, %v3867, %v3201
        %v3900 = vsel %vm1994, %v3868, %v3203
        %v3901 = vsel %vm1994, %v3869, %v3205
        %v3902 = vsel %vm1994, %v3870, %v3207
        %v3903 = vsel %vm1994, %v3871, %v3209
        %v3904 = vsel %vm1994, %v3872, %v3211
        %v3905 = vsel %vm1994, %v3873, %v3213
        %v3906 = vsel %vm1994, %v3874, %v3215
        %v3907 = vsel %vm1994, %v3875, %v3217
        %v3908 = vsel %vm1994, %v3876, %v3219
        %v3909 = vsel %vm1994, %v3877, %v3221
        %v3910 = vsel %vm1994, %v3878, %v3223
        %v3911 = vsel %vm1994, %v3879, %v3225
        %v3912 = vsel %vm1994, %v3880, %v3227
        %v3913 = vsel %vm1994, %v3881, %v3229
        %v3914 = vsel %vm1994, %v3882, %v3231
        %v3915 = vsel %vm1994, %v3883, %v3233
        %v3916 = vsel %vm1994, %v3884, %v3235
        %v3917 = vsel %vm1994, %v3885, %v3237
        %v3918 = vsel %vm1994, %v3886, %v3239
        %v3919 = vsel %vm1994, %v3887, %v3241
        %v3920 = vsel %vm1994, %v3888, %v3243
        %v3921 = vsel %vm1994, %v3889, %v3245
        %v3922 = vsel %vm1994, %v3890, %v3247
        %v3923 = vsel %vm1994, %v3891, %v3249
        %v3924 = vsel %vm1994, %v3892, %v3251
        %v3925 = vsel %vm1994, %v3893, %v3253
        %vm3926 = vcmask 326656
        %v3927 = vsel %vm3926, %v3894, %v3319
        %v3928 = vsel %vm3926, %v3895, %v3321
        %v3929 = vsel %vm3926, %v3896, %v3323
        %v3930 = vsel %vm3926, %v3897, %v3325
        %v3931 = vsel %vm3926, %v3898, %v3327
        %v3932 = vsel %vm3926, %v3899, %v3329
        %v3933 = vsel %vm3926, %v3900, %v3331
        %v3934 = vsel %vm3926, %v3901, %v3333
        %v3935 = vsel %vm3926, %v3902, %v3335
        %v3936 = vsel %vm3926, %v3903, %v3337
        %v3937 = vsel %vm3926, %v3904, %v3339
        %v3938 = vsel %vm3926, %v3905, %v3341
        %v3939 = vsel %vm3926, %v3906, %v3343
        %v3940 = vsel %vm3926, %v3907, %v3345
        %v3941 = vsel %vm3926, %v3908, %v3347
        %v3942 = vsel %vm3926, %v3909, %v3349
        %v3943 = vsel %vm3926, %v3910, %v3351
        %v3944 = vsel %vm3926, %v3911, %v3353
        %v3945 = vsel %vm3926, %v3912, %v3355
        %v3946 = vsel %vm3926, %v3913, %v3357
        %v3947 = vsel %vm3926, %v3914, %v3359
        %v3948 = vsel %vm3926, %v3915, %v3361
        %v3949 = vsel %vm3926, %v3916, %v3363
        %v3950 = vsel %vm3926, %v3917, %v3365
        %v3951 = vsel %vm3926, %v3918, %v3367
        %v3952 = vsel %vm3926, %v3919, %v3369
        %v3953 = vsel %vm3926, %v3920, %v3371
        %v3954 = vsel %vm3926, %v3921, %v3373
        %v3955 = vsel %vm3926, %v3922, %v3375
        %v3956 = vsel %vm3926, %v3923, %v3377
        %v3957 = vsel %vm3926, %v3924, %v3379
        %v3958 = vsel %vm3926, %v3925, %v3381
        %vm3959 = vcmask 392192
        %v3960 = vsel %vm3959, %v3927, %v3447
        %v3961 = vsel %vm3959, %v3928, %v3449
        %v3962 = vsel %vm3959, %v3929, %v3451
        %v3963 = vsel %vm3959, %v3930, %v3453
        %v3964 = vsel %vm3959, %v3931, %v3455
        %v3965 = vsel %vm3959, %v3932, %v3457
        %v3966 = vsel %vm3959, %v3933, %v3459
        %v3967 = vsel %vm3959, %v3934, %v3461
        %v3968 = vsel %vm3959, %v3935, %v3463
        %v3969 = vsel %vm3959, %v3936, %v3465
        %v3970 = vsel %vm3959, %v3937, %v3467
        %v3971 = vsel %vm3959, %v3938, %v3469
        %v3972 = vsel %vm3959, %v3939, %v3471
        %v3973 = vsel %vm3959, %v3940, %v3473
        %v3974 = vsel %vm3959, %v3941, %v3475
        %v3975 = vsel %vm3959, %v3942, %v3477
        %v3976 = vsel %vm3959, %v3943, %v3479
        %v3977 = vsel %vm3959, %v3944, %v3481
        %v3978 = vsel %vm3959, %v3945, %v3483
        %v3979 = vsel %vm3959, %v3946, %v3485
        %v3980 = vsel %vm3959, %v3947, %v3487
        %v3981 = vsel %vm3959, %v3948, %v3489
        %v3982 = vsel %vm3959, %v3949, %v3491
        %v3983 = vsel %vm3959, %v3950, %v3493
        %v3984 = vsel %vm3959, %v3951, %v3495
        %v3985 = vsel %vm3959, %v3952, %v3497
        %v3986 = vsel %vm3959, %v3953, %v3499
        %v3987 = vsel %vm3959, %v3954, %v3501
        %v3988 = vsel %vm3959, %v3955, %v3503
        %v3989 = vsel %vm3959, %v3956, %v3505
        %v3990 = vsel %vm3959, %v3957, %v3507
        %v3991 = vsel %vm3959, %v3958, %v3509
        %vm3992 = vcmask 457728
        %v3993 = vsel %vm3992, %v3960, %v3575
        %v3994 = vsel %vm3992, %v3961, %v3577
        %v3995 = vsel %vm3992, %v3962, %v3579
        %v3996 = vsel %vm3992, %v3963, %v3581
        %v3997 = vsel %vm3992, %v3964, %v3583
        %v3998 = vsel %vm3992, %v3965, %v3585
        %v3999 = vsel %vm3992, %v3966, %v3587
        %v4000 = vsel %vm3992, %v3967, %v3589
        %v4001 = vsel %vm3992, %v3968, %v3591
        %v4002 = vsel %vm3992, %v3969, %v3593
        %v4003 = vsel %vm3992, %v3970, %v3595
        %v4004 = vsel %vm3992, %v3971, %v3597
        %v4005 = vsel %vm3992, %v3972, %v3599
        %v4006 = vsel %vm3992, %v3973, %v3601
        %v4007 = vsel %vm3992, %v3974, %v3603
        %v4008 = vsel %vm3992, %v3975, %v3605
        %v4009 = vsel %vm3992, %v3976, %v3607
        %v4010 = vsel %vm3992, %v3977, %v3609
        %v4011 = vsel %vm3992, %v3978, %v3611
        %v4012 = vsel %vm3992, %v3979, %v3613
        %v4013 = vsel %vm3992, %v3980, %v3615
        %v4014 = vsel %vm3992, %v3981, %v3617
        %v4015 = vsel %vm3992, %v3982, %v3619
        %v4016 = vsel %vm3992, %v3983, %v3621
        %v4017 = vsel %vm3992, %v3984, %v3623
        %v4018 = vsel %vm3992, %v3985, %v3625
        %v4019 = vsel %vm3992, %v3986, %v3627
        %v4020 = vsel %vm3992, %v3987, %v3629
        %v4021 = vsel %vm3992, %v3988, %v3631
        %v4022 = vsel %vm3992, %v3989, %v3633
        %v4023 = vsel %vm3992, %v3990, %v3635
        %v4024 = vsel %vm3992, %v3991, %v3637
        %vm4025 = vcmask 523264
        %v4026 = vsel %vm4025, %v3993, %v3703
        %v4027 = vsel %vm4025, %v3994, %v3705
        %v4028 = vsel %vm4025, %v3995, %v3707
        %v4029 = vsel %vm4025, %v3996, %v3709
        %v4030 = vsel %vm4025, %v3997, %v3711
        %v4031 = vsel %vm4025, %v3998, %v3713
        %v4032 = vsel %vm4025, %v3999, %v3715
        %v4033 = vsel %vm4025, %v4000, %v3717
        %v4034 = vsel %vm4025, %v4001, %v3719
        %v4035 = vsel %vm4025, %v4002, %v3721
        %v4036 = vsel %vm4025, %v4003, %v3723
        %v4037 = vsel %vm4025, %v4004, %v3725
        %v4038 = vsel %vm4025, %v4005, %v3727
        %v4039 = vsel %vm4025, %v4006, %v3729
        %v4040 = vsel %vm4025, %v4007, %v3731
        %v4041 = vsel %vm4025, %v4008, %v3733
        %v4042 = vsel %vm4025, %v4009, %v3735
        %v4043 = vsel %vm4025, %v4010, %v3737
        %v4044 = vsel %vm4025, %v4011, %v3739
        %v4045 = vsel %vm4025, %v4012, %v3741
        %v4046 = vsel %vm4025, %v4013, %v3743
        %v4047 = vsel %vm4025, %v4014, %v3745
        %v4048 = vsel %vm4025, %v4015, %v3747
        %v4049 = vsel %vm4025, %v4016, %v3749
        %v4050 = vsel %vm4025, %v4017, %v3751
        %v4051 = vsel %vm4025, %v4018, %v3753
        %v4052 = vsel %vm4025, %v4019, %v3755
        %v4053 = vsel %vm4025, %v4020, %v3757
        %v4054 = vsel %vm4025, %v4021, %v3759
        %v4055 = vsel %vm4025, %v4022, %v3761
        %v4056 = vsel %vm4025, %v4023, %v3763
        %v4057 = vsel %vm4025, %v4024, %v3765
        %v4058 = vld [vmem:[%s3] sm:$0xff]
        %v4059 = vld [vmem:[%s3 + $0x8] sm:$0xff]
        %v4060 = vld [vmem:[%s3 + $0x10] sm:$0xff]
        %v4061 = vld [vmem:[%s3 + $0x18] sm:$0xff]
        %v4062 = vld [vmem:[%s3 + $0x20] sm:$0xff]
        %v4063 = vld [vmem:[%s3 + $0x28] sm:$0xff]
        %v4064 = vld [vmem:[%s3 + $0x30] sm:$0xff]
        %v4065 = vld [vmem:[%s3 + $0x38] sm:$0xff]
        %v4066 = vld [vmem:[%s3 + $0x40] sm:$0xff]
        %v4067 = vld [vmem:[%s4] sm:$0x1]
        %v4069 = vlaneseq
        %v4070 = vshrl.u32 %v4069, 7
        %v4071 = vsub.s32 0, %v4070
        %v4072 = vrot.slane %v4067, %v4071
        %vm4074 = vcmask 588800
        %v4076 = vsel %vm4074, %v4026, 0
        %v4079 = vsel %vm4074, %v4027, 0
        %v4082 = vsel %vm4074, %v4028, 0
        %v4085 = vsel %vm4074, %v4029, 0
        %v4088 = vsel %vm4074, %v4030, 0
        %v4091 = vsel %vm4074, %v4031, 0
        %v4094 = vsel %vm4074, %v4032, 0
        %v4097 = vsel %vm4074, %v4033, 0
        %v4100 = vsel %vm4074, %v4034, 0
        %v4103 = vsel %vm4074, %v4035, 0
        %v4106 = vsel %vm4074, %v4036, 0
        %v4109 = vsel %vm4074, %v4037, 0
        %v4112 = vsel %vm4074, %v4038, 0
        %v4115 = vsel %vm4074, %v4039, 0
        %v4118 = vsel %vm4074, %v4040, 0
        %v4121 = vsel %vm4074, %v4041, 0
        %v4124 = vsel %vm4074, %v4042, 0
        %v4127 = vsel %vm4074, %v4043, 0
        %v4130 = vsel %vm4074, %v4044, 0
        %v4133 = vsel %vm4074, %v4045, 0
        %v4136 = vsel %vm4074, %v4046, 0
        %v4139 = vsel %vm4074, %v4047, 0
        %v4142 = vsel %vm4074, %v4048, 0
        %v4145 = vsel %vm4074, %v4049, 0
        %v4148 = vsel %vm4074, %v4050, 0
        %v4151 = vsel %vm4074, %v4051, 0
        %v4154 = vsel %vm4074, %v4052, 0
        %v4157 = vsel %vm4074, %v4053, 0
        %v4160 = vsel %vm4074, %v4054, 0
        %v4163 = vsel %vm4074, %v4055, 0
        %v4166 = vsel %vm4074, %v4056, 0
        %v4169 = vsel %vm4074, %v4057, 0
        %4171 = vmatprep.subr.mxu0 0.0
        %4172 = vmatpush1.msra.mxu0 0.0
        %4173 = vmatprep.subr.mxu0 0.0
        %4174 = vmatpush1.msra.mxu0 0.0
        %4175 = vmatprep.subr.mxu0 0.0
        %4176 = vmatpush1.msra.mxu0 0.0
        %4177 = vmatprep.subr.mxu0 0.0
        %4178 = vmatpush1.msra.mxu0 0.0
        %4179 = vmatprep.subr.mxu0 0.0
        %4180 = vmatpush1.msra.mxu0 0.0
        %4181 = vmatprep.subr.mxu0 0.0
        %4182 = vmatpush1.msra.mxu0 0.0
        %4183 = vmatprep.subr.mxu0 0.0
        %4184 = vmatpush1.msra.mxu0 0.0
        %4185 = vmatprep.subr.mxu0 0.0
        %4186 = vmatpush1.msra.mxu0 %v4066
        %4187 = vmatprep.subr.mxu0 0.0
        %4188 = vmatpush1.msra.mxu0 %v4065
        %4189 = vmatprep.subr.mxu0 0.0
        %4190 = vmatpush1.msra.mxu0 %v4064
        %4191 = vmatprep.subr.mxu0 0.0
        %4192 = vmatpush1.msra.mxu0 %v4063
        %4193 = vmatprep.subr.mxu0 0.0
        %4194 = vmatpush1.msra.mxu0 %v4062
        %4195 = vmatprep.subr.mxu0 0.0
        %4196 = vmatpush1.msra.mxu0 %v4061
        %4197 = vmatprep.subr.mxu0 0.0
        %4198 = vmatpush1.msra.mxu0 %v4060
        %4199 = vmatprep.subr.mxu0 0.0
        %4200 = vmatpush1.msra.mxu0 %v4059
        %4201 = vmatprep.subr.mxu0 0.0
        %4202 = vmatpush1.msra.mxu0 %v4058
        %4203 = vmatprep.subr.mxu0 0.0
        %4204 = vmatpush2.msra.mxu0 0.0
        %4205 = vmatprep.subr.mxu0 0.0
        %4206 = vmatpush2.msra.mxu0 0.0
        %4207 = vmatprep.subr.mxu0 0.0
        %4208 = vmatpush2.msra.mxu0 0.0
        %4209 = vmatprep.subr.mxu0 0.0
        %4210 = vmatpush2.msra.mxu0 0.0
        %4211 = vmatprep.subr.mxu0 0.0
        %4212 = vmatpush2.msra.mxu0 0.0
        %4213 = vmatprep.subr.mxu0 0.0
        %4214 = vmatpush2.msra.mxu0 0.0
        %4215 = vmatprep.subr.mxu0 0.0
        %4216 = vmatpush2.msra.mxu0 0.0
        %4217 = vmatprep.subr.mxu0 0.0
        %4218 = vmatpush2.msra.mxu0 0.0
        %4219 = vmatprep.subr.mxu0 0.0
        %4220 = vmatpush2.msra.mxu0 0.0
        %4221 = vmatprep.subr.mxu0 0.0
        %4222 = vmatpush2.msra.mxu0 0.0
        %4223 = vmatprep.subr.mxu0 0.0
        %4224 = vmatpush2.msra.mxu0 0.0
        %4225 = vmatprep.subr.mxu0 0.0
        %4226 = vmatpush2.msra.mxu0 0.0
        %4227 = vmatprep.subr.mxu0 0.0
        %4228 = vmatpush2.msra.mxu0 0.0
        %4229 = vmatprep.subr.mxu0 0.0
        %4230 = vmatpush2.msra.mxu0 0.0
        %4231 = vmatprep.subr.mxu0 0.0
        %4232 = vmatpush2.msra.mxu0 0.0
        %4233 = vmatprep.subr.mxu0 0.0
        %4234 = vmatpush2.msra.mxu0 0.0
        %4235 = vmatprep.mubr.f32.mxu0 0.0
        %4236 = vmatmul.mubr.f32.gmra.mxu0 %v4076
        %v4237 = vpop.f32.mrf.mxu0
        %v4238 = vadd.f32 %v4072, %v4237
        %v4239 = vpop.f32.mrf.mxu0
        %4240 = vmatprep.mubr.f32.mxu0 0.0
        %4241 = vmatmul.mubr.f32.gmra.mxu0 %v4079
        %v4242 = vpop.f32.mrf.mxu0
        %v4243 = vadd.f32 %v4072, %v4242
        %v4244 = vpop.f32.mrf.mxu0
        %4245 = vmatprep.mubr.f32.mxu0 0.0
        %4246 = vmatmul.mubr.f32.gmra.mxu0 %v4082
        %v4247 = vpop.f32.mrf.mxu0
        %v4248 = vadd.f32 %v4072, %v4247
        %v4249 = vpop.f32.mrf.mxu0
        %4250 = vmatprep.mubr.f32.mxu0 0.0
        %4251 = vmatmul.mubr.f32.gmra.mxu0 %v4085
        %v4252 = vpop.f32.mrf.mxu0
        %v4253 = vadd.f32 %v4072, %v4252
        %v4254 = vpop.f32.mrf.mxu0
        %4255 = vmatprep.mubr.f32.mxu0 0.0
        %4256 = vmatmul.mubr.f32.gmra.mxu0 %v4088
        %v4257 = vpop.f32.mrf.mxu0
        %v4258 = vadd.f32 %v4072, %v4257
        %v4259 = vpop.f32.mrf.mxu0
        %4260 = vmatprep.mubr.f32.mxu0 0.0
        %4261 = vmatmul.mubr.f32.gmra.mxu0 %v4091
        %v4262 = vpop.f32.mrf.mxu0
        %v4263 = vadd.f32 %v4072, %v4262
        %v4264 = vpop.f32.mrf.mxu0
        %4265 = vmatprep.mubr.f32.mxu0 0.0
        %4266 = vmatmul.mubr.f32.gmra.mxu0 %v4094
        %v4267 = vpop.f32.mrf.mxu0
        %v4268 = vadd.f32 %v4072, %v4267
        %v4269 = vpop.f32.mrf.mxu0
        %4270 = vmatprep.mubr.f32.mxu0 0.0
        %4271 = vmatmul.mubr.f32.gmra.mxu0 %v4097
        %v4272 = vpop.f32.mrf.mxu0
        %v4273 = vadd.f32 %v4072, %v4272
        %v4274 = vpop.f32.mrf.mxu0
        %4275 = vmatprep.mubr.f32.mxu0 0.0
        %4276 = vmatmul.mubr.f32.gmra.mxu0 %v4100
        %v4277 = vpop.f32.mrf.mxu0
        %v4278 = vadd.f32 %v4072, %v4277
        %v4279 = vpop.f32.mrf.mxu0
        %4280 = vmatprep.mubr.f32.mxu0 0.0
        %4281 = vmatmul.mubr.f32.gmra.mxu0 %v4103
        %v4282 = vpop.f32.mrf.mxu0
        %v4283 = vadd.f32 %v4072, %v4282
        %v4284 = vpop.f32.mrf.mxu0
        %4285 = vmatprep.mubr.f32.mxu0 0.0
        %4286 = vmatmul.mubr.f32.gmra.mxu0 %v4106
        %v4287 = vpop.f32.mrf.mxu0
        %v4288 = vadd.f32 %v4072, %v4287
        %v4289 = vpop.f32.mrf.mxu0
        %4290 = vmatprep.mubr.f32.mxu0 0.0
        %4291 = vmatmul.mubr.f32.gmra.mxu0 %v4109
        %v4292 = vpop.f32.mrf.mxu0
        %v4293 = vadd.f32 %v4072, %v4292
        %v4294 = vpop.f32.mrf.mxu0
        %4295 = vmatprep.mubr.f32.mxu0 0.0
        %4296 = vmatmul.mubr.f32.gmra.mxu0 %v4112
        %v4297 = vpop.f32.mrf.mxu0
        %v4298 = vadd.f32 %v4072, %v4297
        %v4299 = vpop.f32.mrf.mxu0
        %4300 = vmatprep.mubr.f32.mxu0 0.0
        %4301 = vmatmul.mubr.f32.gmra.mxu0 %v4115
        %v4302 = vpop.f32.mrf.mxu0
        %v4303 = vadd.f32 %v4072, %v4302
        %v4304 = vpop.f32.mrf.mxu0
        %4305 = vmatprep.mubr.f32.mxu0 0.0
        %4306 = vmatmul.mubr.f32.gmra.mxu0 %v4118
        %v4307 = vpop.f32.mrf.mxu0
        %v4308 = vadd.f32 %v4072, %v4307
        %v4309 = vpop.f32.mrf.mxu0
        %4310 = vmatprep.mubr.f32.mxu0 0.0
        %4311 = vmatmul.mubr.f32.gmra.mxu0 %v4121
        %v4312 = vpop.f32.mrf.mxu0
        %v4313 = vadd.f32 %v4072, %v4312
        %v4314 = vpop.f32.mrf.mxu0
        %4315 = vmatprep.mubr.f32.mxu0 0.0
        %4316 = vmatmul.mubr.f32.gmra.mxu0 %v4124
        %v4317 = vpop.f32.mrf.mxu0
        %v4318 = vadd.f32 %v4072, %v4317
        %v4319 = vpop.f32.mrf.mxu0
        %4320 = vmatprep.mubr.f32.mxu0 0.0
        %4321 = vmatmul.mubr.f32.gmra.mxu0 %v4127
        %v4322 = vpop.f32.mrf.mxu0
        %v4323 = vadd.f32 %v4072, %v4322
        %v4324 = vpop.f32.mrf.mxu0
        %4325 = vmatprep.mubr.f32.mxu0 0.0
        %4326 = vmatmul.mubr.f32.gmra.mxu0 %v4130
        %v4327 = vpop.f32.mrf.mxu0
        %v4328 = vadd.f32 %v4072, %v4327
        %v4329 = vpop.f32.mrf.mxu0
        %4330 = vmatprep.mubr.f32.mxu0 0.0
        %4331 = vmatmul.mubr.f32.gmra.mxu0 %v4133
        %v4332 = vpop.f32.mrf.mxu0
        %v4333 = vadd.f32 %v4072, %v4332
        %v4334 = vpop.f32.mrf.mxu0
        %4335 = vmatprep.mubr.f32.mxu0 0.0
        %4336 = vmatmul.mubr.f32.gmra.mxu0 %v4136
        %v4337 = vpop.f32.mrf.mxu0
        %v4338 = vadd.f32 %v4072, %v4337
        %v4339 = vpop.f32.mrf.mxu0
        %4340 = vmatprep.mubr.f32.mxu0 0.0
        %4341 = vmatmul.mubr.f32.gmra.mxu0 %v4139
        %v4342 = vpop.f32.mrf.mxu0
        %v4343 = vadd.f32 %v4072, %v4342
        %v4344 = vpop.f32.mrf.mxu0
        %4345 = vmatprep.mubr.f32.mxu0 0.0
        %4346 = vmatmul.mubr.f32.gmra.mxu0 %v4142
        %v4347 = vpop.f32.mrf.mxu0
        %v4348 = vadd.f32 %v4072, %v4347
        %v4349 = vpop.f32.mrf.mxu0
        %4350 = vmatprep.mubr.f32.mxu0 0.0
        %4351 = vmatmul.mubr.f32.gmra.mxu0 %v4145
        %v4352 = vpop.f32.mrf.mxu0
        %v4353 = vadd.f32 %v4072, %v4352
        %v4354 = vpop.f32.mrf.mxu0
        %4355 = vmatprep.mubr.f32.mxu0 0.0
        %4356 = vmatmul.mubr.f32.gmra.mxu0 %v4148
        %v4357 = vpop.f32.mrf.mxu0
        %v4358 = vadd.f32 %v4072, %v4357
        %v4359 = vpop.f32.mrf.mxu0
        %4360 = vmatprep.mubr.f32.mxu0 0.0
        %4361 = vmatmul.mubr.f32.gmra.mxu0 %v4151
        %v4362 = vpop.f32.mrf.mxu0
        %v4363 = vadd.f32 %v4072, %v4362
        %v4364 = vpop.f32.mrf.mxu0
        %4365 = vmatprep.mubr.f32.mxu0 0.0
        %4366 = vmatmul.mubr.f32.gmra.mxu0 %v4154
        %v4367 = vpop.f32.mrf.mxu0
        %v4368 = vadd.f32 %v4072, %v4367
        %v4369 = vpop.f32.mrf.mxu0
        %4370 = vmatprep.mubr.f32.mxu0 0.0
        %4371 = vmatmul.mubr.f32.gmra.mxu0 %v4157
        %v4372 = vpop.f32.mrf.mxu0
        %v4373 = vadd.f32 %v4072, %v4372
        %v4374 = vpop.f32.mrf.mxu0
        %4375 = vmatprep.mubr.f32.mxu0 0.0
        %4376 = vmatmul.mubr.f32.gmra.mxu0 %v4160
        %v4377 = vpop.f32.mrf.mxu0
        %v4378 = vadd.f32 %v4072, %v4377
        %v4379 = vpop.f32.mrf.mxu0
        %4380 = vmatprep.mubr.f32.mxu0 0.0
        %4381 = vmatmul.mubr.f32.gmra.mxu0 %v4163
        %v4382 = vpop.f32.mrf.mxu0
        %v4383 = vadd.f32 %v4072, %v4382
        %v4384 = vpop.f32.mrf.mxu0
        %4385 = vmatprep.mubr.f32.mxu0 0.0
        %4386 = vmatmul.mubr.f32.gmra.mxu0 %v4166
        %v4387 = vpop.f32.mrf.mxu0
        %v4388 = vadd.f32 %v4072, %v4387
        %v4389 = vpop.f32.mrf.mxu0
        %4390 = vmatprep.mubr.f32.mxu0 0.0
        %4391 = vmatmul.mubr.f32.gmra.mxu0 %v4169
        %v4392 = vpop.f32.mrf.mxu0
        %v4393 = vadd.f32 %v4072, %v4392
        %v4394 = vpop.f32.mrf.mxu0
        %4395 = vdwg.mxu0
        %v4396 = vmax.f32 %v4238, 0.0
        %v4397 = vmax.f32 %v4243, 0.0
        %v4398 = vmax.f32 %v4248, 0.0
        %v4399 = vmax.f32 %v4253, 0.0
        %v4400 = vmax.f32 %v4258, 0.0
        %v4401 = vmax.f32 %v4263, 0.0
        %v4402 = vmax.f32 %v4268, 0.0
        %v4403 = vmax.f32 %v4273, 0.0
        %v4404 = vmax.f32 %v4278, 0.0
        %v4405 = vmax.f32 %v4283, 0.0
        %v4406 = vmax.f32 %v4288, 0.0
        %v4407 = vmax.f32 %v4293, 0.0
        %v4408 = vmax.f32 %v4298, 0.0
        %v4409 = vmax.f32 %v4303, 0.0
        %v4410 = vmax.f32 %v4308, 0.0
        %v4411 = vmax.f32 %v4313, 0.0
        %v4412 = vmax.f32 %v4318, 0.0
        %v4413 = vmax.f32 %v4323, 0.0
        %v4414 = vmax.f32 %v4328, 0.0
        %v4415 = vmax.f32 %v4333, 0.0
        %v4416 = vmax.f32 %v4338, 0.0
        %v4417 = vmax.f32 %v4343, 0.0
        %v4418 = vmax.f32 %v4348, 0.0
        %v4419 = vmax.f32 %v4353, 0.0
        %v4420 = vmax.f32 %v4358, 0.0
        %v4421 = vmax.f32 %v4363, 0.0
        %v4422 = vmax.f32 %v4368, 0.0
        %v4423 = vmax.f32 %v4373, 0.0
        %v4424 = vmax.f32 %v4378, 0.0
        %v4425 = vmax.f32 %v4383, 0.0
        %v4426 = vmax.f32 %v4388, 0.0
        %v4427 = vmax.f32 %v4393, 0.0
        %4428 = vst.msk [vmem:[#allocation4] sm:$0xff] %vm1862, 0.0
        %4429 = vst.msk [vmem:[#allocation4 + $0x8] sm:$0xff] %vm1862, 0.0
        %vm4430 = vcmask 123904
        %4431 = vst.msk [vmem:[#allocation4 + $0x10] sm:$0x3] %vm4430, 0.0
        %4432 = vst.msk [vmem:[#allocation4 + $0x18] sm:$0xff] %vm1862, 0.0
        %4433 = vst.msk [vmem:[#allocation4 + $0x20] sm:$0xff] %vm1862, 0.0
        %4434 = vst.msk [vmem:[#allocation4 + $0x28] sm:$0x3] %vm4430, 0.0
        %4435 = vst.msk [vmem:[#allocation4 + $0x30] sm:$0xff] %vm1862, 0.0
        %4436 = vst.msk [vmem:[#allocation4 + $0x38] sm:$0xff] %vm1862, 0.0
        %4437 = vst.msk [vmem:[#allocation4 + $0x40] sm:$0x3] %vm4430, 0.0
        %4438 = vst.msk [vmem:[#allocation4 + $0x48] sm:$0xff] %vm1862, 0.0
        %4439 = vst.msk [vmem:[#allocation4 + $0x50] sm:$0xff] %vm1862, 0.0
        %4440 = vst.msk [vmem:[#allocation4 + $0x58] sm:$0x3] %vm4430, 0.0
        %4441 = vst.msk [vmem:[#allocation4 + $0x60] sm:$0xff] %vm1862, 0.0
        %4442 = vst.msk [vmem:[#allocation4 + $0x68] sm:$0xff] %vm1862, 0.0
        %4443 = vst.msk [vmem:[#allocation4 + $0x70] sm:$0x3] %vm4430, 0.0
        %4444 = vst.msk [vmem:[#allocation4 + $0x78] sm:$0xff] %vm1862, 0.0
        %4445 = vst.msk [vmem:[#allocation4 + $0x80] sm:$0xff] %vm1862, 0.0
        %4446 = vst.msk [vmem:[#allocation4 + $0x88] sm:$0x3] %vm4430, 0.0
        %4447 = vst.msk [vmem:[#allocation4 + $0x90] sm:$0xff] %vm1862, 0.0
        %4448 = vst.msk [vmem:[#allocation4 + $0x98] sm:$0xff] %vm1862, 0.0
        %4449 = vst.msk [vmem:[#allocation4 + $0xa0] sm:$0x3] %vm4430, 0.0
        %4450 = vst.msk [vmem:[#allocation4 + $0xa8] sm:$0xff] %vm1862, 0.0
        %4451 = vst.msk [vmem:[#allocation4 + $0xb0] sm:$0xff] %vm1862, 0.0
        %4452 = vst.msk [vmem:[#allocation4 + $0xb8] sm:$0x3] %vm4430, 0.0
        %4453 = vst.msk [vmem:[#allocation4 + $0xc0] sm:$0xff] %vm1862, 0.0
        %4454 = vst.msk [vmem:[#allocation4 + $0xc8] sm:$0xff] %vm1862, 0.0
        %4455 = vst.msk [vmem:[#allocation4 + $0xd0] sm:$0x3] %vm4430, 0.0
        %4456 = vst.msk [vmem:[#allocation4 + $0xd8] sm:$0xff] %vm1862, 0.0
        %4457 = vst.msk [vmem:[#allocation4 + $0xe0] sm:$0xff] %vm1862, 0.0
        %4458 = vst.msk [vmem:[#allocation4 + $0xe8] sm:$0x3] %vm4430, 0.0
        %4459 = vst.msk [vmem:[#allocation4 + $0xf0] sm:$0xff] %vm1862, 0.0
        %4460 = vst.msk [vmem:[#allocation4 + $0xf8] sm:$0xff] %vm1862, 0.0
        %4461 = vst.msk [vmem:[#allocation4 + $0x100] sm:$0x3] %vm4430, 0.0
        %4462 = vst.msk [vmem:[#allocation4 + $0x108] sm:$0xff] %vm1862, 0.0
        %4463 = vst.msk [vmem:[#allocation4 + $0x110] sm:$0xff] %vm1862, 0.0
        %4464 = vst.msk [vmem:[#allocation4 + $0x118] sm:$0x3] %vm4430, 0.0
        %4465 = vst.msk [vmem:[#allocation4 + $0x120] sm:$0xff] %vm1862, 0.0
        %4466 = vst.msk [vmem:[#allocation4 + $0x128] sm:$0xff] %vm1862, 0.0
        %4467 = vst.msk [vmem:[#allocation4 + $0x130] sm:$0x3] %vm4430, 0.0
        %4468 = vst.msk [vmem:[#allocation4 + $0x138] sm:$0xff] %vm1862, 0.0
        %4469 = vst.msk [vmem:[#allocation4 + $0x140] sm:$0xff] %vm1862, 0.0
        %4470 = vst.msk [vmem:[#allocation4 + $0x148] sm:$0x3] %vm4430, 0.0
        %4471 = vst.msk [vmem:[#allocation4 + $0x150] sm:$0xff] %vm1862, 0.0
        %4472 = vst.msk [vmem:[#allocation4 + $0x158] sm:$0xff] %vm1862, 0.0
        %4473 = vst.msk [vmem:[#allocation4 + $0x160] sm:$0x3] %vm4430, 0.0
        %4474 = vst.msk [vmem:[#allocation4 + $0x168] sm:$0xff] %vm1862, 0.0
        %4475 = vst.msk [vmem:[#allocation4 + $0x170] sm:$0xff] %vm1862, 0.0
        %4476 = vst.msk [vmem:[#allocation4 + $0x178] sm:$0x3] %vm4430, 0.0
        %4477 = vst.msk [vmem:[#allocation4 + $0x180] sm:$0xff] %vm1862, 0.0
        %4478 = vst.msk [vmem:[#allocation4 + $0x188] sm:$0xff] %vm1862, 0.0
        %4479 = vst.msk [vmem:[#allocation4 + $0x190] sm:$0x3] %vm4430, 0.0
        %4480 = vst.msk [vmem:[#allocation4 + $0x198] sm:$0xff] %vm1862, 0.0
        %4481 = vst.msk [vmem:[#allocation4 + $0x1a0] sm:$0xff] %vm1862, 0.0
        %4482 = vst.msk [vmem:[#allocation4 + $0x1a8] sm:$0x3] %vm4430, 0.0
        %s4483 = scalar_lea.vmem [#allocation4], 24
        %4484 = vst.msk [vmem:[%s4483 + $0x1] sm:$0xff] %vm1862, %v4396
        %4485 = vst.msk [vmem:[%s4483 + $0x9] sm:$0xff] %vm1862, %v4397
        %4486 = vst.msk [vmem:[%s4483 + $0x19] sm:$0xff] %vm1862, %v4398
        %4487 = vst.msk [vmem:[%s4483 + $0x21] sm:$0xff] %vm1862, %v4399
        %4488 = vst.msk [vmem:[%s4483 + $0x31] sm:$0xff] %vm1862, %v4400
        %4489 = vst.msk [vmem:[%s4483 + $0x39] sm:$0xff] %vm1862, %v4401
        %4490 = vst.msk [vmem:[%s4483 + $0x49] sm:$0xff] %vm1862, %v4402
        %4491 = vst.msk [vmem:[%s4483 + $0x51] sm:$0xff] %vm1862, %v4403
        %4492 = vst.msk [vmem:[%s4483 + $0x61] sm:$0xff] %vm1862, %v4404
        %4493 = vst.msk [vmem:[%s4483 + $0x69] sm:$0xff] %vm1862, %v4405
        %4494 = vst.msk [vmem:[%s4483 + $0x79] sm:$0xff] %vm1862, %v4406
        %4495 = vst.msk [vmem:[%s4483 + $0x81] sm:$0xff] %vm1862, %v4407
        %4496 = vst.msk [vmem:[%s4483 + $0x91] sm:$0xff] %vm1862, %v4408
        %4497 = vst.msk [vmem:[%s4483 + $0x99] sm:$0xff] %vm1862, %v4409
        %4498 = vst.msk [vmem:[%s4483 + $0xa9] sm:$0xff] %vm1862, %v4410
        %4499 = vst.msk [vmem:[%s4483 + $0xb1] sm:$0xff] %vm1862, %v4411
        %4500 = vst.msk [vmem:[%s4483 + $0xc1] sm:$0xff] %vm1862, %v4412
        %4501 = vst.msk [vmem:[%s4483 + $0xc9] sm:$0xff] %vm1862, %v4413
        %4502 = vst.msk [vmem:[%s4483 + $0xd9] sm:$0xff] %vm1862, %v4414
        %4503 = vst.msk [vmem:[%s4483 + $0xe1] sm:$0xff] %vm1862, %v4415
        %4504 = vst.msk [vmem:[%s4483 + $0xf1] sm:$0xff] %vm1862, %v4416
        %4505 = vst.msk [vmem:[%s4483 + $0xf9] sm:$0xff] %vm1862, %v4417
        %4506 = vst.msk [vmem:[%s4483 + $0x109] sm:$0xff] %vm1862, %v4418
        %4507 = vst.msk [vmem:[%s4483 + $0x111] sm:$0xff] %vm1862, %v4419
        %4508 = vst.msk [vmem:[%s4483 + $0x121] sm:$0xff] %vm1862, %v4420
        %4509 = vst.msk [vmem:[%s4483 + $0x129] sm:$0xff] %vm1862, %v4421
        %4510 = vst.msk [vmem:[%s4483 + $0x139] sm:$0xff] %vm1862, %v4422
        %4511 = vst.msk [vmem:[%s4483 + $0x141] sm:$0xff] %vm1862, %v4423
        %4512 = vst.msk [vmem:[%s4483 + $0x151] sm:$0xff] %vm1862, %v4424
        %4513 = vst.msk [vmem:[%s4483 + $0x159] sm:$0xff] %vm1862, %v4425
        %4514 = vst.msk [vmem:[%s4483 + $0x169] sm:$0xff] %vm1862, %v4426
        %4515 = vst.msk [vmem:[%s4483 + $0x171] sm:$0xff] %vm1862, %v4427
        %v4516 = vld [vmem:[#allocation4] sm:$0xff]
        %v4517 = vld [vmem:[#allocation4 + $0x8] sm:$0xff]
        %v4518 = vld [vmem:[#allocation4 + $0x18] sm:$0xff]
        %v4519 = vld [vmem:[#allocation4 + $0x20] sm:$0xff]
        %v4520 = vld [vmem:[#allocation4 + $0x30] sm:$0xff]
        %v4521 = vld [vmem:[#allocation4 + $0x38] sm:$0xff]
        %v4522 = vld [vmem:[#allocation4 + $0x48] sm:$0xff]
        %v4523 = vld [vmem:[#allocation4 + $0x50] sm:$0xff]
        %v4524 = vld [vmem:[#allocation4 + $0x60] sm:$0xff]
        %v4525 = vld [vmem:[#allocation4 + $0x68] sm:$0xff]
        %v4526 = vld [vmem:[#allocation4 + $0x78] sm:$0xff]
        %v4527 = vld [vmem:[#allocation4 + $0x80] sm:$0xff]
        %v4528 = vld [vmem:[#allocation4 + $0x90] sm:$0xff]
        %v4529 = vld [vmem:[#allocation4 + $0x98] sm:$0xff]
        %v4530 = vld [vmem:[#allocation4 + $0xa8] sm:$0xff]
        %v4531 = vld [vmem:[#allocation4 + $0xb0] sm:$0xff]
        %v4532 = vld [vmem:[#allocation4 + $0xc0] sm:$0xff]
        %v4533 = vld [vmem:[#allocation4 + $0xc8] sm:$0xff]
        %v4534 = vld [vmem:[#allocation4 + $0xd8] sm:$0xff]
        %v4535 = vld [vmem:[#allocation4 + $0xe0] sm:$0xff]
        %v4536 = vld [vmem:[#allocation4 + $0xf0] sm:$0xff]
        %v4537 = vld [vmem:[#allocation4 + $0xf8] sm:$0xff]
        %v4538 = vld [vmem:[#allocation4 + $0x108] sm:$0xff]
        %v4539 = vld [vmem:[#allocation4 + $0x110] sm:$0xff]
        %v4540 = vld [vmem:[#allocation4 + $0x120] sm:$0xff]
        %v4541 = vld [vmem:[#allocation4 + $0x128] sm:$0xff]
        %v4542 = vld [vmem:[#allocation4 + $0x138] sm:$0xff]
        %v4543 = vld [vmem:[#allocation4 + $0x140] sm:$0xff]
        %v4544 = vld [vmem:[#allocation4 + $0x150] sm:$0xff]
        %v4545 = vld [vmem:[#allocation4 + $0x158] sm:$0xff]
        %v4546 = vld [vmem:[#allocation4 + $0x168] sm:$0xff]
        %v4547 = vld [vmem:[#allocation4 + $0x170] sm:$0xff]
        %v4548 = vld [vmem:[#allocation4 + $0x1] sm:$0xff]
        %v4549 = vld [vmem:[#allocation4 + $0x9] sm:$0xff]
        %v4550 = vld [vmem:[#allocation4 + $0x19] sm:$0xff]
        %v4551 = vld [vmem:[#allocation4 + $0x21] sm:$0xff]
        %v4552 = vld [vmem:[#allocation4 + $0x31] sm:$0xff]
        %v4553 = vld [vmem:[#allocation4 + $0x39] sm:$0xff]
        %v4554 = vld [vmem:[#allocation4 + $0x49] sm:$0xff]
        %v4555 = vld [vmem:[#allocation4 + $0x51] sm:$0xff]
        %v4556 = vld [vmem:[#allocation4 + $0x61] sm:$0xff]
        %v4557 = vld [vmem:[#allocation4 + $0x69] sm:$0xff]
        %v4558 = vld [vmem:[#allocation4 + $0x79] sm:$0xff]
        %v4559 = vld [vmem:[#allocation4 + $0x81] sm:$0xff]
        %v4560 = vld [vmem:[#allocation4 + $0x91] sm:$0xff]
        %v4561 = vld [vmem:[#allocation4 + $0x99] sm:$0xff]
        %v4562 = vld [vmem:[#allocation4 + $0xa9] sm:$0xff]
        %v4563 = vld [vmem:[#allocation4 + $0xb1] sm:$0xff]
        %v4564 = vld [vmem:[#allocation4 + $0xc1] sm:$0xff]
        %v4565 = vld [vmem:[#allocation4 + $0xc9] sm:$0xff]
        %v4566 = vld [vmem:[#allocation4 + $0xd9] sm:$0xff]
        %v4567 = vld [vmem:[#allocation4 + $0xe1] sm:$0xff]
        %v4568 = vld [vmem:[#allocation4 + $0xf1] sm:$0xff]
        %v4569 = vld [vmem:[#allocation4 + $0xf9] sm:$0xff]
        %v4570 = vld [vmem:[#allocation4 + $0x109] sm:$0xff]
        %v4571 = vld [vmem:[#allocation4 + $0x111] sm:$0xff]
        %v4572 = vld [vmem:[#allocation4 + $0x121] sm:$0xff]
        %v4573 = vld [vmem:[#allocation4 + $0x129] sm:$0xff]
        %v4574 = vld [vmem:[#allocation4 + $0x139] sm:$0xff]
        %v4575 = vld [vmem:[#allocation4 + $0x141] sm:$0xff]
        %v4576 = vld [vmem:[#allocation4 + $0x151] sm:$0xff]
        %v4577 = vld [vmem:[#allocation4 + $0x159] sm:$0xff]
        %v4578 = vld [vmem:[#allocation4 + $0x169] sm:$0xff]
        %v4579 = vld [vmem:[#allocation4 + $0x171] sm:$0xff]
        %v4580 = vld [vmem:[#allocation4 + $0x2] sm:$0xff]
        %v4581 = vld [vmem:[#allocation4 + $0xa] sm:$0xff]
        %v4582 = vld [vmem:[#allocation4 + $0x1a] sm:$0xff]
        %v4583 = vld [vmem:[#allocation4 + $0x22] sm:$0xff]
        %v4584 = vld [vmem:[#allocation4 + $0x32] sm:$0xff]
        %v4585 = vld [vmem:[#allocation4 + $0x3a] sm:$0xff]
        %v4586 = vld [vmem:[#allocation4 + $0x4a] sm:$0xff]
        %v4587 = vld [vmem:[#allocation4 + $0x52] sm:$0xff]
        %v4588 = vld [vmem:[#allocation4 + $0x62] sm:$0xff]
        %v4589 = vld [vmem:[#allocation4 + $0x6a] sm:$0xff]
        %v4590 = vld [vmem:[#allocation4 + $0x7a] sm:$0xff]
        %v4591 = vld [vmem:[#allocation4 + $0x82] sm:$0xff]
        %v4592 = vld [vmem:[#allocation4 + $0x92] sm:$0xff]
        %v4593 = vld [vmem:[#allocation4 + $0x9a] sm:$0xff]
        %v4594 = vld [vmem:[#allocation4 + $0xaa] sm:$0xff]
        %v4595 = vld [vmem:[#allocation4 + $0xb2] sm:$0xff]
        %v4596 = vld [vmem:[#allocation4 + $0xc2] sm:$0xff]
        %v4597 = vld [vmem:[#allocation4 + $0xca] sm:$0xff]
        %v4598 = vld [vmem:[#allocation4 + $0xda] sm:$0xff]
        %v4599 = vld [vmem:[#allocation4 + $0xe2] sm:$0xff]
        %v4600 = vld [vmem:[#allocation4 + $0xf2] sm:$0xff]
        %v4601 = vld [vmem:[#allocation4 + $0xfa] sm:$0xff]
        %v4602 = vld [vmem:[#allocation4 + $0x10a] sm:$0xff]
        %v4603 = vld [vmem:[#allocation4 + $0x112] sm:$0xff]
        %v4604 = vld [vmem:[#allocation4 + $0x122] sm:$0xff]
        %v4605 = vld [vmem:[#allocation4 + $0x12a] sm:$0xff]
        %v4606 = vld [vmem:[#allocation4 + $0x13a] sm:$0xff]
        %v4607 = vld [vmem:[#allocation4 + $0x142] sm:$0xff]
        %v4608 = vld [vmem:[#allocation4 + $0x152] sm:$0xff]
        %v4609 = vld [vmem:[#allocation4 + $0x15a] sm:$0xff]
        %v4610 = vld [vmem:[#allocation4 + $0x16a] sm:$0xff]
        %v4611 = vld [vmem:[#allocation4 + $0x172] sm:$0xff]
        %v4612 = vld [vmem:[%s4483] sm:$0xff]
        %v4613 = vld [vmem:[%s4483 + $0x8] sm:$0xff]
        %v4614 = vld [vmem:[%s4483 + $0x18] sm:$0xff]
        %v4615 = vld [vmem:[%s4483 + $0x20] sm:$0xff]
        %v4616 = vld [vmem:[%s4483 + $0x30] sm:$0xff]
        %v4617 = vld [vmem:[%s4483 + $0x38] sm:$0xff]
        %v4618 = vld [vmem:[%s4483 + $0x48] sm:$0xff]
        %v4619 = vld [vmem:[%s4483 + $0x50] sm:$0xff]
        %v4620 = vld [vmem:[%s4483 + $0x60] sm:$0xff]
        %v4621 = vld [vmem:[%s4483 + $0x68] sm:$0xff]
        %v4622 = vld [vmem:[%s4483 + $0x78] sm:$0xff]
        %v4623 = vld [vmem:[%s4483 + $0x80] sm:$0xff]
        %v4624 = vld [vmem:[%s4483 + $0x90] sm:$0xff]
        %v4625 = vld [vmem:[%s4483 + $0x98] sm:$0xff]
        %v4626 = vld [vmem:[%s4483 + $0xa8] sm:$0xff]
        %v4627 = vld [vmem:[%s4483 + $0xb0] sm:$0xff]
        %v4628 = vld [vmem:[%s4483 + $0xc0] sm:$0xff]
        %v4629 = vld [vmem:[%s4483 + $0xc8] sm:$0xff]
        %v4630 = vld [vmem:[%s4483 + $0xd8] sm:$0xff]
        %v4631 = vld [vmem:[%s4483 + $0xe0] sm:$0xff]
        %v4632 = vld [vmem:[%s4483 + $0xf0] sm:$0xff]
        %v4633 = vld [vmem:[%s4483 + $0xf8] sm:$0xff]
        %v4634 = vld [vmem:[%s4483 + $0x108] sm:$0xff]
        %v4635 = vld [vmem:[%s4483 + $0x110] sm:$0xff]
        %v4636 = vld [vmem:[%s4483 + $0x120] sm:$0xff]
        %v4637 = vld [vmem:[%s4483 + $0x128] sm:$0xff]
        %v4638 = vld [vmem:[%s4483 + $0x138] sm:$0xff]
        %v4639 = vld [vmem:[%s4483 + $0x140] sm:$0xff]
        %v4640 = vld [vmem:[%s4483 + $0x150] sm:$0xff]
        %v4641 = vld [vmem:[%s4483 + $0x158] sm:$0xff]
        %v4642 = vld [vmem:[%s4483 + $0x168] sm:$0xff]
        %v4643 = vld [vmem:[%s4483 + $0x170] sm:$0xff]
        %v4644 = vld [vmem:[%s4483 + $0x1] sm:$0xff]
        %v4645 = vld [vmem:[%s4483 + $0x9] sm:$0xff]
        %v4646 = vld [vmem:[%s4483 + $0x19] sm:$0xff]
        %v4647 = vld [vmem:[%s4483 + $0x21] sm:$0xff]
        %v4648 = vld [vmem:[%s4483 + $0x31] sm:$0xff]
        %v4649 = vld [vmem:[%s4483 + $0x39] sm:$0xff]
        %v4650 = vld [vmem:[%s4483 + $0x49] sm:$0xff]
        %v4651 = vld [vmem:[%s4483 + $0x51] sm:$0xff]
        %v4652 = vld [vmem:[%s4483 + $0x61] sm:$0xff]
        %v4653 = vld [vmem:[%s4483 + $0x69] sm:$0xff]
        %v4654 = vld [vmem:[%s4483 + $0x79] sm:$0xff]
        %v4655 = vld [vmem:[%s4483 + $0x81] sm:$0xff]
        %v4656 = vld [vmem:[%s4483 + $0x91] sm:$0xff]
        %v4657 = vld [vmem:[%s4483 + $0x99] sm:$0xff]
        %v4658 = vld [vmem:[%s4483 + $0xa9] sm:$0xff]
        %v4659 = vld [vmem:[%s4483 + $0xb1] sm:$0xff]
        %v4660 = vld [vmem:[%s4483 + $0xc1] sm:$0xff]
        %v4661 = vld [vmem:[%s4483 + $0xc9] sm:$0xff]
        %v4662 = vld [vmem:[%s4483 + $0xd9] sm:$0xff]
        %v4663 = vld [vmem:[%s4483 + $0xe1] sm:$0xff]
        %v4664 = vld [vmem:[%s4483 + $0xf1] sm:$0xff]
        %v4665 = vld [vmem:[%s4483 + $0xf9] sm:$0xff]
        %v4666 = vld [vmem:[%s4483 + $0x109] sm:$0xff]
        %v4667 = vld [vmem:[%s4483 + $0x111] sm:$0xff]
        %v4668 = vld [vmem:[%s4483 + $0x121] sm:$0xff]
        %v4669 = vld [vmem:[%s4483 + $0x129] sm:$0xff]
        %v4670 = vld [vmem:[%s4483 + $0x139] sm:$0xff]
        %v4671 = vld [vmem:[%s4483 + $0x141] sm:$0xff]
        %v4672 = vld [vmem:[%s4483 + $0x151] sm:$0xff]
        %v4673 = vld [vmem:[%s4483 + $0x159] sm:$0xff]
        %v4674 = vld [vmem:[%s4483 + $0x169] sm:$0xff]
        %v4675 = vld [vmem:[%s4483 + $0x171] sm:$0xff]
        %v4676 = vld [vmem:[%s4483 + $0x2] sm:$0xff]
        %v4677 = vld [vmem:[%s4483 + $0xa] sm:$0xff]
        %v4678 = vld [vmem:[%s4483 + $0x1a] sm:$0xff]
        %v4679 = vld [vmem:[%s4483 + $0x22] sm:$0xff]
        %v4680 = vld [vmem:[%s4483 + $0x32] sm:$0xff]
        %v4681 = vld [vmem:[%s4483 + $0x3a] sm:$0xff]
        %v4682 = vld [vmem:[%s4483 + $0x4a] sm:$0xff]
        %v4683 = vld [vmem:[%s4483 + $0x52] sm:$0xff]
        %v4684 = vld [vmem:[%s4483 + $0x62] sm:$0xff]
        %v4685 = vld [vmem:[%s4483 + $0x6a] sm:$0xff]
        %v4686 = vld [vmem:[%s4483 + $0x7a] sm:$0xff]
        %v4687 = vld [vmem:[%s4483 + $0x82] sm:$0xff]
        %v4688 = vld [vmem:[%s4483 + $0x92] sm:$0xff]
        %v4689 = vld [vmem:[%s4483 + $0x9a] sm:$0xff]
        %v4690 = vld [vmem:[%s4483 + $0xaa] sm:$0xff]
        %v4691 = vld [vmem:[%s4483 + $0xb2] sm:$0xff]
        %v4692 = vld [vmem:[%s4483 + $0xc2] sm:$0xff]
        %v4693 = vld [vmem:[%s4483 + $0xca] sm:$0xff]
        %v4694 = vld [vmem:[%s4483 + $0xda] sm:$0xff]
        %v4695 = vld [vmem:[%s4483 + $0xe2] sm:$0xff]
        %v4696 = vld [vmem:[%s4483 + $0xf2] sm:$0xff]
        %v4697 = vld [vmem:[%s4483 + $0xfa] sm:$0xff]
        %v4698 = vld [vmem:[%s4483 + $0x10a] sm:$0xff]
        %v4699 = vld [vmem:[%s4483 + $0x112] sm:$0xff]
        %v4700 = vld [vmem:[%s4483 + $0x122] sm:$0xff]
        %v4701 = vld [vmem:[%s4483 + $0x12a] sm:$0xff]
        %v4702 = vld [vmem:[%s4483 + $0x13a] sm:$0xff]
        %v4703 = vld [vmem:[%s4483 + $0x142] sm:$0xff]
        %v4704 = vld [vmem:[%s4483 + $0x152] sm:$0xff]
        %v4705 = vld [vmem:[%s4483 + $0x15a] sm:$0xff]
        %v4706 = vld [vmem:[%s4483 + $0x16a] sm:$0xff]
        %v4707 = vld [vmem:[%s4483 + $0x172] sm:$0xff]
        %s4708 = scalar_lea.vmem [#allocation4], 48
        %v4709 = vld [vmem:[%s4708] sm:$0xff]
        %v4710 = vld [vmem:[%s4708 + $0x8] sm:$0xff]
        %v4711 = vld [vmem:[%s4708 + $0x18] sm:$0xff]
        %v4712 = vld [vmem:[%s4708 + $0x20] sm:$0xff]
        %v4713 = vld [vmem:[%s4708 + $0x30] sm:$0xff]
        %v4714 = vld [vmem:[%s4708 + $0x38] sm:$0xff]
        %v4715 = vld [vmem:[%s4708 + $0x48] sm:$0xff]
        %v4716 = vld [vmem:[%s4708 + $0x50] sm:$0xff]
        %v4717 = vld [vmem:[%s4708 + $0x60] sm:$0xff]
        %v4718 = vld [vmem:[%s4708 + $0x68] sm:$0xff]
        %v4719 = vld [vmem:[%s4708 + $0x78] sm:$0xff]
        %v4720 = vld [vmem:[%s4708 + $0x80] sm:$0xff]
        %v4721 = vld [vmem:[%s4708 + $0x90] sm:$0xff]
        %v4722 = vld [vmem:[%s4708 + $0x98] sm:$0xff]
        %v4723 = vld [vmem:[%s4708 + $0xa8] sm:$0xff]
        %v4724 = vld [vmem:[%s4708 + $0xb0] sm:$0xff]
        %v4725 = vld [vmem:[%s4708 + $0xc0] sm:$0xff]
        %v4726 = vld [vmem:[%s4708 + $0xc8] sm:$0xff]
        %v4727 = vld [vmem:[%s4708 + $0xd8] sm:$0xff]
        %v4728 = vld [vmem:[%s4708 + $0xe0] sm:$0xff]
        %v4729 = vld [vmem:[%s4708 + $0xf0] sm:$0xff]
        %v4730 = vld [vmem:[%s4708 + $0xf8] sm:$0xff]
        %v4731 = vld [vmem:[%s4708 + $0x108] sm:$0xff]
        %v4732 = vld [vmem:[%s4708 + $0x110] sm:$0xff]
        %v4733 = vld [vmem:[%s4708 + $0x120] sm:$0xff]
        %v4734 = vld [vmem:[%s4708 + $0x128] sm:$0xff]
        %v4735 = vld [vmem:[%s4708 + $0x138] sm:$0xff]
        %v4736 = vld [vmem:[%s4708 + $0x140] sm:$0xff]
        %v4737 = vld [vmem:[%s4708 + $0x150] sm:$0xff]
        %v4738 = vld [vmem:[%s4708 + $0x158] sm:$0xff]
        %v4739 = vld [vmem:[%s4708 + $0x168] sm:$0xff]
        %v4740 = vld [vmem:[%s4708 + $0x170] sm:$0xff]
        %v4741 = vld [vmem:[%s4708 + $0x1] sm:$0xff]
        %v4742 = vld [vmem:[%s4708 + $0x9] sm:$0xff]
        %v4743 = vld [vmem:[%s4708 + $0x19] sm:$0xff]
        %v4744 = vld [vmem:[%s4708 + $0x21] sm:$0xff]
        %v4745 = vld [vmem:[%s4708 + $0x31] sm:$0xff]
        %v4746 = vld [vmem:[%s4708 + $0x39] sm:$0xff]
        %v4747 = vld [vmem:[%s4708 + $0x49] sm:$0xff]
        %v4748 = vld [vmem:[%s4708 + $0x51] sm:$0xff]
        %v4749 = vld [vmem:[%s4708 + $0x61] sm:$0xff]
        %v4750 = vld [vmem:[%s4708 + $0x69] sm:$0xff]
        %v4751 = vld [vmem:[%s4708 + $0x79] sm:$0xff]
        %v4752 = vld [vmem:[%s4708 + $0x81] sm:$0xff]
        %v4753 = vld [vmem:[%s4708 + $0x91] sm:$0xff]
        %v4754 = vld [vmem:[%s4708 + $0x99] sm:$0xff]
        %v4755 = vld [vmem:[%s4708 + $0xa9] sm:$0xff]
        %v4756 = vld [vmem:[%s4708 + $0xb1] sm:$0xff]
        %v4757 = vld [vmem:[%s4708 + $0xc1] sm:$0xff]
        %v4758 = vld [vmem:[%s4708 + $0xc9] sm:$0xff]
        %v4759 = vld [vmem:[%s4708 + $0xd9] sm:$0xff]
        %v4760 = vld [vmem:[%s4708 + $0xe1] sm:$0xff]
        %v4761 = vld [vmem:[%s4708 + $0xf1] sm:$0xff]
        %v4762 = vld [vmem:[%s4708 + $0xf9] sm:$0xff]
        %v4763 = vld [vmem:[%s4708 + $0x109] sm:$0xff]
        %v4764 = vld [vmem:[%s4708 + $0x111] sm:$0xff]
        %v4765 = vld [vmem:[%s4708 + $0x121] sm:$0xff]
        %v4766 = vld [vmem:[%s4708 + $0x129] sm:$0xff]
        %v4767 = vld [vmem:[%s4708 + $0x139] sm:$0xff]
        %v4768 = vld [vmem:[%s4708 + $0x141] sm:$0xff]
        %v4769 = vld [vmem:[%s4708 + $0x151] sm:$0xff]
        %v4770 = vld [vmem:[%s4708 + $0x159] sm:$0xff]
        %v4771 = vld [vmem:[%s4708 + $0x169] sm:$0xff]
        %v4772 = vld [vmem:[%s4708 + $0x171] sm:$0xff]
        %v4773 = vld [vmem:[%s4708 + $0x2] sm:$0xff]
        %v4774 = vld [vmem:[%s4708 + $0xa] sm:$0xff]
        %v4775 = vld [vmem:[%s4708 + $0x1a] sm:$0xff]
        %v4776 = vld [vmem:[%s4708 + $0x22] sm:$0xff]
        %v4777 = vld [vmem:[%s4708 + $0x32] sm:$0xff]
        %v4778 = vld [vmem:[%s4708 + $0x3a] sm:$0xff]
        %v4779 = vld [vmem:[%s4708 + $0x4a] sm:$0xff]
        %v4780 = vld [vmem:[%s4708 + $0x52] sm:$0xff]
        %v4781 = vld [vmem:[%s4708 + $0x62] sm:$0xff]
        %v4782 = vld [vmem:[%s4708 + $0x6a] sm:$0xff]
        %v4783 = vld [vmem:[%s4708 + $0x7a] sm:$0xff]
        %v4784 = vld [vmem:[%s4708 + $0x82] sm:$0xff]
        %v4785 = vld [vmem:[%s4708 + $0x92] sm:$0xff]
        %v4786 = vld [vmem:[%s4708 + $0x9a] sm:$0xff]
        %v4787 = vld [vmem:[%s4708 + $0xaa] sm:$0xff]
        %v4788 = vld [vmem:[%s4708 + $0xb2] sm:$0xff]
        %v4789 = vld [vmem:[%s4708 + $0xc2] sm:$0xff]
        %v4790 = vld [vmem:[%s4708 + $0xca] sm:$0xff]
        %v4791 = vld [vmem:[%s4708 + $0xda] sm:$0xff]
        %v4792 = vld [vmem:[%s4708 + $0xe2] sm:$0xff]
        %v4793 = vld [vmem:[%s4708 + $0xf2] sm:$0xff]
        %v4794 = vld [vmem:[%s4708 + $0xfa] sm:$0xff]
        %v4795 = vld [vmem:[%s4708 + $0x10a] sm:$0xff]
        %v4796 = vld [vmem:[%s4708 + $0x112] sm:$0xff]
        %v4797 = vld [vmem:[%s4708 + $0x122] sm:$0xff]
        %v4798 = vld [vmem:[%s4708 + $0x12a] sm:$0xff]
        %v4799 = vld [vmem:[%s4708 + $0x13a] sm:$0xff]
        %v4800 = vld [vmem:[%s4708 + $0x142] sm:$0xff]
        %v4801 = vld [vmem:[%s4708 + $0x152] sm:$0xff]
        %v4802 = vld [vmem:[%s4708 + $0x15a] sm:$0xff]
        %v4803 = vld [vmem:[%s4708 + $0x16a] sm:$0xff]
        %v4804 = vld [vmem:[%s4708 + $0x172] sm:$0xff]
        %4837 = vrot.lane.b32.xlu0 %v4548, 16
        %v4838 = vpop.permute.xlu0 %4837
        %4839 = vrot.lane.b32.xlu0 %v4549, 16
        %v4840 = vpop.permute.xlu0 %4839
        %4841 = vrot.lane.b32.xlu0 %v4550, 16
        %v4842 = vpop.permute.xlu0 %4841
        %4843 = vrot.lane.b32.xlu0 %v4551, 16
        %v4844 = vpop.permute.xlu0 %4843
        %4845 = vrot.lane.b32.xlu0 %v4552, 16
        %v4846 = vpop.permute.xlu0 %4845
        %4847 = vrot.lane.b32.xlu0 %v4553, 16
        %v4848 = vpop.permute.xlu0 %4847
        %4849 = vrot.lane.b32.xlu0 %v4554, 16
        %v4850 = vpop.permute.xlu0 %4849
        %4851 = vrot.lane.b32.xlu0 %v4555, 16
        %v4852 = vpop.permute.xlu0 %4851
        %4853 = vrot.lane.b32.xlu0 %v4556, 16
        %v4854 = vpop.permute.xlu0 %4853
        %4855 = vrot.lane.b32.xlu0 %v4557, 16
        %v4856 = vpop.permute.xlu0 %4855
        %4857 = vrot.lane.b32.xlu0 %v4558, 16
        %v4858 = vpop.permute.xlu0 %4857
        %4859 = vrot.lane.b32.xlu0 %v4559, 16
        %v4860 = vpop.permute.xlu0 %4859
        %4861 = vrot.lane.b32.xlu0 %v4560, 16
        %v4862 = vpop.permute.xlu0 %4861
        %4863 = vrot.lane.b32.xlu0 %v4561, 16
        %v4864 = vpop.permute.xlu0 %4863
        %4865 = vrot.lane.b32.xlu0 %v4562, 16
        %v4866 = vpop.permute.xlu0 %4865
        %4867 = vrot.lane.b32.xlu0 %v4563, 16
        %v4868 = vpop.permute.xlu0 %4867
        %4869 = vrot.lane.b32.xlu0 %v4564, 16
        %v4870 = vpop.permute.xlu0 %4869
        %4871 = vrot.lane.b32.xlu0 %v4565, 16
        %v4872 = vpop.permute.xlu0 %4871
        %4873 = vrot.lane.b32.xlu0 %v4566, 16
        %v4874 = vpop.permute.xlu0 %4873
        %4875 = vrot.lane.b32.xlu0 %v4567, 16
        %v4876 = vpop.permute.xlu0 %4875
        %4877 = vrot.lane.b32.xlu0 %v4568, 16
        %v4878 = vpop.permute.xlu0 %4877
        %4879 = vrot.lane.b32.xlu0 %v4569, 16
        %v4880 = vpop.permute.xlu0 %4879
        %4881 = vrot.lane.b32.xlu0 %v4570, 16
        %v4882 = vpop.permute.xlu0 %4881
        %4883 = vrot.lane.b32.xlu0 %v4571, 16
        %v4884 = vpop.permute.xlu0 %4883
        %4885 = vrot.lane.b32.xlu0 %v4572, 16
        %v4886 = vpop.permute.xlu0 %4885
        %4887 = vrot.lane.b32.xlu0 %v4573, 16
        %v4888 = vpop.permute.xlu0 %4887
        %4889 = vrot.lane.b32.xlu0 %v4574, 16
        %v4890 = vpop.permute.xlu0 %4889
        %4891 = vrot.lane.b32.xlu0 %v4575, 16
        %v4892 = vpop.permute.xlu0 %4891
        %4893 = vrot.lane.b32.xlu0 %v4576, 16
        %v4894 = vpop.permute.xlu0 %4893
        %4895 = vrot.lane.b32.xlu0 %v4577, 16
        %v4896 = vpop.permute.xlu0 %4895
        %4897 = vrot.lane.b32.xlu0 %v4578, 16
        %v4898 = vpop.permute.xlu0 %4897
        %4899 = vrot.lane.b32.xlu0 %v4579, 16
        %v4900 = vpop.permute.xlu0 %4899
        %4965 = vrot.lane.b32.xlu0 %v4580, 32
        %v4966 = vpop.permute.xlu0 %4965
        %4967 = vrot.lane.b32.xlu0 %v4581, 32
        %v4968 = vpop.permute.xlu0 %4967
        %4969 = vrot.lane.b32.xlu0 %v4582, 32
        %v4970 = vpop.permute.xlu0 %4969
        %4971 = vrot.lane.b32.xlu0 %v4583, 32
        %v4972 = vpop.permute.xlu0 %4971
        %4973 = vrot.lane.b32.xlu0 %v4584, 32
        %v4974 = vpop.permute.xlu0 %4973
        %4975 = vrot.lane.b32.xlu0 %v4585, 32
        %v4976 = vpop.permute.xlu0 %4975
        %4977 = vrot.lane.b32.xlu0 %v4586, 32
        %v4978 = vpop.permute.xlu0 %4977
        %4979 = vrot.lane.b32.xlu0 %v4587, 32
        %v4980 = vpop.permute.xlu0 %4979
        %4981 = vrot.lane.b32.xlu0 %v4588, 32
        %v4982 = vpop.permute.xlu0 %4981
        %4983 = vrot.lane.b32.xlu0 %v4589, 32
        %v4984 = vpop.permute.xlu0 %4983
        %4985 = vrot.lane.b32.xlu0 %v4590, 32
        %v4986 = vpop.permute.xlu0 %4985
        %4987 = vrot.lane.b32.xlu0 %v4591, 32
        %v4988 = vpop.permute.xlu0 %4987
        %4989 = vrot.lane.b32.xlu0 %v4592, 32
        %v4990 = vpop.permute.xlu0 %4989
        %4991 = vrot.lane.b32.xlu0 %v4593, 32
        %v4992 = vpop.permute.xlu0 %4991
        %4993 = vrot.lane.b32.xlu0 %v4594, 32
        %v4994 = vpop.permute.xlu0 %4993
        %4995 = vrot.lane.b32.xlu0 %v4595, 32
        %v4996 = vpop.permute.xlu0 %4995
        %4997 = vrot.lane.b32.xlu0 %v4596, 32
        %v4998 = vpop.permute.xlu0 %4997
        %4999 = vrot.lane.b32.xlu0 %v4597, 32
        %v5000 = vpop.permute.xlu0 %4999
        %5001 = vrot.lane.b32.xlu0 %v4598, 32
        %v5002 = vpop.permute.xlu0 %5001
        %5003 = vrot.lane.b32.xlu0 %v4599, 32
        %v5004 = vpop.permute.xlu0 %5003
        %5005 = vrot.lane.b32.xlu0 %v4600, 32
        %v5006 = vpop.permute.xlu0 %5005
        %5007 = vrot.lane.b32.xlu0 %v4601, 32
        %v5008 = vpop.permute.xlu0 %5007
        %5009 = vrot.lane.b32.xlu0 %v4602, 32
        %v5010 = vpop.permute.xlu0 %5009
        %5011 = vrot.lane.b32.xlu0 %v4603, 32
        %v5012 = vpop.permute.xlu0 %5011
        %5013 = vrot.lane.b32.xlu0 %v4604, 32
        %v5014 = vpop.permute.xlu0 %5013
        %5015 = vrot.lane.b32.xlu0 %v4605, 32
        %v5016 = vpop.permute.xlu0 %5015
        %5017 = vrot.lane.b32.xlu0 %v4606, 32
        %v5018 = vpop.permute.xlu0 %5017
        %5019 = vrot.lane.b32.xlu0 %v4607, 32
        %v5020 = vpop.permute.xlu0 %5019
        %5021 = vrot.lane.b32.xlu0 %v4608, 32
        %v5022 = vpop.permute.xlu0 %5021
        %5023 = vrot.lane.b32.xlu0 %v4609, 32
        %v5024 = vpop.permute.xlu0 %5023
        %5025 = vrot.lane.b32.xlu0 %v4610, 32
        %v5026 = vpop.permute.xlu0 %5025
        %5027 = vrot.lane.b32.xlu0 %v4611, 32
        %v5028 = vpop.permute.xlu0 %5027
        %5093 = vrot.lane.b32.xlu0 %v4612, 48
        %v5094 = vpop.permute.xlu0 %5093
        %5095 = vrot.lane.b32.xlu0 %v4613, 48
        %v5096 = vpop.permute.xlu0 %5095
        %5097 = vrot.lane.b32.xlu0 %v4614, 48
        %v5098 = vpop.permute.xlu0 %5097
        %5099 = vrot.lane.b32.xlu0 %v4615, 48
        %v5100 = vpop.permute.xlu0 %5099
        %5101 = vrot.lane.b32.xlu0 %v4616, 48
        %v5102 = vpop.permute.xlu0 %5101
        %5103 = vrot.lane.b32.xlu0 %v4617, 48
        %v5104 = vpop.permute.xlu0 %5103
        %5105 = vrot.lane.b32.xlu0 %v4618, 48
        %v5106 = vpop.permute.xlu0 %5105
        %5107 = vrot.lane.b32.xlu0 %v4619, 48
        %v5108 = vpop.permute.xlu0 %5107
        %5109 = vrot.lane.b32.xlu0 %v4620, 48
        %v5110 = vpop.permute.xlu0 %5109
        %5111 = vrot.lane.b32.xlu0 %v4621, 48
        %v5112 = vpop.permute.xlu0 %5111
        %5113 = vrot.lane.b32.xlu0 %v4622, 48
        %v5114 = vpop.permute.xlu0 %5113
        %5115 = vrot.lane.b32.xlu0 %v4623, 48
        %v5116 = vpop.permute.xlu0 %5115
        %5117 = vrot.lane.b32.xlu0 %v4624, 48
        %v5118 = vpop.permute.xlu0 %5117
        %5119 = vrot.lane.b32.xlu0 %v4625, 48
        %v5120 = vpop.permute.xlu0 %5119
        %5121 = vrot.lane.b32.xlu0 %v4626, 48
        %v5122 = vpop.permute.xlu0 %5121
        %5123 = vrot.lane.b32.xlu0 %v4627, 48
        %v5124 = vpop.permute.xlu0 %5123
        %5125 = vrot.lane.b32.xlu0 %v4628, 48
        %v5126 = vpop.permute.xlu0 %5125
        %5127 = vrot.lane.b32.xlu0 %v4629, 48
        %v5128 = vpop.permute.xlu0 %5127
        %5129 = vrot.lane.b32.xlu0 %v4630, 48
        %v5130 = vpop.permute.xlu0 %5129
        %5131 = vrot.lane.b32.xlu0 %v4631, 48
        %v5132 = vpop.permute.xlu0 %5131
        %5133 = vrot.lane.b32.xlu0 %v4632, 48
        %v5134 = vpop.permute.xlu0 %5133
        %5135 = vrot.lane.b32.xlu0 %v4633, 48
        %v5136 = vpop.permute.xlu0 %5135
        %5137 = vrot.lane.b32.xlu0 %v4634, 48
        %v5138 = vpop.permute.xlu0 %5137
        %5139 = vrot.lane.b32.xlu0 %v4635, 48
        %v5140 = vpop.permute.xlu0 %5139
        %5141 = vrot.lane.b32.xlu0 %v4636, 48
        %v5142 = vpop.permute.xlu0 %5141
        %5143 = vrot.lane.b32.xlu0 %v4637, 48
        %v5144 = vpop.permute.xlu0 %5143
        %5145 = vrot.lane.b32.xlu0 %v4638, 48
        %v5146 = vpop.permute.xlu0 %5145
        %5147 = vrot.lane.b32.xlu0 %v4639, 48
        %v5148 = vpop.permute.xlu0 %5147
        %5149 = vrot.lane.b32.xlu0 %v4640, 48
        %v5150 = vpop.permute.xlu0 %5149
        %5151 = vrot.lane.b32.xlu0 %v4641, 48
        %v5152 = vpop.permute.xlu0 %5151
        %5153 = vrot.lane.b32.xlu0 %v4642, 48
        %v5154 = vpop.permute.xlu0 %5153
        %5155 = vrot.lane.b32.xlu0 %v4643, 48
        %v5156 = vpop.permute.xlu0 %5155
        %5221 = vrot.lane.b32.xlu0 %v4644, 64
        %v5222 = vpop.permute.xlu0 %5221
        %5223 = vrot.lane.b32.xlu0 %v4645, 64
        %v5224 = vpop.permute.xlu0 %5223
        %5225 = vrot.lane.b32.xlu0 %v4646, 64
        %v5226 = vpop.permute.xlu0 %5225
        %5227 = vrot.lane.b32.xlu0 %v4647, 64
        %v5228 = vpop.permute.xlu0 %5227
        %5229 = vrot.lane.b32.xlu0 %v4648, 64
        %v5230 = vpop.permute.xlu0 %5229
        %5231 = vrot.lane.b32.xlu0 %v4649, 64
        %v5232 = vpop.permute.xlu0 %5231
        %5233 = vrot.lane.b32.xlu0 %v4650, 64
        %v5234 = vpop.permute.xlu0 %5233
        %5235 = vrot.lane.b32.xlu0 %v4651, 64
        %v5236 = vpop.permute.xlu0 %5235
        %5237 = vrot.lane.b32.xlu0 %v4652, 64
        %v5238 = vpop.permute.xlu0 %5237
        %5239 = vrot.lane.b32.xlu0 %v4653, 64
        %v5240 = vpop.permute.xlu0 %5239
        %5241 = vrot.lane.b32.xlu0 %v4654, 64
        %v5242 = vpop.permute.xlu0 %5241
        %5243 = vrot.lane.b32.xlu0 %v4655, 64
        %v5244 = vpop.permute.xlu0 %5243
        %5245 = vrot.lane.b32.xlu0 %v4656, 64
        %v5246 = vpop.permute.xlu0 %5245
        %5247 = vrot.lane.b32.xlu0 %v4657, 64
        %v5248 = vpop.permute.xlu0 %5247
        %5249 = vrot.lane.b32.xlu0 %v4658, 64
        %v5250 = vpop.permute.xlu0 %5249
        %5251 = vrot.lane.b32.xlu0 %v4659, 64
        %v5252 = vpop.permute.xlu0 %5251
        %5253 = vrot.lane.b32.xlu0 %v4660, 64
        %v5254 = vpop.permute.xlu0 %5253
        %5255 = vrot.lane.b32.xlu0 %v4661, 64
        %v5256 = vpop.permute.xlu0 %5255
        %5257 = vrot.lane.b32.xlu0 %v4662, 64
        %v5258 = vpop.permute.xlu0 %5257
        %5259 = vrot.lane.b32.xlu0 %v4663, 64
        %v5260 = vpop.permute.xlu0 %5259
        %5261 = vrot.lane.b32.xlu0 %v4664, 64
        %v5262 = vpop.permute.xlu0 %5261
        %5263 = vrot.lane.b32.xlu0 %v4665, 64
        %v5264 = vpop.permute.xlu0 %5263
        %5265 = vrot.lane.b32.xlu0 %v4666, 64
        %v5266 = vpop.permute.xlu0 %5265
        %5267 = vrot.lane.b32.xlu0 %v4667, 64
        %v5268 = vpop.permute.xlu0 %5267
        %5269 = vrot.lane.b32.xlu0 %v4668, 64
        %v5270 = vpop.permute.xlu0 %5269
        %5271 = vrot.lane.b32.xlu0 %v4669, 64
        %v5272 = vpop.permute.xlu0 %5271
        %5273 = vrot.lane.b32.xlu0 %v4670, 64
        %v5274 = vpop.permute.xlu0 %5273
        %5275 = vrot.lane.b32.xlu0 %v4671, 64
        %v5276 = vpop.permute.xlu0 %5275
        %5277 = vrot.lane.b32.xlu0 %v4672, 64
        %v5278 = vpop.permute.xlu0 %5277
        %5279 = vrot.lane.b32.xlu0 %v4673, 64
        %v5280 = vpop.permute.xlu0 %5279
        %5281 = vrot.lane.b32.xlu0 %v4674, 64
        %v5282 = vpop.permute.xlu0 %5281
        %5283 = vrot.lane.b32.xlu0 %v4675, 64
        %v5284 = vpop.permute.xlu0 %5283
        %5349 = vrot.lane.b32.xlu0 %v4676, 80
        %v5350 = vpop.permute.xlu0 %5349
        %5351 = vrot.lane.b32.xlu0 %v4677, 80
        %v5352 = vpop.permute.xlu0 %5351
        %5353 = vrot.lane.b32.xlu0 %v4678, 80
        %v5354 = vpop.permute.xlu0 %5353
        %5355 = vrot.lane.b32.xlu0 %v4679, 80
        %v5356 = vpop.permute.xlu0 %5355
        %5357 = vrot.lane.b32.xlu0 %v4680, 80
        %v5358 = vpop.permute.xlu0 %5357
        %5359 = vrot.lane.b32.xlu0 %v4681, 80
        %v5360 = vpop.permute.xlu0 %5359
        %5361 = vrot.lane.b32.xlu0 %v4682, 80
        %v5362 = vpop.permute.xlu0 %5361
        %5363 = vrot.lane.b32.xlu0 %v4683, 80
        %v5364 = vpop.permute.xlu0 %5363
        %5365 = vrot.lane.b32.xlu0 %v4684, 80
        %v5366 = vpop.permute.xlu0 %5365
        %5367 = vrot.lane.b32.xlu0 %v4685, 80
        %v5368 = vpop.permute.xlu0 %5367
        %5369 = vrot.lane.b32.xlu0 %v4686, 80
        %v5370 = vpop.permute.xlu0 %5369
        %5371 = vrot.lane.b32.xlu0 %v4687, 80
        %v5372 = vpop.permute.xlu0 %5371
        %5373 = vrot.lane.b32.xlu0 %v4688, 80
        %v5374 = vpop.permute.xlu0 %5373
        %5375 = vrot.lane.b32.xlu0 %v4689, 80
        %v5376 = vpop.permute.xlu0 %5375
        %5377 = vrot.lane.b32.xlu0 %v4690, 80
        %v5378 = vpop.permute.xlu0 %5377
        %5379 = vrot.lane.b32.xlu0 %v4691, 80
        %v5380 = vpop.permute.xlu0 %5379
        %5381 = vrot.lane.b32.xlu0 %v4692, 80
        %v5382 = vpop.permute.xlu0 %5381
        %5383 = vrot.lane.b32.xlu0 %v4693, 80
        %v5384 = vpop.permute.xlu0 %5383
        %5385 = vrot.lane.b32.xlu0 %v4694, 80
        %v5386 = vpop.permute.xlu0 %5385
        %5387 = vrot.lane.b32.xlu0 %v4695, 80
        %v5388 = vpop.permute.xlu0 %5387
        %5389 = vrot.lane.b32.xlu0 %v4696, 80
        %v5390 = vpop.permute.xlu0 %5389
        %5391 = vrot.lane.b32.xlu0 %v4697, 80
        %v5392 = vpop.permute.xlu0 %5391
        %5393 = vrot.lane.b32.xlu0 %v4698, 80
        %v5394 = vpop.permute.xlu0 %5393
        %5395 = vrot.lane.b32.xlu0 %v4699, 80
        %v5396 = vpop.permute.xlu0 %5395
        %5397 = vrot.lane.b32.xlu0 %v4700, 80
        %v5398 = vpop.permute.xlu0 %5397
        %5399 = vrot.lane.b32.xlu0 %v4701, 80
        %v5400 = vpop.permute.xlu0 %5399
        %5401 = vrot.lane.b32.xlu0 %v4702, 80
        %v5402 = vpop.permute.xlu0 %5401
        %5403 = vrot.lane.b32.xlu0 %v4703, 80
        %v5404 = vpop.permute.xlu0 %5403
        %5405 = vrot.lane.b32.xlu0 %v4704, 80
        %v5406 = vpop.permute.xlu0 %5405
        %5407 = vrot.lane.b32.xlu0 %v4705, 80
        %v5408 = vpop.permute.xlu0 %5407
        %5409 = vrot.lane.b32.xlu0 %v4706, 80
        %v5410 = vpop.permute.xlu0 %5409
        %5411 = vrot.lane.b32.xlu0 %v4707, 80
        %v5412 = vpop.permute.xlu0 %5411
        %5477 = vrot.lane.b32.xlu0 %v4709, 96
        %v5478 = vpop.permute.xlu0 %5477
        %5479 = vrot.lane.b32.xlu0 %v4710, 96
        %v5480 = vpop.permute.xlu0 %5479
        %5481 = vrot.lane.b32.xlu0 %v4711, 96
        %v5482 = vpop.permute.xlu0 %5481
        %5483 = vrot.lane.b32.xlu0 %v4712, 96
        %v5484 = vpop.permute.xlu0 %5483
        %5485 = vrot.lane.b32.xlu0 %v4713, 96
        %v5486 = vpop.permute.xlu0 %5485
        %5487 = vrot.lane.b32.xlu0 %v4714, 96
        %v5488 = vpop.permute.xlu0 %5487
        %5489 = vrot.lane.b32.xlu0 %v4715, 96
        %v5490 = vpop.permute.xlu0 %5489
        %5491 = vrot.lane.b32.xlu0 %v4716, 96
        %v5492 = vpop.permute.xlu0 %5491
        %5493 = vrot.lane.b32.xlu0 %v4717, 96
        %v5494 = vpop.permute.xlu0 %5493
        %5495 = vrot.lane.b32.xlu0 %v4718, 96
        %v5496 = vpop.permute.xlu0 %5495
        %5497 = vrot.lane.b32.xlu0 %v4719, 96
        %v5498 = vpop.permute.xlu0 %5497
        %5499 = vrot.lane.b32.xlu0 %v4720, 96
        %v5500 = vpop.permute.xlu0 %5499
        %5501 = vrot.lane.b32.xlu0 %v4721, 96
        %v5502 = vpop.permute.xlu0 %5501
        %5503 = vrot.lane.b32.xlu0 %v4722, 96
        %v5504 = vpop.permute.xlu0 %5503
        %5505 = vrot.lane.b32.xlu0 %v4723, 96
        %v5506 = vpop.permute.xlu0 %5505
        %5507 = vrot.lane.b32.xlu0 %v4724, 96
        %v5508 = vpop.permute.xlu0 %5507
        %5509 = vrot.lane.b32.xlu0 %v4725, 96
        %v5510 = vpop.permute.xlu0 %5509
        %5511 = vrot.lane.b32.xlu0 %v4726, 96
        %v5512 = vpop.permute.xlu0 %5511
        %5513 = vrot.lane.b32.xlu0 %v4727, 96
        %v5514 = vpop.permute.xlu0 %5513
        %5515 = vrot.lane.b32.xlu0 %v4728, 96
        %v5516 = vpop.permute.xlu0 %5515
        %5517 = vrot.lane.b32.xlu0 %v4729, 96
        %v5518 = vpop.permute.xlu0 %5517
        %5519 = vrot.lane.b32.xlu0 %v4730, 96
        %v5520 = vpop.permute.xlu0 %5519
        %5521 = vrot.lane.b32.xlu0 %v4731, 96
        %v5522 = vpop.permute.xlu0 %5521
        %5523 = vrot.lane.b32.xlu0 %v4732, 96
        %v5524 = vpop.permute.xlu0 %5523
        %5525 = vrot.lane.b32.xlu0 %v4733, 96
        %v5526 = vpop.permute.xlu0 %5525
        %5527 = vrot.lane.b32.xlu0 %v4734, 96
        %v5528 = vpop.permute.xlu0 %5527
        %5529 = vrot.lane.b32.xlu0 %v4735, 96
        %v5530 = vpop.permute.xlu0 %5529
        %5531 = vrot.lane.b32.xlu0 %v4736, 96
        %v5532 = vpop.permute.xlu0 %5531
        %5533 = vrot.lane.b32.xlu0 %v4737, 96
        %v5534 = vpop.permute.xlu0 %5533
        %5535 = vrot.lane.b32.xlu0 %v4738, 96
        %v5536 = vpop.permute.xlu0 %5535
        %5537 = vrot.lane.b32.xlu0 %v4739, 96
        %v5538 = vpop.permute.xlu0 %5537
        %5539 = vrot.lane.b32.xlu0 %v4740, 96
        %v5540 = vpop.permute.xlu0 %5539
        %5605 = vrot.lane.b32.xlu0 %v4741, 112
        %v5606 = vpop.permute.xlu0 %5605
        %5607 = vrot.lane.b32.xlu0 %v4742, 112
        %v5608 = vpop.permute.xlu0 %5607
        %5609 = vrot.lane.b32.xlu0 %v4743, 112
        %v5610 = vpop.permute.xlu0 %5609
        %5611 = vrot.lane.b32.xlu0 %v4744, 112
        %v5612 = vpop.permute.xlu0 %5611
        %5613 = vrot.lane.b32.xlu0 %v4745, 112
        %v5614 = vpop.permute.xlu0 %5613
        %5615 = vrot.lane.b32.xlu0 %v4746, 112
        %v5616 = vpop.permute.xlu0 %5615
        %5617 = vrot.lane.b32.xlu0 %v4747, 112
        %v5618 = vpop.permute.xlu0 %5617
        %5619 = vrot.lane.b32.xlu0 %v4748, 112
        %v5620 = vpop.permute.xlu0 %5619
        %5621 = vrot.lane.b32.xlu0 %v4749, 112
        %v5622 = vpop.permute.xlu0 %5621
        %5623 = vrot.lane.b32.xlu0 %v4750, 112
        %v5624 = vpop.permute.xlu0 %5623
        %5625 = vrot.lane.b32.xlu0 %v4751, 112
        %v5626 = vpop.permute.xlu0 %5625
        %5627 = vrot.lane.b32.xlu0 %v4752, 112
        %v5628 = vpop.permute.xlu0 %5627
        %5629 = vrot.lane.b32.xlu0 %v4753, 112
        %v5630 = vpop.permute.xlu0 %5629
        %5631 = vrot.lane.b32.xlu0 %v4754, 112
        %v5632 = vpop.permute.xlu0 %5631
        %5633 = vrot.lane.b32.xlu0 %v4755, 112
        %v5634 = vpop.permute.xlu0 %5633
        %5635 = vrot.lane.b32.xlu0 %v4756, 112
        %v5636 = vpop.permute.xlu0 %5635
        %5637 = vrot.lane.b32.xlu0 %v4757, 112
        %v5638 = vpop.permute.xlu0 %5637
        %5639 = vrot.lane.b32.xlu0 %v4758, 112
        %v5640 = vpop.permute.xlu0 %5639
        %5641 = vrot.lane.b32.xlu0 %v4759, 112
        %v5642 = vpop.permute.xlu0 %5641
        %5643 = vrot.lane.b32.xlu0 %v4760, 112
        %v5644 = vpop.permute.xlu0 %5643
        %5645 = vrot.lane.b32.xlu0 %v4761, 112
        %v5646 = vpop.permute.xlu0 %5645
        %5647 = vrot.lane.b32.xlu0 %v4762, 112
        %v5648 = vpop.permute.xlu0 %5647
        %5649 = vrot.lane.b32.xlu0 %v4763, 112
        %v5650 = vpop.permute.xlu0 %5649
        %5651 = vrot.lane.b32.xlu0 %v4764, 112
        %v5652 = vpop.permute.xlu0 %5651
        %5653 = vrot.lane.b32.xlu0 %v4765, 112
        %v5654 = vpop.permute.xlu0 %5653
        %5655 = vrot.lane.b32.xlu0 %v4766, 112
        %v5656 = vpop.permute.xlu0 %5655
        %5657 = vrot.lane.b32.xlu0 %v4767, 112
        %v5658 = vpop.permute.xlu0 %5657
        %5659 = vrot.lane.b32.xlu0 %v4768, 112
        %v5660 = vpop.permute.xlu0 %5659
        %5661 = vrot.lane.b32.xlu0 %v4769, 112
        %v5662 = vpop.permute.xlu0 %5661
        %5663 = vrot.lane.b32.xlu0 %v4770, 112
        %v5664 = vpop.permute.xlu0 %5663
        %5665 = vrot.lane.b32.xlu0 %v4771, 112
        %v5666 = vpop.permute.xlu0 %5665
        %5667 = vrot.lane.b32.xlu0 %v4772, 112
        %v5668 = vpop.permute.xlu0 %5667
        %v5701 = vsel %vm1862, %v4516, %v4838
        %v5702 = vsel %vm1862, %v4517, %v4840
        %v5703 = vsel %vm1862, %v4518, %v4842
        %v5704 = vsel %vm1862, %v4519, %v4844
        %v5705 = vsel %vm1862, %v4520, %v4846
        %v5706 = vsel %vm1862, %v4521, %v4848
        %v5707 = vsel %vm1862, %v4522, %v4850
        %v5708 = vsel %vm1862, %v4523, %v4852
        %v5709 = vsel %vm1862, %v4524, %v4854
        %v5710 = vsel %vm1862, %v4525, %v4856
        %v5711 = vsel %vm1862, %v4526, %v4858
        %v5712 = vsel %vm1862, %v4527, %v4860
        %v5713 = vsel %vm1862, %v4528, %v4862
        %v5714 = vsel %vm1862, %v4529, %v4864
        %v5715 = vsel %vm1862, %v4530, %v4866
        %v5716 = vsel %vm1862, %v4531, %v4868
        %v5717 = vsel %vm1862, %v4532, %v4870
        %v5718 = vsel %vm1862, %v4533, %v4872
        %v5719 = vsel %vm1862, %v4534, %v4874
        %v5720 = vsel %vm1862, %v4535, %v4876
        %v5721 = vsel %vm1862, %v4536, %v4878
        %v5722 = vsel %vm1862, %v4537, %v4880
        %v5723 = vsel %vm1862, %v4538, %v4882
        %v5724 = vsel %vm1862, %v4539, %v4884
        %v5725 = vsel %vm1862, %v4540, %v4886
        %v5726 = vsel %vm1862, %v4541, %v4888
        %v5727 = vsel %vm1862, %v4542, %v4890
        %v5728 = vsel %vm1862, %v4543, %v4892
        %v5729 = vsel %vm1862, %v4544, %v4894
        %v5730 = vsel %vm1862, %v4545, %v4896
        %v5731 = vsel %vm1862, %v4546, %v4898
        %v5732 = vsel %vm1862, %v4547, %v4900
        %v5733 = vsel %vm1994, %v5701, %v4966
        %v5734 = vsel %vm1994, %v5702, %v4968
        %v5735 = vsel %vm1994, %v5703, %v4970
        %v5736 = vsel %vm1994, %v5704, %v4972
        %v5737 = vsel %vm1994, %v5705, %v4974
        %v5738 = vsel %vm1994, %v5706, %v4976
        %v5739 = vsel %vm1994, %v5707, %v4978
        %v5740 = vsel %vm1994, %v5708, %v4980
        %v5741 = vsel %vm1994, %v5709, %v4982
        %v5742 = vsel %vm1994, %v5710, %v4984
        %v5743 = vsel %vm1994, %v5711, %v4986
        %v5744 = vsel %vm1994, %v5712, %v4988
        %v5745 = vsel %vm1994, %v5713, %v4990
        %v5746 = vsel %vm1994, %v5714, %v4992
        %v5747 = vsel %vm1994, %v5715, %v4994
        %v5748 = vsel %vm1994, %v5716, %v4996
        %v5749 = vsel %vm1994, %v5717, %v4998
        %v5750 = vsel %vm1994, %v5718, %v5000
        %v5751 = vsel %vm1994, %v5719, %v5002
        %v5752 = vsel %vm1994, %v5720, %v5004
        %v5753 = vsel %vm1994, %v5721, %v5006
        %v5754 = vsel %vm1994, %v5722, %v5008
        %v5755 = vsel %vm1994, %v5723, %v5010
        %v5756 = vsel %vm1994, %v5724, %v5012
        %v5757 = vsel %vm1994, %v5725, %v5014
        %v5758 = vsel %vm1994, %v5726, %v5016
        %v5759 = vsel %vm1994, %v5727, %v5018
        %v5760 = vsel %vm1994, %v5728, %v5020
        %v5761 = vsel %vm1994, %v5729, %v5022
        %v5762 = vsel %vm1994, %v5730, %v5024
        %v5763 = vsel %vm1994, %v5731, %v5026
        %v5764 = vsel %vm1994, %v5732, %v5028
        %v5765 = vsel %vm3959, %v5733, %v5094
        %v5766 = vsel %vm3959, %v5734, %v5096
        %v5767 = vsel %vm3959, %v5735, %v5098
        %v5768 = vsel %vm3959, %v5736, %v5100
        %v5769 = vsel %vm3959, %v5737, %v5102
        %v5770 = vsel %vm3959, %v5738, %v5104
        %v5771 = vsel %vm3959, %v5739, %v5106
        %v5772 = vsel %vm3959, %v5740, %v5108
        %v5773 = vsel %vm3959, %v5741, %v5110
        %v5774 = vsel %vm3959, %v5742, %v5112
        %v5775 = vsel %vm3959, %v5743, %v5114
        %v5776 = vsel %vm3959, %v5744, %v5116
        %v5777 = vsel %vm3959, %v5745, %v5118
        %v5778 = vsel %vm3959, %v5746, %v5120
        %v5779 = vsel %vm3959, %v5747, %v5122
        %v5780 = vsel %vm3959, %v5748, %v5124
        %v5781 = vsel %vm3959, %v5749, %v5126
        %v5782 = vsel %vm3959, %v5750, %v5128
        %v5783 = vsel %vm3959, %v5751, %v5130
        %v5784 = vsel %vm3959, %v5752, %v5132
        %v5785 = vsel %vm3959, %v5753, %v5134
        %v5786 = vsel %vm3959, %v5754, %v5136
        %v5787 = vsel %vm3959, %v5755, %v5138
        %v5788 = vsel %vm3959, %v5756, %v5140
        %v5789 = vsel %vm3959, %v5757, %v5142
        %v5790 = vsel %vm3959, %v5758, %v5144
        %v5791 = vsel %vm3959, %v5759, %v5146
        %v5792 = vsel %vm3959, %v5760, %v5148
        %v5793 = vsel %vm3959, %v5761, %v5150
        %v5794 = vsel %vm3959, %v5762, %v5152
        %v5795 = vsel %vm3959, %v5763, %v5154
        %v5796 = vsel %vm3959, %v5764, %v5156
        %v5797 = vsel %vm4025, %v5765, %v5222
        %v5798 = vsel %vm4025, %v5766, %v5224
        %v5799 = vsel %vm4025, %v5767, %v5226
        %v5800 = vsel %vm4025, %v5768, %v5228
        %v5801 = vsel %vm4025, %v5769, %v5230
        %v5802 = vsel %vm4025, %v5770, %v5232
        %v5803 = vsel %vm4025, %v5771, %v5234
        %v5804 = vsel %vm4025, %v5772, %v5236
        %v5805 = vsel %vm4025, %v5773, %v5238
        %v5806 = vsel %vm4025, %v5774, %v5240
        %v5807 = vsel %vm4025, %v5775, %v5242
        %v5808 = vsel %vm4025, %v5776, %v5244
        %v5809 = vsel %vm4025, %v5777, %v5246
        %v5810 = vsel %vm4025, %v5778, %v5248
        %v5811 = vsel %vm4025, %v5779, %v5250
        %v5812 = vsel %vm4025, %v5780, %v5252
        %v5813 = vsel %vm4025, %v5781, %v5254
        %v5814 = vsel %vm4025, %v5782, %v5256
        %v5815 = vsel %vm4025, %v5783, %v5258
        %v5816 = vsel %vm4025, %v5784, %v5260
        %v5817 = vsel %vm4025, %v5785, %v5262
        %v5818 = vsel %vm4025, %v5786, %v5264
        %v5819 = vsel %vm4025, %v5787, %v5266
        %v5820 = vsel %vm4025, %v5788, %v5268
        %v5821 = vsel %vm4025, %v5789, %v5270
        %v5822 = vsel %vm4025, %v5790, %v5272
        %v5823 = vsel %vm4025, %v5791, %v5274
        %v5824 = vsel %vm4025, %v5792, %v5276
        %v5825 = vsel %vm4025, %v5793, %v5278
        %v5826 = vsel %vm4025, %v5794, %v5280
        %v5827 = vsel %vm4025, %v5795, %v5282
        %v5828 = vsel %vm4025, %v5796, %v5284
        %vm5829 = vcmask 654336
        %v5830 = vsel %vm5829, %v5797, %v5350
        %v5831 = vsel %vm5829, %v5798, %v5352
        %v5832 = vsel %vm5829, %v5799, %v5354
        %v5833 = vsel %vm5829, %v5800, %v5356
        %v5834 = vsel %vm5829, %v5801, %v5358
        %v5835 = vsel %vm5829, %v5802, %v5360
        %v5836 = vsel %vm5829, %v5803, %v5362
        %v5837 = vsel %vm5829, %v5804, %v5364
        %v5838 = vsel %vm5829, %v5805, %v5366
        %v5839 = vsel %vm5829, %v5806, %v5368
        %v5840 = vsel %vm5829, %v5807, %v5370
        %v5841 = vsel %vm5829, %v5808, %v5372
        %v5842 = vsel %vm5829, %v5809, %v5374
        %v5843 = vsel %vm5829, %v5810, %v5376
        %v5844 = vsel %vm5829, %v5811, %v5378
        %v5845 = vsel %vm5829, %v5812, %v5380
        %v5846 = vsel %vm5829, %v5813, %v5382
        %v5847 = vsel %vm5829, %v5814, %v5384
        %v5848 = vsel %vm5829, %v5815, %v5386
        %v5849 = vsel %vm5829, %v5816, %v5388
        %v5850 = vsel %vm5829, %v5817, %v5390
        %v5851 = vsel %vm5829, %v5818, %v5392
        %v5852 = vsel %vm5829, %v5819, %v5394
        %v5853 = vsel %vm5829, %v5820, %v5396
        %v5854 = vsel %vm5829, %v5821, %v5398
        %v5855 = vsel %vm5829, %v5822, %v5400
        %v5856 = vsel %vm5829, %v5823, %v5402
        %v5857 = vsel %vm5829, %v5824, %v5404
        %v5858 = vsel %vm5829, %v5825, %v5406
        %v5859 = vsel %vm5829, %v5826, %v5408
        %v5860 = vsel %vm5829, %v5827, %v5410
        %v5861 = vsel %vm5829, %v5828, %v5412
        %vm5862 = vcmask 785408
        %v5863 = vsel %vm5862, %v5830, %v5478
        %v5864 = vsel %vm5862, %v5831, %v5480
        %v5865 = vsel %vm5862, %v5832, %v5482
        %v5866 = vsel %vm5862, %v5833, %v5484
        %v5867 = vsel %vm5862, %v5834, %v5486
        %v5868 = vsel %vm5862, %v5835, %v5488
        %v5869 = vsel %vm5862, %v5836, %v5490
        %v5870 = vsel %vm5862, %v5837, %v5492
        %v5871 = vsel %vm5862, %v5838, %v5494
        %v5872 = vsel %vm5862, %v5839, %v5496
        %v5873 = vsel %vm5862, %v5840, %v5498
        %v5874 = vsel %vm5862, %v5841, %v5500
        %v5875 = vsel %vm5862, %v5842, %v5502
        %v5876 = vsel %vm5862, %v5843, %v5504
        %v5877 = vsel %vm5862, %v5844, %v5506
        %v5878 = vsel %vm5862, %v5845, %v5508
        %v5879 = vsel %vm5862, %v5846, %v5510
        %v5880 = vsel %vm5862, %v5847, %v5512
        %v5881 = vsel %vm5862, %v5848, %v5514
        %v5882 = vsel %vm5862, %v5849, %v5516
        %v5883 = vsel %vm5862, %v5850, %v5518
        %v5884 = vsel %vm5862, %v5851, %v5520
        %v5885 = vsel %vm5862, %v5852, %v5522
        %v5886 = vsel %vm5862, %v5853, %v5524
        %v5887 = vsel %vm5862, %v5854, %v5526
        %v5888 = vsel %vm5862, %v5855, %v5528
        %v5889 = vsel %vm5862, %v5856, %v5530
        %v5890 = vsel %vm5862, %v5857, %v5532
        %v5891 = vsel %vm5862, %v5858, %v5534
        %v5892 = vsel %vm5862, %v5859, %v5536
        %v5893 = vsel %vm5862, %v5860, %v5538
        %v5894 = vsel %vm5862, %v5861, %v5540
        %vm5895 = vcmask 916480
        %v5896 = vsel %vm5895, %v5863, %v5606
        %v5897 = vsel %vm5895, %v5864, %v5608
        %v5898 = vsel %vm5895, %v5865, %v5610
        %v5899 = vsel %vm5895, %v5866, %v5612
        %v5900 = vsel %vm5895, %v5867, %v5614
        %v5901 = vsel %vm5895, %v5868, %v5616
        %v5902 = vsel %vm5895, %v5869, %v5618
        %v5903 = vsel %vm5895, %v5870, %v5620
        %v5904 = vsel %vm5895, %v5871, %v5622
        %v5905 = vsel %vm5895, %v5872, %v5624
        %v5906 = vsel %vm5895, %v5873, %v5626
        %v5907 = vsel %vm5895, %v5874, %v5628
        %v5908 = vsel %vm5895, %v5875, %v5630
        %v5909 = vsel %vm5895, %v5876, %v5632
        %v5910 = vsel %vm5895, %v5877, %v5634
        %v5911 = vsel %vm5895, %v5878, %v5636
        %v5912 = vsel %vm5895, %v5879, %v5638
        %v5913 = vsel %vm5895, %v5880, %v5640
        %v5914 = vsel %vm5895, %v5881, %v5642
        %v5915 = vsel %vm5895, %v5882, %v5644
        %v5916 = vsel %vm5895, %v5883, %v5646
        %v5917 = vsel %vm5895, %v5884, %v5648
        %v5918 = vsel %vm5895, %v5885, %v5650
        %v5919 = vsel %vm5895, %v5886, %v5652
        %v5920 = vsel %vm5895, %v5887, %v5654
        %v5921 = vsel %vm5895, %v5888, %v5656
        %v5922 = vsel %vm5895, %v5889, %v5658
        %v5923 = vsel %vm5895, %v5890, %v5660
        %v5924 = vsel %vm5895, %v5891, %v5662
        %v5925 = vsel %vm5895, %v5892, %v5664
        %v5926 = vsel %vm5895, %v5893, %v5666
        %v5927 = vsel %vm5895, %v5894, %v5668
        %v5928 = vld [vmem:[%s5] sm:$0xff]
        %v5929 = vld [vmem:[%s5 + $0x8] sm:$0xff]
        %v5930 = vld [vmem:[%s5 + $0x10] sm:$0xff]
        %v5931 = vld [vmem:[%s5 + $0x18] sm:$0xff]
        %v5932 = vld [vmem:[%s5 + $0x20] sm:$0xff]
        %v5933 = vld [vmem:[%s5 + $0x28] sm:$0xff]
        %v5934 = vld [vmem:[%s5 + $0x30] sm:$0xff]
        %v5935 = vld [vmem:[%s5 + $0x38] sm:$0xff]
        %v5936 = vld [vmem:[%s5 + $0x40] sm:$0xff]
        %v5937 = vld [vmem:[%s5 + $0x48] sm:$0xff]
        %v5938 = vld [vmem:[%s5 + $0x50] sm:$0xff]
        %v5939 = vld [vmem:[%s5 + $0x58] sm:$0xff]
        %v5940 = vld [vmem:[%s5 + $0x60] sm:$0xff]
        %v5941 = vld [vmem:[%s5 + $0x68] sm:$0xff]
        %v5942 = vld [vmem:[%s5 + $0x70] sm:$0xff]
        %v5943 = vld [vmem:[%s5 + $0x78] sm:$0xff]
        %v5944 = vld [vmem:[%s5 + $0x80] sm:$0xff]
        %v5945 = vld [vmem:[%s5 + $0x88] sm:$0xff]
        %v5946 = vld [vmem:[%s6] sm:$0x1]
        %v5948 = vlaneseq
        %v5949 = vshrl.u32 %v5948, 7
        %v5950 = vsub.s32 0, %v5949
        %v5951 = vrot.slane %v5946, %v5950
        %v5954 = vsel %vm1862, %v4773, 0
        %v5957 = vsel %vm1862, %v4774, 0
        %v5960 = vsel %vm1862, %v4775, 0
        %v5963 = vsel %vm1862, %v4776, 0
        %v5966 = vsel %vm1862, %v4777, 0
        %v5969 = vsel %vm1862, %v4778, 0
        %v5972 = vsel %vm1862, %v4779, 0
        %v5975 = vsel %vm1862, %v4780, 0
        %v5978 = vsel %vm1862, %v4781, 0
        %v5981 = vsel %vm1862, %v4782, 0
        %v5984 = vsel %vm1862, %v4783, 0
        %v5987 = vsel %vm1862, %v4784, 0
        %v5990 = vsel %vm1862, %v4785, 0
        %v5993 = vsel %vm1862, %v4786, 0
        %v5996 = vsel %vm1862, %v4787, 0
        %v5999 = vsel %vm1862, %v4788, 0
        %v6002 = vsel %vm1862, %v4789, 0
        %v6005 = vsel %vm1862, %v4790, 0
        %v6008 = vsel %vm1862, %v4791, 0
        %v6011 = vsel %vm1862, %v4792, 0
        %v6014 = vsel %vm1862, %v4793, 0
        %v6017 = vsel %vm1862, %v4794, 0
        %v6020 = vsel %vm1862, %v4795, 0
        %v6023 = vsel %vm1862, %v4796, 0
        %v6026 = vsel %vm1862, %v4797, 0
        %v6029 = vsel %vm1862, %v4798, 0
        %v6032 = vsel %vm1862, %v4799, 0
        %v6035 = vsel %vm1862, %v4800, 0
        %v6038 = vsel %vm1862, %v4801, 0
        %v6041 = vsel %vm1862, %v4802, 0
        %v6044 = vsel %vm1862, %v4803, 0
        %v6047 = vsel %vm1862, %v4804, 0
        %6049 = vmatprep.subr.mxu0 0.0
        %6050 = vmatpush1.msra.mxu0 %v5943
        %6051 = vmatprep.subr.mxu0 0.0
        %6052 = vmatpush1.msra.mxu0 %v5942
        %6053 = vmatprep.subr.mxu0 0.0
        %6054 = vmatpush1.msra.mxu0 %v5941
        %6055 = vmatprep.subr.mxu0 0.0
        %6056 = vmatpush1.msra.mxu0 %v5940
        %6057 = vmatprep.subr.mxu0 0.0
        %6058 = vmatpush1.msra.mxu0 %v5939
        %6059 = vmatprep.subr.mxu0 0.0
        %6060 = vmatpush1.msra.mxu0 %v5938
        %6061 = vmatprep.subr.mxu0 0.0
        %6062 = vmatpush1.msra.mxu0 %v5937
        %6063 = vmatprep.subr.mxu0 0.0
        %6064 = vmatpush1.msra.mxu0 %v5936
        %6065 = vmatprep.subr.mxu0 0.0
        %6066 = vmatpush1.msra.mxu0 %v5935
        %6067 = vmatprep.subr.mxu0 0.0
        %6068 = vmatpush1.msra.mxu0 %v5934
        %6069 = vmatprep.subr.mxu0 0.0
        %6070 = vmatpush1.msra.mxu0 %v5933
        %6071 = vmatprep.subr.mxu0 0.0
        %6072 = vmatpush1.msra.mxu0 %v5932
        %6073 = vmatprep.subr.mxu0 0.0
        %6074 = vmatpush1.msra.mxu0 %v5931
        %6075 = vmatprep.subr.mxu0 0.0
        %6076 = vmatpush1.msra.mxu0 %v5930
        %6077 = vmatprep.subr.mxu0 0.0
        %6078 = vmatpush1.msra.mxu0 %v5929
        %6079 = vmatprep.subr.mxu0 0.0
        %6080 = vmatpush1.msra.mxu0 %v5928
        %6081 = vmatprep.subr.mxu0 0.0
        %6082 = vmatpush2.msra.mxu0 0.0
        %6083 = vmatprep.subr.mxu0 0.0
        %6084 = vmatpush2.msra.mxu0 0.0
        %6085 = vmatprep.subr.mxu0 0.0
        %6086 = vmatpush2.msra.mxu0 0.0
        %6087 = vmatprep.subr.mxu0 0.0
        %6088 = vmatpush2.msra.mxu0 0.0
        %6089 = vmatprep.subr.mxu0 0.0
        %6090 = vmatpush2.msra.mxu0 0.0
        %6091 = vmatprep.subr.mxu0 0.0
        %6092 = vmatpush2.msra.mxu0 0.0
        %6093 = vmatprep.subr.mxu0 0.0
        %6094 = vmatpush2.msra.mxu0 0.0
        %6095 = vmatprep.subr.mxu0 0.0
        %6096 = vmatpush2.msra.mxu0 0.0
        %6097 = vmatprep.subr.mxu0 0.0
        %6098 = vmatpush2.msra.mxu0 0.0
        %6099 = vmatprep.subr.mxu0 0.0
        %6100 = vmatpush2.msra.mxu0 0.0
        %6101 = vmatprep.subr.mxu0 0.0
        %6102 = vmatpush2.msra.mxu0 0.0
        %6103 = vmatprep.subr.mxu0 0.0
        %6104 = vmatpush2.msra.mxu0 0.0
        %6105 = vmatprep.subr.mxu0 0.0
        %6106 = vmatpush2.msra.mxu0 0.0
        %6107 = vmatprep.subr.mxu0 0.0
        %6108 = vmatpush2.msra.mxu0 0.0
        %6109 = vmatprep.subr.mxu0 0.0
        %6110 = vmatpush2.msra.mxu0 %v5945
        %6111 = vmatprep.subr.mxu0 0.0
        %6112 = vmatpush2.msra.mxu0 %v5944
        %6113 = vmatprep.mubr.f32.mxu0 %v5954
        %6114 = vmatmul.mubr.f32.gmra.mxu0 %v5896
        %v6115 = vpop.f32.mrf.mxu0
        %v6116 = vadd.f32 %v5951, %v6115
        %v6117 = vpop.f32.mrf.mxu0
        %6118 = vmatprep.mubr.f32.mxu0 %v5957
        %6119 = vmatmul.mubr.f32.gmra.mxu0 %v5897
        %v6120 = vpop.f32.mrf.mxu0
        %v6121 = vadd.f32 %v5951, %v6120
        %v6122 = vpop.f32.mrf.mxu0
        %6123 = vmatprep.mubr.f32.mxu0 %v5960
        %6124 = vmatmul.mubr.f32.gmra.mxu0 %v5898
        %v6125 = vpop.f32.mrf.mxu0
        %v6126 = vadd.f32 %v5951, %v6125
        %v6127 = vpop.f32.mrf.mxu0
        %6128 = vmatprep.mubr.f32.mxu0 %v5963
        %6129 = vmatmul.mubr.f32.gmra.mxu0 %v5899
        %v6130 = vpop.f32.mrf.mxu0
        %v6131 = vadd.f32 %v5951, %v6130
        %v6132 = vpop.f32.mrf.mxu0
        %6133 = vmatprep.mubr.f32.mxu0 %v5966
        %6134 = vmatmul.mubr.f32.gmra.mxu0 %v5900
        %v6135 = vpop.f32.mrf.mxu0
        %v6136 = vadd.f32 %v5951, %v6135
        %v6137 = vpop.f32.mrf.mxu0
        %6138 = vmatprep.mubr.f32.mxu0 %v5969
        %6139 = vmatmul.mubr.f32.gmra.mxu0 %v5901
        %v6140 = vpop.f32.mrf.mxu0
        %v6141 = vadd.f32 %v5951, %v6140
        %v6142 = vpop.f32.mrf.mxu0
        %6143 = vmatprep.mubr.f32.mxu0 %v5972
        %6144 = vmatmul.mubr.f32.gmra.mxu0 %v5902
        %v6145 = vpop.f32.mrf.mxu0
        %v6146 = vadd.f32 %v5951, %v6145
        %v6147 = vpop.f32.mrf.mxu0
        %6148 = vmatprep.mubr.f32.mxu0 %v5975
        %6149 = vmatmul.mubr.f32.gmra.mxu0 %v5903
        %v6150 = vpop.f32.mrf.mxu0
        %v6151 = vadd.f32 %v5951, %v6150
        %v6152 = vpop.f32.mrf.mxu0
        %6153 = vmatprep.mubr.f32.mxu0 %v5978
        %6154 = vmatmul.mubr.f32.gmra.mxu0 %v5904
        %v6155 = vpop.f32.mrf.mxu0
        %v6156 = vadd.f32 %v5951, %v6155
        %v6157 = vpop.f32.mrf.mxu0
        %6158 = vmatprep.mubr.f32.mxu0 %v5981
        %6159 = vmatmul.mubr.f32.gmra.mxu0 %v5905
        %v6160 = vpop.f32.mrf.mxu0
        %v6161 = vadd.f32 %v5951, %v6160
        %v6162 = vpop.f32.mrf.mxu0
        %6163 = vmatprep.mubr.f32.mxu0 %v5984
        %6164 = vmatmul.mubr.f32.gmra.mxu0 %v5906
        %v6165 = vpop.f32.mrf.mxu0
        %v6166 = vadd.f32 %v5951, %v6165
        %v6167 = vpop.f32.mrf.mxu0
        %6168 = vmatprep.mubr.f32.mxu0 %v5987
        %6169 = vmatmul.mubr.f32.gmra.mxu0 %v5907
        %v6170 = vpop.f32.mrf.mxu0
        %v6171 = vadd.f32 %v5951, %v6170
        %v6172 = vpop.f32.mrf.mxu0
        %6173 = vmatprep.mubr.f32.mxu0 %v5990
        %6174 = vmatmul.mubr.f32.gmra.mxu0 %v5908
        %v6175 = vpop.f32.mrf.mxu0
        %v6176 = vadd.f32 %v5951, %v6175
        %v6177 = vpop.f32.mrf.mxu0
        %6178 = vmatprep.mubr.f32.mxu0 %v5993
        %6179 = vmatmul.mubr.f32.gmra.mxu0 %v5909
        %v6180 = vpop.f32.mrf.mxu0
        %v6181 = vadd.f32 %v5951, %v6180
        %v6182 = vpop.f32.mrf.mxu0
        %6183 = vmatprep.mubr.f32.mxu0 %v5996
        %6184 = vmatmul.mubr.f32.gmra.mxu0 %v5910
        %v6185 = vpop.f32.mrf.mxu0
        %v6186 = vadd.f32 %v5951, %v6185
        %v6187 = vpop.f32.mrf.mxu0
        %6188 = vmatprep.mubr.f32.mxu0 %v5999
        %6189 = vmatmul.mubr.f32.gmra.mxu0 %v5911
        %v6190 = vpop.f32.mrf.mxu0
        %v6191 = vadd.f32 %v5951, %v6190
        %v6192 = vpop.f32.mrf.mxu0
        %6193 = vmatprep.mubr.f32.mxu0 %v6002
        %6194 = vmatmul.mubr.f32.gmra.mxu0 %v5912
        %v6195 = vpop.f32.mrf.mxu0
        %v6196 = vadd.f32 %v5951, %v6195
        %v6197 = vpop.f32.mrf.mxu0
        %6198 = vmatprep.mubr.f32.mxu0 %v6005
        %6199 = vmatmul.mubr.f32.gmra.mxu0 %v5913
        %v6200 = vpop.f32.mrf.mxu0
        %v6201 = vadd.f32 %v5951, %v6200
        %v6202 = vpop.f32.mrf.mxu0
        %6203 = vmatprep.mubr.f32.mxu0 %v6008
        %6204 = vmatmul.mubr.f32.gmra.mxu0 %v5914
        %v6205 = vpop.f32.mrf.mxu0
        %v6206 = vadd.f32 %v5951, %v6205
        %v6207 = vpop.f32.mrf.mxu0
        %6208 = vmatprep.mubr.f32.mxu0 %v6011
        %6209 = vmatmul.mubr.f32.gmra.mxu0 %v5915
        %v6210 = vpop.f32.mrf.mxu0
        %v6211 = vadd.f32 %v5951, %v6210
        %v6212 = vpop.f32.mrf.mxu0
        %6213 = vmatprep.mubr.f32.mxu0 %v6014
        %6214 = vmatmul.mubr.f32.gmra.mxu0 %v5916
        %v6215 = vpop.f32.mrf.mxu0
        %v6216 = vadd.f32 %v5951, %v6215
        %v6217 = vpop.f32.mrf.mxu0
        %6218 = vmatprep.mubr.f32.mxu0 %v6017
        %6219 = vmatmul.mubr.f32.gmra.mxu0 %v5917
        %v6220 = vpop.f32.mrf.mxu0
        %v6221 = vadd.f32 %v5951, %v6220
        %v6222 = vpop.f32.mrf.mxu0
        %6223 = vmatprep.mubr.f32.mxu0 %v6020
        %6224 = vmatmul.mubr.f32.gmra.mxu0 %v5918
        %v6225 = vpop.f32.mrf.mxu0
        %v6226 = vadd.f32 %v5951, %v6225
        %v6227 = vpop.f32.mrf.mxu0
        %6228 = vmatprep.mubr.f32.mxu0 %v6023
        %6229 = vmatmul.mubr.f32.gmra.mxu0 %v5919
        %v6230 = vpop.f32.mrf.mxu0
        %v6231 = vadd.f32 %v5951, %v6230
        %v6232 = vpop.f32.mrf.mxu0
        %6233 = vmatprep.mubr.f32.mxu0 %v6026
        %6234 = vmatmul.mubr.f32.gmra.mxu0 %v5920
        %v6235 = vpop.f32.mrf.mxu0
        %v6236 = vadd.f32 %v5951, %v6235
        %v6237 = vpop.f32.mrf.mxu0
        %6238 = vmatprep.mubr.f32.mxu0 %v6029
        %6239 = vmatmul.mubr.f32.gmra.mxu0 %v5921
        %v6240 = vpop.f32.mrf.mxu0
        %v6241 = vadd.f32 %v5951, %v6240
        %v6242 = vpop.f32.mrf.mxu0
        %6243 = vmatprep.mubr.f32.mxu0 %v6032
        %6244 = vmatmul.mubr.f32.gmra.mxu0 %v5922
        %v6245 = vpop.f32.mrf.mxu0
        %v6246 = vadd.f32 %v5951, %v6245
        %v6247 = vpop.f32.mrf.mxu0
        %6248 = vmatprep.mubr.f32.mxu0 %v6035
        %6249 = vmatmul.mubr.f32.gmra.mxu0 %v5923
        %v6250 = vpop.f32.mrf.mxu0
        %v6251 = vadd.f32 %v5951, %v6250
        %v6252 = vpop.f32.mrf.mxu0
        %6253 = vmatprep.mubr.f32.mxu0 %v6038
        %6254 = vmatmul.mubr.f32.gmra.mxu0 %v5924
        %v6255 = vpop.f32.mrf.mxu0
        %v6256 = vadd.f32 %v5951, %v6255
        %v6257 = vpop.f32.mrf.mxu0
        %6258 = vmatprep.mubr.f32.mxu0 %v6041
        %6259 = vmatmul.mubr.f32.gmra.mxu0 %v5925
        %v6260 = vpop.f32.mrf.mxu0
        %v6261 = vadd.f32 %v5951, %v6260
        %v6262 = vpop.f32.mrf.mxu0
        %6263 = vmatprep.mubr.f32.mxu0 %v6044
        %6264 = vmatmul.mubr.f32.gmra.mxu0 %v5926
        %v6265 = vpop.f32.mrf.mxu0
        %v6266 = vadd.f32 %v5951, %v6265
        %v6267 = vpop.f32.mrf.mxu0
        %6268 = vmatprep.mubr.f32.mxu0 %v6047
        %6269 = vmatmul.mubr.f32.gmra.mxu0 %v5927
        %v6270 = vpop.f32.mrf.mxu0
        %v6271 = vadd.f32 %v5951, %v6270
        %v6272 = vpop.f32.mrf.mxu0
        %6273 = vdwg.mxu0
        %v6274 = vmax.f32 %v6116, 0.0
        %v6275 = vmax.f32 %v6121, 0.0
        %v6276 = vmax.f32 %v6126, 0.0
        %v6277 = vmax.f32 %v6131, 0.0
        %v6278 = vmax.f32 %v6136, 0.0
        %v6279 = vmax.f32 %v6141, 0.0
        %v6280 = vmax.f32 %v6146, 0.0
        %v6281 = vmax.f32 %v6151, 0.0
        %v6282 = vmax.f32 %v6156, 0.0
        %v6283 = vmax.f32 %v6161, 0.0
        %v6284 = vmax.f32 %v6166, 0.0
        %v6285 = vmax.f32 %v6171, 0.0
        %v6286 = vmax.f32 %v6176, 0.0
        %v6287 = vmax.f32 %v6181, 0.0
        %v6288 = vmax.f32 %v6186, 0.0
        %v6289 = vmax.f32 %v6191, 0.0
        %v6290 = vmax.f32 %v6196, 0.0
        %v6291 = vmax.f32 %v6201, 0.0
        %v6292 = vmax.f32 %v6206, 0.0
        %v6293 = vmax.f32 %v6211, 0.0
        %v6294 = vmax.f32 %v6216, 0.0
        %v6295 = vmax.f32 %v6221, 0.0
        %v6296 = vmax.f32 %v6226, 0.0
        %v6297 = vmax.f32 %v6231, 0.0
        %v6298 = vmax.f32 %v6236, 0.0
        %v6299 = vmax.f32 %v6241, 0.0
        %v6300 = vmax.f32 %v6246, 0.0
        %v6301 = vmax.f32 %v6251, 0.0
        %v6302 = vmax.f32 %v6256, 0.0
        %v6303 = vmax.f32 %v6261, 0.0
        %v6304 = vmax.f32 %v6266, 0.0
        %v6305 = vmax.f32 %v6271, 0.0
        %v6306 = vsel %vm1994, %v6274, 0.0
        %v6307 = vsel %vm1994, %v6275, 0.0
        %v6308 = vadd.f32 %v6306, %v6307
        %v6309 = vsel %vm1994, %v6276, 0.0
        %v6310 = vadd.f32 %v6308, %v6309
        %v6311 = vsel %vm1994, %v6277, 0.0
        %v6312 = vadd.f32 %v6310, %v6311
        %v6313 = vsel %vm1994, %v6278, 0.0
        %v6314 = vadd.f32 %v6312, %v6313
        %v6315 = vsel %vm1994, %v6279, 0.0
        %v6316 = vadd.f32 %v6314, %v6315
        %v6317 = vsel %vm1994, %v6280, 0.0
        %v6318 = vadd.f32 %v6316, %v6317
        %v6319 = vsel %vm1994, %v6281, 0.0
        %v6320 = vadd.f32 %v6318, %v6319
        %v6321 = vsel %vm1994, %v6282, 0.0
        %v6322 = vadd.f32 %v6320, %v6321
        %v6323 = vsel %vm1994, %v6283, 0.0
        %v6324 = vadd.f32 %v6322, %v6323
        %v6325 = vsel %vm1994, %v6284, 0.0
        %v6326 = vadd.f32 %v6324, %v6325
        %v6327 = vsel %vm1994, %v6285, 0.0
        %v6328 = vadd.f32 %v6326, %v6327
        %v6329 = vsel %vm1994, %v6286, 0.0
        %v6330 = vadd.f32 %v6328, %v6329
        %v6331 = vsel %vm1994, %v6287, 0.0
        %v6332 = vadd.f32 %v6330, %v6331
        %v6333 = vsel %vm1994, %v6288, 0.0
        %v6334 = vadd.f32 %v6332, %v6333
        %v6335 = vsel %vm1994, %v6289, 0.0
        %v6336 = vadd.f32 %v6334, %v6335
        %v6337 = vsel %vm1994, %v6290, 0.0
        %v6338 = vadd.f32 %v6336, %v6337
        %v6339 = vsel %vm1994, %v6291, 0.0
        %v6340 = vadd.f32 %v6338, %v6339
        %v6341 = vsel %vm1994, %v6292, 0.0
        %v6342 = vadd.f32 %v6340, %v6341
        %v6343 = vsel %vm1994, %v6293, 0.0
        %v6344 = vadd.f32 %v6342, %v6343
        %v6345 = vsel %vm1994, %v6294, 0.0
        %v6346 = vadd.f32 %v6344, %v6345
        %v6347 = vsel %vm1994, %v6295, 0.0
        %v6348 = vadd.f32 %v6346, %v6347
        %v6349 = vsel %vm1994, %v6296, 0.0
        %v6350 = vadd.f32 %v6348, %v6349
        %v6351 = vsel %vm1994, %v6297, 0.0
        %v6352 = vadd.f32 %v6350, %v6351
        %v6353 = vsel %vm1994, %v6298, 0.0
        %v6354 = vadd.f32 %v6352, %v6353
        %v6355 = vsel %vm1994, %v6299, 0.0
        %v6356 = vadd.f32 %v6354, %v6355
        %v6357 = vsel %vm1994, %v6300, 0.0
        %v6358 = vadd.f32 %v6356, %v6357
        %v6359 = vsel %vm1994, %v6301, 0.0
        %v6360 = vadd.f32 %v6358, %v6359
        %v6361 = vsel %vm1994, %v6302, 0.0
        %v6362 = vadd.f32 %v6360, %v6361
        %v6363 = vsel %vm1994, %v6303, 0.0
        %v6364 = vadd.f32 %v6362, %v6363
        %v6365 = vsel %vm1994, %v6304, 0.0
        %v6366 = vadd.f32 %v6364, %v6365
        %v6367 = vsel %vm1994, %v6305, 0.0
        %v6368 = vadd.f32 %v6366, %v6367
        %v6369 = vrot.slane %v6368, 4
        %v6370 = vadd.f32 %v6368, %v6369
        %v6371 = vrot.slane %v6370, 2
        %v6372 = vadd.f32 %v6370, %v6371
        %v6373 = vrot.slane %v6372, 1
        %v6374 = vadd.f32 %v6372, %v6373
        %v6375 = vrcp.pop 256.0
        %v6376 = vmul.f32 %v6374, %v6375
        %v6377 = vld [vmem:[%s7] sm:$0xff]
        %v6378 = vld [vmem:[%s7 + $0x8] sm:$0xff]
        %v6379 = vld [vmem:[%s7 + $0x10] sm:$0xff]
        %v6380 = vld [vmem:[%s7 + $0x18] sm:$0xff]
        %v6381 = vld [vmem:[%s8] sm:$0x1]
        %v6383 = vsel %vm1994, %v6376, 0
        %6385 = vmatprep.subr.mxu0 0.0
        %6386 = vmatpush1.msra.mxu0 0.0
        %6387 = vmatprep.subr.mxu0 0.0
        %6388 = vmatpush1.msra.mxu0 0.0
        %6389 = vmatprep.subr.mxu0 0.0
        %6390 = vmatpush1.msra.mxu0 0.0
        %6391 = vmatprep.subr.mxu0 0.0
        %6392 = vmatpush1.msra.mxu0 0.0
        %6393 = vmatprep.subr.mxu0 0.0
        %6394 = vmatpush1.msra.mxu0 0.0
        %6395 = vmatprep.subr.mxu0 0.0
        %6396 = vmatpush1.msra.mxu0 0.0
        %6397 = vmatprep.subr.mxu0 0.0
        %6398 = vmatpush1.msra.mxu0 0.0
        %6399 = vmatprep.subr.mxu0 0.0
        %6400 = vmatpush1.msra.mxu0 0.0
        %6401 = vmatprep.subr.mxu0 0.0
        %6402 = vmatpush1.msra.mxu0 0.0
        %6403 = vmatprep.subr.mxu0 0.0
        %6404 = vmatpush1.msra.mxu0 0.0
        %6405 = vmatprep.subr.mxu0 0.0
        %6406 = vmatpush1.msra.mxu0 0.0
        %6407 = vmatprep.subr.mxu0 0.0
        %6408 = vmatpush1.msra.mxu0 0.0
        %6409 = vmatprep.subr.mxu0 0.0
        %6410 = vmatpush1.msra.mxu0 %v6380
        %6411 = vmatprep.subr.mxu0 0.0
        %6412 = vmatpush1.msra.mxu0 %v6379
        %6413 = vmatprep.subr.mxu0 0.0
        %6414 = vmatpush1.msra.mxu0 %v6378
        %6415 = vmatprep.subr.mxu0 0.0
        %6416 = vmatpush1.msra.mxu0 %v6377
        %6417 = vmatprep.subr.mxu0 0.0
        %6418 = vmatpush2.msra.mxu0 0.0
        %6419 = vmatprep.subr.mxu0 0.0
        %6420 = vmatpush2.msra.mxu0 0.0
        %6421 = vmatprep.subr.mxu0 0.0
        %6422 = vmatpush2.msra.mxu0 0.0
        %6423 = vmatprep.subr.mxu0 0.0
        %6424 = vmatpush2.msra.mxu0 0.0
        %6425 = vmatprep.subr.mxu0 0.0
        %6426 = vmatpush2.msra.mxu0 0.0
        %6427 = vmatprep.subr.mxu0 0.0
        %6428 = vmatpush2.msra.mxu0 0.0
        %6429 = vmatprep.subr.mxu0 0.0
        %6430 = vmatpush2.msra.mxu0 0.0
        %6431 = vmatprep.subr.mxu0 0.0
        %6432 = vmatpush2.msra.mxu0 0.0
        %6433 = vmatprep.subr.mxu0 0.0
        %6434 = vmatpush2.msra.mxu0 0.0
        %6435 = vmatprep.subr.mxu0 0.0
        %6436 = vmatpush2.msra.mxu0 0.0
        %6437 = vmatprep.subr.mxu0 0.0
        %6438 = vmatpush2.msra.mxu0 0.0
        %6439 = vmatprep.subr.mxu0 0.0
        %6440 = vmatpush2.msra.mxu0 0.0
        %6441 = vmatprep.subr.mxu0 0.0
        %6442 = vmatpush2.msra.mxu0 0.0
        %6443 = vmatprep.subr.mxu0 0.0
        %6444 = vmatpush2.msra.mxu0 0.0
        %6445 = vmatprep.subr.mxu0 0.0
        %6446 = vmatpush2.msra.mxu0 0.0
        %6447 = vmatprep.subr.mxu0 0.0
        %6448 = vmatpush2.msra.mxu0 0.0
        %6449 = vmatprep.mubr.f32.mxu0 0.0
        %6450 = vmatmul.mubr.f32.gmra.mxu0 %v6383
        %v6451 = vpop.f32.mrf.mxu0
        %v6452 = vadd.f32 %v6381, %v6451
        %v6453 = vpop.f32.mrf.mxu0
        %6454 = vdwg.mxu0
        %vm6455 = vcmask 73728
        %6456 = vst.msk [vmem:[%s324] sm:$0x1] %vm6455, %v6452
        %s6457 = sand.u32 %s225, 1
        %s6458 = scalar_lea.sflag [#allocation6], %s6457
        %s6459 = sand.u32 %s225, 1
        %s6460 = scalar_lea.vmem [#allocation5], %s6459
        // Predicated region
        $region57: #{enhanced_distributed_model_forward_impl.1} parent=55 // pred_check
          %p6461 = pneg %p235
        $region58: #{enhanced_distributed_model_forward_impl.1} parent=55 // pred_check_branch
          %6463 = sbr.rel (%p6461) target = $region60
        $region59: #{enhanced_distributed_model_forward_impl.1} parent=55 // pred_region
          %s6465 = ssub.s32 16, 16
          %6466 = vsyncadd %s6458, %s6465
          %s6467 = smul.addr %s23, 16
          %s6468 = scalar_lea.hbm %s9, %s6467
          %s6470 = sshll.u32 %s6460, 4
          %s6471 = int_to_ptr.vmem [resolvable:$true] %s6470
          %6473 = dma.vmem_to_hbm [thread:$0]  %s6471, 16, %s6468, %s6458
        $region60: #{enhanced_distributed_model_forward_impl.1} parent=55 // pred_fallthru
          _
      $region56: #{enhanced_distributed_model_forward_impl.1} parent=5 // pred_fallthru
        _
      %p6474 = scmp.le.s32.totalorder 2, %s18
      // Predicated region
      $region61: #{enhanced_distributed_model_forward_impl.1} parent=5 // pred_check
        %p6475 = pneg %p6474
      $region62: #{enhanced_distributed_model_forward_impl.1} parent=5 // pred_check_branch
        %6477 = sbr.rel (%p6475) target = $region64
      $region63: #{enhanced_distributed_model_forward_impl.1} parent=5 // pred_region
        %s6478 = ssub.s32 %s18, 2
        // Predicated region
        $region65: #{enhanced_distributed_model_forward_impl.1} parent=63 // pred_check
          %p6479 = pneg %p241
        $region66: #{enhanced_distributed_model_forward_impl.1} parent=63 // pred_check_branch
          %6481 = sbr.rel (%p6479) target = $region68
        $region67: #{enhanced_distributed_model_forward_impl.1} parent=63 // pred_region
          %s6482 = sand.u32 %s226, 1
          %s6483 = scalar_lea.sflag [#allocation6], %s6482
          %s6484 = sand.u32 %s226, 1
          %s6485 = scalar_lea.vmem [#allocation5], %s6484
          %6486 = dma.done %s6483, 16
        $region68: #{enhanced_distributed_model_forward_impl.1} parent=63 // pred_fallthru
          _
      $region64: #{enhanced_distributed_model_forward_impl.1} parent=5 // pred_fallthru
        _
    $region6: #{enhanced_distributed_model_forward_impl.1} parent=1 // loop_footer
      %s22 = sadd.s32 1, %s18
    $region7: #{enhanced_distributed_model_forward_impl.1} parent=1 // loop_footer_branch
      %17 = sbr.rel target = $region3
    $region8: #{enhanced_distributed_model_forward_impl.1} parent=1 // loop_exit
      _
    %6487 = vsyncpa [#allocation6], 1
    %s6488 = scalar_lea.sflag [#allocation6], 1
    %6489 = vsyncpa %s6488, 1

</llo_original>
